<compile_context>
chip_gen: v7x
topology: tpu7x:2x2x1
jax: 0.10.0
libtpu: 0.0.40
codegen_flags: <defaults>
</compile_context>

<pallas_src>
import functools
from types import SimpleNamespace

import jax
import jax.numpy as jnp
from jax import lax
from jax.experimental import pallas as pl
from jax.experimental.pallas import tpu as pltpu

MXU_DTYPE = jnp.bfloat16      # operand dtype for large dense matmuls (f32 accumulation)
SUBLANE = 8                   # f32 sublane tile


def _round_up(n, m):
    return ((n + m - 1) // m) * m


def _gelu(x):
    # TODO(synk): PyTorch nn.GELU default is the exact erf form; using the tanh
    #             approximation here for a guaranteed Mosaic lowering (EUP tanh).
    return jax.nn.gelu(x, approximate=True)


def _layernorm(x, w, b, eps=1e-5):
    mu = jnp.mean(x, axis=-1, keepdims=True)
    var = jnp.mean((x - mu) ** 2, axis=-1, keepdims=True)
    return (x - mu) * lax.rsqrt(var + eps) * w + b


# ---------------------------------------------------------------------------
# Kernel body: one grid step == one transformer encoder layer.
# l==0 additionally does patch embedding + token assembly; l==L-1 additionally
# runs the classifier head.  Hidden state persists in VMEM scratch h_ref.
# ---------------------------------------------------------------------------
def _vit_layer_kernel(
    # patch embedding + assembly (constant blocks, fetched once)
    cols_ref, w1_ref, b1_ref, w2_ref, b2_ref, pospat_ref, clspad_ref, kmask_ref,
    # per-layer weights (leading layer axis indexed by the grid -> streamed)
    ln1w_ref, ln1b_ref, qkvw_ref, qkvb_ref, projw_ref, projb_ref,
    ln2w_ref, ln2b_ref, ff1w_ref, ff1b_ref, ff2w_ref, ff2b_ref,
    # classifier head (constant blocks)
    clnw_ref, clnb_ref, cw1_ref, cb1_ref, cw2_ref, cb2_ref,
    # outputs
    logits_ref, clsf_ref,
    # scratch
    h_ref,
    *, B, Spad, D, nhead, nP, num_layers,
):
    f32 = jnp.float32
    hd = D // nhead
    scale = hd ** -0.5
    l = pl.program_id(0)

    # ---- patch embedding + [patches | cls | pad] assembly (once, at l == 0) ----
    @pl.when(l == 0)
    def _():
        # conv1(3x3, pad1)+BN+GELU as one matmul (block-diag weight over intra-patch
        # pixels), then conv2(ps, stride ps) as one matmul with K = pps*d4.
        y = jnp.dot(cols_ref[...], w1_ref[...], preferred_element_type=f32) + b1_ref[...]
        y = _gelu(y)                                                     # (B*nP, pps*d4)
        tok = jnp.dot(y, w2_ref[...], preferred_element_type=f32) + b2_ref[...]  # (B*nP, D)
        # internal row order per batch: [patch 0..nP-1 | cls | padding] -> two
        # sublane-aligned stores (nP is a multiple of 8), no per-batch loops.
        h_ref[:, 0:nP, :] = tok.reshape(B, nP, D) + pospat_ref[...]
        h_ref[:, nP:Spad, :] = jnp.broadcast_to(clspad_ref[...], (B, Spad - nP, D))

    # ---- one pre-norm transformer encoder layer (batch folded into rows) ----
    h = h_ref[...].reshape(B * Spad, D)                                  # f32

    # self-attention block
    xn = _layernorm(h, ln1w_ref[...], ln1b_ref[...])
    qkv = jnp.dot(xn.astype(MXU_DTYPE), qkvw_ref[...],
                  preferred_element_type=f32) + qkvb_ref[...]            # (B*Spad, 3D)

    def heads(t):
        # (nhead*B, Spad, hd) via static lane slices + major-axis concat; f32 (no
        # bf16 casts around the tiny attention einsums — review item 6).
        return jnp.concatenate(
            [qkv[:, t * D + hh * hd:t * D + (hh + 1) * hd].reshape(B, Spad, hd)
             for hh in range(nhead)], axis=0)

    q3, k3, v3 = heads(0), heads(1), heads(2)
    s = jnp.einsum('nqe,nke->nqk', q3, k3, preferred_element_type=f32) * scale
    s = s + kmask_ref[...]                                               # mask padded keys
    s = s - jnp.max(s, axis=-1, keepdims=True)
    p = jnp.exp(s)
    p = p * pl.reciprocal(jnp.sum(p, axis=-1, keepdims=True), approx=True)
    o3 = jnp.einsum('nqk,nke->nqe', p, v3, preferred_element_type=f32)   # (nhead*B, Spad, hd)

    # head-major concat == PyTorch's concat-of-heads; one dense projection matmul.
    ocat = jnp.concatenate([o3[hh * B:(hh + 1) * B] for hh in range(nhead)],
                           axis=-1).reshape(B * Spad, D)
    attn = jnp.dot(ocat.astype(MXU_DTYPE), projw_ref[...],
                   preferred_element_type=f32) + projb_ref[...]
    h = h + attn                                                         # dropout = identity

    # feed-forward block
    xn2 = _layernorm(h, ln2w_ref[...], ln2b_ref[...])
    h1 = _gelu(jnp.dot(xn2.astype(MXU_DTYPE), ff1w_ref[...],
                       preferred_element_type=f32) + ff1b_ref[...])
    h2 = jnp.dot(h1.astype(MXU_DTYPE), ff2w_ref[...],
                 preferred_element_type=f32) + ff2b_ref[...]
    h = h + h2                                                           # dropout = identity
    h_ref[...] = h.reshape(B, Spad, D)

    # ---- classifier head on the cls rows (once, at the last layer) ----
    @pl.when(l == num_layers - 1)
    def _():
        cf = h.reshape(B, Spad, D)[:, nP:nP + 1, :].reshape(B, D)        # cls row
        clsf_ref[...] = cf
        xc = _layernorm(cf, clnw_ref[...], clnb_ref[...])
        hc = _gelu(jnp.dot(xc, cw1_ref[...], preferred_element_type=f32) + cb1_ref[...])
        logits_ref[...] = jnp.dot(hc, cw2_ref[...],
                                  preferred_element_type=f32) + cb2_ref[...]


# ---------------------------------------------------------------------------
# Wrapper-side im2col for conv1: rows ordered (batch, patch), columns ordered
# (intra-patch pixel q, c_in, 3x3) to match the block-diagonal conv1 weight.
# ---------------------------------------------------------------------------
def _build_cols(x, ps):
    B, C, H, W = x.shape
    Hp, Wp = H // ps, W // ps
    xp = jnp.pad(x, ((0, 0), (0, 0), (1, 1), (1, 1)))
    shifted = jnp.stack([xp[:, :, ki:ki + H, kj:kj + W]
                         for ki in range(3) for kj in range(3)], axis=2)   # (B,C,9,H,W)
    cols = shifted.transpose(0, 3, 4, 1, 2)                                # (B,H,W,C,9)
    cols = cols.reshape(B, Hp, ps, Wp, ps, C * 9)                          # (b,ph,i,pw,j,c9)
    cols = cols.transpose(0, 1, 3, 2, 4, 5)                                # (b,ph,pw,i,j,c9)
    return cols.reshape(B * Hp * Wp, ps * ps * C * 9).astype(jnp.float32)


# ---------------------------------------------------------------------------
# Deterministic synthetic parameters (shapes match the PyTorch module; eval-mode
# BatchNorm mean=0/var=1/gamma=1/beta=0 folded into conv1).
# ---------------------------------------------------------------------------
def init_params(key, cfg):
    D, C, ps = cfg.d_model, cfg.channels, cfg.patch_size
    d4, pps = D // 4, ps * ps
    dff, L = cfg.dim_feedforward, cfg.num_layers
    nP = cfg.num_patches
    Spad = _round_up(nP + 1, SUBLANE)

    ks = iter(jax.random.split(key, 8 + 4 * L))
    nrm = lambda shape: jax.random.normal(next(ks), shape, jnp.float32) * 0.02

    # conv1 weight, BN scale folded, stored block-diagonally over the pps intra-patch
    # pixel positions so conv1 for a whole patch is a single matmul.
    # TODO(synk): only sensible at small patch_size; at realistic sizes keep the
    #             per-pixel (C*9, d4) weight and a second K=pps*d4 matmul instead.
    w1 = nrm((d4, C * 9))
    bn_scale = 1.0 / float(jnp.sqrt(jnp.float32(1.0 + 1e-5)))
    w1bd = jnp.kron(jnp.eye(pps, dtype=jnp.float32), w1.T * bn_scale)      # (pps*C*9, pps*d4)
    b1 = jnp.zeros((1, pps * d4), jnp.float32)

    # conv2 (kernel = stride = patch_size) flattened to one (pps*d4, D) matmul
    w2 = nrm((D, d4, ps, ps))
    w2f = w2.transpose(2, 3, 1, 0).reshape(pps * d4, D)
    b2 = jnp.zeros((1, D), jnp.float32)

    pos = nrm((nP + 1, D))
    cls = nrm((1, D))
    pospat = pos[1:]                                                        # (nP, D)
    clspad = jnp.concatenate(
        [cls + pos[0:1], jnp.zeros((Spad - nP - 1, D), jnp.float32)], axis=0)
    kmask = jnp.where(jnp.arange(Spad)[None, :] < nP + 1, 0.0, -1e30).astype(jnp.float32)

    stack = lambda shape: jnp.stack([nrm(shape) for _ in range(L)])

    # TODO(synk): real PyTorch MultiheadAttention checkpoints store (out,in) weights
    #             applied as x @ W.T with q/k/v stacked row-wise; importing one needs
    #             explicit transposition/permutation into this column layout.
    # TODO(synk): on v7x, store qkv/proj/ffn weights as fp8 (dequant in-kernel) when
    #             scaling up to halve weight DMA and VMEM residency.
    return dict(
        w1bd=w1bd, b1=b1, w2f=w2f, b2=b2,
        pospat=pospat, clspad=clspad, kmask=kmask,
        ln1_w=jnp.ones((L, 1, D), jnp.float32), ln1_b=jnp.zeros((L, 1, D), jnp.float32),
        qkv_w=stack((D, 3 * D)).astype(MXU_DTYPE),
        qkv_b=jnp.zeros((L, 1, 3 * D), jnp.float32),
        proj_w=stack((D, D)).astype(MXU_DTYPE),
        proj_b=jnp.zeros((L, 1, D), jnp.float32),
        ln2_w=jnp.ones((L, 1, D), jnp.float32), ln2_b=jnp.zeros((L, 1, D), jnp.float32),
        ff1_w=stack((D, dff)).astype(MXU_DTYPE),
        ff1_b=jnp.zeros((L, 1, dff), jnp.float32),
        ff2_w=stack((dff, D)).astype(MXU_DTYPE),
        ff2_b=jnp.zeros((L, 1, D), jnp.float32),
        cln_w=jnp.ones((1, D), jnp.float32), cln_b=jnp.zeros((1, D), jnp.float32),
        cw1=nrm((D, D // 2)), cb1=jnp.zeros((1, D // 2), jnp.float32),
        cw2=nrm((D // 2, cfg.num_classes)),
        cb2=jnp.zeros((1, cfg.num_classes), jnp.float32),
    )


# ---------------------------------------------------------------------------
# Forward pass (matches ImprovedNKATVisionTransformer.forward), one pallas_call
# with a layer-axis grid.
# ---------------------------------------------------------------------------
def forward(x, params, cfg):
    B = x.shape[0]
    D, nP, L = cfg.d_model, cfg.num_patches, cfg.num_layers
    dff, nc, ps = cfg.dim_feedforward, cfg.num_classes, cfg.patch_size
    d4, pps = D // 4, ps * ps
    Spad = _round_up(nP + 1, SUBLANE)

    cols = _build_cols(x, ps)                                              # (B*nP, pps*C*9)

    const = lambda arr: pl.BlockSpec(arr.shape, lambda l: (0, 0))
    per_layer = lambda shp: pl.BlockSpec((None,) + shp, lambda l: (l, 0, 0))

    in_specs = [
        const(cols),
        const(params["w1bd"]), const(params["b1"]),
        const(params["w2f"]), const(params["b2"]),
        const(params["pospat"]), const(params["clspad"]), const(params["kmask"]),
        per_layer((1, D)), per_layer((1, D)),              # ln1 w, b
        per_layer((D, 3 * D)), per_layer((1, 3 * D)),      # qkv w, b
        per_layer((D, D)), per_layer((1, D)),              # proj w, b
        per_layer((1, D)), per_layer((1, D)),              # ln2 w, b
        per_layer((D, dff)), per_layer((1, dff)),          # ff1 w, b
        per_layer((dff, D)), per_layer((1, D)),            # ff2 w, b
        const(params["cln_w"]), const(params["cln_b"]),
        const(params["cw1"]), const(params["cb1"]),
        const(params["cw2"]), const(params["cb2"]),
    ]
    out_specs = (pl.BlockSpec((B, nc), lambda l: (0, 0)),
                 pl.BlockSpec((B, D), lambda l: (0, 0)))

    rows = B * Spad
    hd = D // cfg.nhead
    flops = (L * (2 * rows * (3 * D * D + D * D + 2 * D * dff)
                  + 4 * cfg.nhead * B * Spad * Spad * hd)
             + 2 * B * nP * (cols.shape[1] * pps * d4 + pps * d4 * D)
             + 2 * B * (D * (D // 2) + (D // 2) * nc))
    transcendentals = (L * (rows * dff + cfg.nhead * B * Spad * Spad)
                       + B * nP * pps * d4 + B * (D // 2))
    bytes_accessed = int(cols.size) * 4 + B * (nc + D) * 4 + sum(
        int(v.size) * v.dtype.itemsize for v in params.values())

    kernel = functools.partial(_vit_layer_kernel, B=B, Spad=Spad, D=D,
                               nhead=cfg.nhead, nP=nP, num_layers=L)

    # TODO(synk): at larger batch, add a leading batch-block grid axis marked
    #             "parallel" (per-batch logits blocks) to shard across v7x's 2 TCs.
    logits, cls_feat = pl.pallas_call(
        kernel,
        out_shape=(jax.ShapeDtypeStruct((B, nc), jnp.float32),
                   jax.ShapeDtypeStruct((B, D), jnp.float32)),
        grid_spec=pltpu.PrefetchScalarGridSpec(
            num_scalar_prefetch=0,
            grid=(L,),
            in_specs=in_specs,
            out_specs=out_specs,
            scratch_shapes=[pltpu.VMEM((B, Spad, D), jnp.float32)],   # hidden state carry
        ),
        compiler_params=pltpu.CompilerParams(
            dimension_semantics=("arbitrary",),                       # layers are sequential
            vmem_limit_bytes=32 * 1024 * 1024,
        ),
        cost_estimate=pl.CostEstimate(flops=flops, transcendentals=transcendentals,
                                      bytes_accessed=bytes_accessed),
    )(cols,
      params["w1bd"], params["b1"], params["w2f"], params["b2"],
      params["pospat"], params["clspad"], params["kmask"],
      params["ln1_w"], params["ln1_b"], params["qkv_w"], params["qkv_b"],
      params["proj_w"], params["proj_b"], params["ln2_w"], params["ln2_b"],
      params["ff1_w"], params["ff1_b"], params["ff2_w"], params["ff2_b"],
      params["cln_w"], params["cln_b"], params["cw1"], params["cb1"],
      params["cw2"], params["cb2"])

    return {"logits": logits,
            "cls_features": cls_feat,
            "attention_weights": None,                     # module also returns None
            "quantum_contribution": jnp.array(0.0, jnp.float32)}


# ---------------------------------------------------------------------------
if __name__ == "__main__":
    cfg = SimpleNamespace(channels=4, image_size=16, patch_size=4,
                          d_model=32, nhead=4, dim_feedforward=64,
                          num_layers=2, num_classes=10, dropout=0.1)
    cfg.num_patches = (cfg.image_size // cfg.patch_size) ** 2       # 16 patches -> seq 17

    key = jax.random.PRNGKey(0)
    pkey, xkey = jax.random.split(key)
    params = init_params(pkey, cfg)
    x = jax.random.normal(xkey, (2, cfg.channels, cfg.image_size, cfg.image_size),
                          jnp.float32)                               # NCHW like PyTorch

    out = jax.jit(lambda xx: forward(xx, params, cfg))(x)
    jax.block_until_ready(out)

    assert out["logits"].shape == (2, cfg.num_classes)
    assert out["cls_features"].shape == (2, cfg.d_model)
    assert jnp.all(jnp.isfinite(out["logits"]))
    assert jnp.all(jnp.isfinite(out["cls_features"]))
    print("KERNEL_OK")
</pallas_src>

<mosaic_0001>
module attributes {stable_mosaic.version = 11 : i64} {
  func.func @_vit_layer_kernel(%arg0: i32, %arg1: memref<32x576xf32, #tpu.memory_space<vmem>>, %arg2: memref<576x128xf32, #tpu.memory_space<vmem>>, %arg3: memref<1x128xf32, #tpu.memory_space<vmem>>, %arg4: memref<128x32xf32, #tpu.memory_space<vmem>>, %arg5: memref<1x32xf32, #tpu.memory_space<vmem>>, %arg6: memref<16x32xf32, #tpu.memory_space<vmem>>, %arg7: memref<8x32xf32, #tpu.memory_space<vmem>>, %arg8: memref<1x24xf32, #tpu.memory_space<vmem>>, %arg9: memref<1x1x32xf32, #tpu.memory_space<vmem>>, %arg10: memref<1x1x32xf32, #tpu.memory_space<vmem>>, %arg11: memref<1x32x96xbf16, #tpu.memory_space<vmem>>, %arg12: memref<1x1x96xf32, #tpu.memory_space<vmem>>, %arg13: memref<1x32x32xbf16, #tpu.memory_space<vmem>>, %arg14: memref<1x1x32xf32, #tpu.memory_space<vmem>>, %arg15: memref<1x1x32xf32, #tpu.memory_space<vmem>>, %arg16: memref<1x1x32xf32, #tpu.memory_space<vmem>>, %arg17: memref<1x32x64xbf16, #tpu.memory_space<vmem>>, %arg18: memref<1x1x64xf32, #tpu.memory_space<vmem>>, %arg19: memref<1x64x32xbf16, #tpu.memory_space<vmem>>, %arg20: memref<1x1x32xf32, #tpu.memory_space<vmem>>, %arg21: memref<1x32xf32, #tpu.memory_space<vmem>>, %arg22: memref<1x32xf32, #tpu.memory_space<vmem>>, %arg23: memref<32x16xf32, #tpu.memory_space<vmem>>, %arg24: memref<1x16xf32, #tpu.memory_space<vmem>>, %arg25: memref<16x10xf32, #tpu.memory_space<vmem>>, %arg26: memref<1x10xf32, #tpu.memory_space<vmem>>, %arg27: memref<2x10xf32, #tpu.memory_space<vmem>>, %arg28: memref<2x32xf32, #tpu.memory_space<vmem>>, %arg29: memref<2x24x32xf32, #tpu.memory_space<vmem>>) attributes {dimension_semantics = [#tpu.dimension_semantics<arbitrary>], iteration_bounds = array<i64: 2>, scalar_prefetch = 0 : i64, scratch_operands = 1 : i64, tpu.core_type = #tpu.core_type<tc>, window_params = [{pipeline_mode = #tpu.pipeline_mode<synchronous>, transform_indices = @transform_0, window_bounds = array<i64: 32, 576>}, {pipeline_mode = #tpu.pipeline_mode<synchronous>, transform_indices = @transform_1, window_bounds = array<i64: 576, 128>}, {pipeline_mode = #tpu.pipeline_mode<synchronous>, transform_indices = @transform_2, window_bounds = array<i64: 1, 128>}, {pipeline_mode = #tpu.pipeline_mode<synchronous>, transform_indices = @transform_3, window_bounds = array<i64: 128, 32>}, {pipeline_mode = #tpu.pipeline_mode<synchronous>, transform_indices = @transform_4, window_bounds = array<i64: 1, 32>}, {pipeline_mode = #tpu.pipeline_mode<synchronous>, transform_indices = @transform_5, window_bounds = array<i64: 16, 32>}, {pipeline_mode = #tpu.pipeline_mode<synchronous>, transform_indices = @transform_6, window_bounds = array<i64: 8, 32>}, {pipeline_mode = #tpu.pipeline_mode<synchronous>, transform_indices = @transform_7, window_bounds = array<i64: 1, 24>}, {transform_indices = @transform_8, window_bounds = array<i64: 1, 1, 32>}, {transform_indices = @transform_9, window_bounds = array<i64: 1, 1, 32>}, {transform_indices = @transform_10, window_bounds = array<i64: 1, 32, 96>}, {transform_indices = @transform_11, window_bounds = array<i64: 1, 1, 96>}, {transform_indices = @transform_12, window_bounds = array<i64: 1, 32, 32>}, {transform_indices = @transform_13, window_bounds = array<i64: 1, 1, 32>}, {transform_indices = @transform_14, window_bounds = array<i64: 1, 1, 32>}, {transform_indices = @transform_15, window_bounds = array<i64: 1, 1, 32>}, {transform_indices = @transform_16, window_bounds = array<i64: 1, 32, 64>}, {transform_indices = @transform_17, window_bounds = array<i64: 1, 1, 64>}, {transform_indices = @transform_18, window_bounds = array<i64: 1, 64, 32>}, {transform_indices = @transform_19, window_bounds = array<i64: 1, 1, 32>}, {pipeline_mode = #tpu.pipeline_mode<synchronous>, transform_indices = @transform_20, window_bounds = array<i64: 1, 32>}, {pipeline_mode = #tpu.pipeline_mode<synchronous>, transform_indices = @transform_21, window_bounds = array<i64: 1, 32>}, {pipeline_mode = #tpu.pipeline_mode<synchronous>, transform_indices = @transform_22, window_bounds = array<i64: 32, 16>}, {pipeline_mode = #tpu.pipeline_mode<synchronous>, transform_indices = @transform_23, window_bounds = array<i64: 1, 16>}, {pipeline_mode = #tpu.pipeline_mode<synchronous>, transform_indices = @transform_24, window_bounds = array<i64: 16, 10>}, {pipeline_mode = #tpu.pipeline_mode<synchronous>, transform_indices = @transform_25, window_bounds = array<i64: 1, 10>}, {pipeline_mode = #tpu.pipeline_mode<synchronous>, transform_indices = @transform_26, window_bounds = array<i64: 2, 10>}, {pipeline_mode = #tpu.pipeline_mode<synchronous>, transform_indices = @transform_27, window_bounds = array<i64: 2, 32>}]} {
    %c0_i32 = arith.constant 0 : i32
    %0 = arith.cmpi eq, %arg0, %c0_i32 : i32
    %1 = arith.extui %0 : i1 to i32
    %c0_i32_0 = arith.constant 0 : i32
    %2 = arith.cmpi ne, %1, %c0_i32_0 : i32
    scf.if %2 {
      %c0_67 = arith.constant 0 : index
      %c0_68 = arith.constant 0 : index
      %160 = vector.load %arg1[%c0_67, %c0_68] : memref<32x576xf32, #tpu.memory_space<vmem>>, vector<32x576xf32>
      %c0_69 = arith.constant 0 : index
      %c0_70 = arith.constant 0 : index
      %161 = vector.load %arg2[%c0_69, %c0_70] : memref<576x128xf32, #tpu.memory_space<vmem>>, vector<576x128xf32>
      %cst_71 = arith.constant dense<0.000000e+00> : vector<32x128xf32>
      %162 = tpu.matmul %160, %161, %cst_71 {dimension_numbers = #tpu.dot_dimension_numbers<[1], [0], [0], [1], [0, 0, 1, 1], [], []>} : vector<32x576xf32>, vector<576x128xf32>, vector<32x128xf32> -> vector<32x128xf32>
      %c0_72 = arith.constant 0 : index
      %c0_73 = arith.constant 0 : index
      %163 = vector.load %arg3[%c0_72, %c0_73] : memref<1x128xf32, #tpu.memory_space<vmem>>, vector<1x128xf32>
      %164 = vector.broadcast %163 : vector<1x128xf32> to vector<32x128xf32>
      %165 = arith.addf %162, %164 : vector<32x128xf32>
      %166 = arith.mulf %165, %165 : vector<32x128xf32>
      %167 = arith.mulf %165, %166 : vector<32x128xf32>
      %cst_74 = arith.constant 4.471500e-02 : f32
      %168 = vector.broadcast %cst_74 : f32 to vector<32x128xf32>
      %169 = arith.mulf %168, %167 : vector<32x128xf32>
      %170 = arith.addf %165, %169 : vector<32x128xf32>
      %cst_75 = arith.constant 0.797884583 : f32
      %171 = vector.broadcast %cst_75 : f32 to vector<32x128xf32>
      %172 = arith.mulf %171, %170 : vector<32x128xf32>
      %173 = math.tanh %172 : vector<32x128xf32>
      %cst_76 = arith.constant 1.000000e+00 : f32
      %174 = vector.broadcast %cst_76 : f32 to vector<32x128xf32>
      %175 = arith.addf %174, %173 : vector<32x128xf32>
      %cst_77 = arith.constant 5.000000e-01 : f32
      %176 = vector.broadcast %cst_77 : f32 to vector<32x128xf32>
      %177 = arith.mulf %176, %175 : vector<32x128xf32>
      %178 = arith.mulf %165, %177 : vector<32x128xf32>
      %c0_78 = arith.constant 0 : index
      %c0_79 = arith.constant 0 : index
      %179 = vector.load %arg4[%c0_78, %c0_79] : memref<128x32xf32, #tpu.memory_space<vmem>>, vector<128x32xf32>
      %cst_80 = arith.constant dense<0.000000e+00> : vector<32x32xf32>
      %180 = tpu.matmul %178, %179, %cst_80 {dimension_numbers = #tpu.dot_dimension_numbers<[1], [0], [0], [1], [0, 0, 1, 1], [], []>} : vector<32x128xf32>, vector<128x32xf32>, vector<32x32xf32> -> vector<32x32xf32>
      %c0_81 = arith.constant 0 : index
      %c0_82 = arith.constant 0 : index
      %181 = vector.load %arg5[%c0_81, %c0_82] : memref<1x32xf32, #tpu.memory_space<vmem>>, vector<1x32xf32>
      %182 = vector.broadcast %181 : vector<1x32xf32> to vector<32x32xf32>
      %183 = arith.addf %180, %182 : vector<32x32xf32>
      %184 = vector.shape_cast %183 : vector<32x32xf32> to vector<2x16x32xf32>
      %c0_83 = arith.constant 0 : index
      %c0_84 = arith.constant 0 : index
      %185 = vector.load %arg6[%c0_83, %c0_84] : memref<16x32xf32, #tpu.memory_space<vmem>>, vector<16x32xf32>
      %186 = vector.shape_cast %185 : vector<16x32xf32> to vector<1x16x32xf32>
      %187 = vector.broadcast %186 : vector<1x16x32xf32> to vector<2x16x32xf32>
      %188 = arith.addf %184, %187 : vector<2x16x32xf32>
      %c0_85 = arith.constant 0 : index
      %c0_86 = arith.constant 0 : index
      %c0_87 = arith.constant 0 : index
      %189 = vector.load %arg29[%c0_85, %c0_86, %c0_87] : memref<2x24x32xf32, #tpu.memory_space<vmem>>, vector<2x16x32xf32>
      tpu.vector_store %arg29[%c0_85, %c0_86, %c0_87], %188 {strides = array<i32>} : memref<2x24x32xf32, #tpu.memory_space<vmem>>, vector<2x16x32xf32>,
      %c0_88 = arith.constant 0 : index
      %c0_89 = arith.constant 0 : index
      %190 = vector.load %arg7[%c0_88, %c0_89] : memref<8x32xf32, #tpu.memory_space<vmem>>, vector<8x32xf32>
      %191 = vector.shape_cast %190 : vector<8x32xf32> to vector<1x8x32xf32>
      %192 = vector.broadcast %191 : vector<1x8x32xf32> to vector<2x8x32xf32>
      %c0_90 = arith.constant 0 : index
      %c16 = arith.constant 16 : index
      %c0_91 = arith.constant 0 : index
      %193 = vector.load %arg29[%c0_90, %c16, %c0_91] : memref<2x24x32xf32, #tpu.memory_space<vmem>>, vector<2x8x32xf32>
      tpu.vector_store %arg29[%c0_90, %c16, %c0_91], %192 {strides = array<i32>} : memref<2x24x32xf32, #tpu.memory_space<vmem>>, vector<2x8x32xf32>,
    } else {
    }
    %c0 = arith.constant 0 : index
    %c0_1 = arith.constant 0 : index
    %c0_2 = arith.constant 0 : index
    %3 = vector.load %arg29[%c0, %c0_1, %c0_2] : memref<2x24x32xf32, #tpu.memory_space<vmem>>, vector<2x24x32xf32>
    %4 = vector.shape_cast %3 : vector<2x24x32xf32> to vector<48x32xf32>
    %c0_3 = arith.constant 0 : index
    %c0_4 = arith.constant 0 : index
    %c0_5 = arith.constant 0 : index
    %5 = vector.load %arg9[%c0_3, %c0_4, %c0_5] : memref<1x1x32xf32, #tpu.memory_space<vmem>>, vector<1x1x32xf32>
    %6 = vector.shape_cast %5 : vector<1x1x32xf32> to vector<1x32xf32>
    %c0_6 = arith.constant 0 : index
    %c0_7 = arith.constant 0 : index
    %c0_8 = arith.constant 0 : index
    %7 = vector.load %arg10[%c0_6, %c0_7, %c0_8] : memref<1x1x32xf32, #tpu.memory_space<vmem>>, vector<1x1x32xf32>
    %8 = vector.shape_cast %7 : vector<1x1x32xf32> to vector<1x32xf32>
    %cst = arith.constant dense<0.000000e+00> : vector<48xf32>
    %9 = vector.multi_reduction <add>, %4, %cst [1] : vector<48x32xf32> to vector<48xf32>
    %10 = vector.shape_cast %9 : vector<48xf32> to vector<48x1xf32>
    %cst_9 = arith.constant 3.200000e+01 : f32
    %11 = vector.broadcast %cst_9 : f32 to vector<48x1xf32>
    %12 = arith.divf %10, %11 : vector<48x1xf32>
    %13 = vector.broadcast %12 : vector<48x1xf32> to vector<48x32xf32>
    %14 = arith.subf %4, %13 : vector<48x32xf32>
    %15 = arith.mulf %14, %14 : vector<48x32xf32>
    %cst_10 = arith.constant dense<0.000000e+00> : vector<48xf32>
    %16 = vector.multi_reduction <add>, %15, %cst_10 [1] : vector<48x32xf32> to vector<48xf32>
    %17 = vector.shape_cast %16 : vector<48xf32> to vector<48x1xf32>
    %cst_11 = arith.constant 3.200000e+01 : f32
    %18 = vector.broadcast %cst_11 : f32 to vector<48x1xf32>
    %19 = arith.divf %17, %18 : vector<48x1xf32>
    %20 = vector.broadcast %12 : vector<48x1xf32> to vector<48x32xf32>
    %21 = arith.subf %4, %20 : vector<48x32xf32>
    %cst_12 = arith.constant 9.99999974E-6 : f32
    %22 = vector.broadcast %cst_12 : f32 to vector<48x1xf32>
    %23 = arith.addf %19, %22 : vector<48x1xf32>
    %24 = math.rsqrt %23 : vector<48x1xf32>
    %25 = vector.broadcast %24 : vector<48x1xf32> to vector<48x32xf32>
    %26 = arith.mulf %21, %25 : vector<48x32xf32>
    %27 = vector.broadcast %6 : vector<1x32xf32> to vector<48x32xf32>
    %28 = arith.mulf %26, %27 : vector<48x32xf32>
    %29 = vector.broadcast %8 : vector<1x32xf32> to vector<48x32xf32>
    %30 = arith.addf %28, %29 : vector<48x32xf32>
    %31 = arith.truncf %30 : vector<48x32xf32> to vector<48x32xbf16>
    %c0_13 = arith.constant 0 : index
    %c0_14 = arith.constant 0 : index
    %c0_15 = arith.constant 0 : index
    %32 = vector.load %arg11[%c0_13, %c0_14, %c0_15] : memref<1x32x96xbf16, #tpu.memory_space<vmem>>, vector<1x32x96xbf16>
    %33 = vector.shape_cast %32 : vector<1x32x96xbf16> to vector<32x96xbf16>
    %cst_16 = arith.constant dense<0.000000e+00> : vector<48x96xf32>
    %34 = tpu.matmul %31, %33, %cst_16 {dimension_numbers = #tpu.dot_dimension_numbers<[1], [0], [0], [1], [0, 0, 1, 1], [], []>} : vector<48x32xbf16>, vector<32x96xbf16>, vector<48x96xf32> -> vector<48x96xf32>
    %c0_17 = arith.constant 0 : index
    %c0_18 = arith.constant 0 : index
    %c0_19 = arith.constant 0 : index
    %35 = vector.load %arg12[%c0_17, %c0_18, %c0_19] : memref<1x1x96xf32, #tpu.memory_space<vmem>>, vector<1x1x96xf32>
    %36 = vector.shape_cast %35 : vector<1x1x96xf32> to vector<1x96xf32>
    %37 = vector.broadcast %36 : vector<1x96xf32> to vector<48x96xf32>
    %38 = arith.addf %34, %37 : vector<48x96xf32>
    %39 = vector.extract_strided_slice %38 {offsets = [0, 0], sizes = [48, 8], strides = [1, 1]} : vector<48x96xf32> to vector<48x8xf32>
    %40 = vector.shape_cast %39 : vector<48x8xf32> to vector<2x24x8xf32>
    %41 = vector.extract_strided_slice %38 {offsets = [0, 8], sizes = [48, 8], strides = [1, 1]} : vector<48x96xf32> to vector<48x8xf32>
    %42 = vector.shape_cast %41 : vector<48x8xf32> to vector<2x24x8xf32>
    %43 = vector.extract_strided_slice %38 {offsets = [0, 16], sizes = [48, 8], strides = [1, 1]} : vector<48x96xf32> to vector<48x8xf32>
    %44 = vector.shape_cast %43 : vector<48x8xf32> to vector<2x24x8xf32>
    %45 = vector.extract_strided_slice %38 {offsets = [0, 24], sizes = [48, 8], strides = [1, 1]} : vector<48x96xf32> to vector<48x8xf32>
    %46 = vector.shape_cast %45 : vector<48x8xf32> to vector<2x24x8xf32>
    %47 = tpu.concatenate %40, %42, %44, %46 in 0 : vector<2x24x8xf32>, vector<2x24x8xf32>, vector<2x24x8xf32>, vector<2x24x8xf32> -> vector<8x24x8xf32>
    %48 = vector.extract_strided_slice %38 {offsets = [0, 32], sizes = [48, 8], strides = [1, 1]} : vector<48x96xf32> to vector<48x8xf32>
    %49 = vector.shape_cast %48 : vector<48x8xf32> to vector<2x24x8xf32>
    %50 = vector.extract_strided_slice %38 {offsets = [0, 40], sizes = [48, 8], strides = [1, 1]} : vector<48x96xf32> to vector<48x8xf32>
    %51 = vector.shape_cast %50 : vector<48x8xf32> to vector<2x24x8xf32>
    %52 = vector.extract_strided_slice %38 {offsets = [0, 48], sizes = [48, 8], strides = [1, 1]} : vector<48x96xf32> to vector<48x8xf32>
    %53 = vector.shape_cast %52 : vector<48x8xf32> to vector<2x24x8xf32>
    %54 = vector.extract_strided_slice %38 {offsets = [0, 56], sizes = [48, 8], strides = [1, 1]} : vector<48x96xf32> to vector<48x8xf32>
    %55 = vector.shape_cast %54 : vector<48x8xf32> to vector<2x24x8xf32>
    %56 = tpu.concatenate %49, %51, %53, %55 in 0 : vector<2x24x8xf32>, vector<2x24x8xf32>, vector<2x24x8xf32>, vector<2x24x8xf32> -> vector<8x24x8xf32>
    %57 = vector.extract_strided_slice %38 {offsets = [0, 64], sizes = [48, 8], strides = [1, 1]} : vector<48x96xf32> to vector<48x8xf32>
    %58 = vector.shape_cast %57 : vector<48x8xf32> to vector<2x24x8xf32>
    %59 = vector.extract_strided_slice %38 {offsets = [0, 72], sizes = [48, 8], strides = [1, 1]} : vector<48x96xf32> to vector<48x8xf32>
    %60 = vector.shape_cast %59 : vector<48x8xf32> to vector<2x24x8xf32>
    %61 = vector.extract_strided_slice %38 {offsets = [0, 80], sizes = [48, 8], strides = [1, 1]} : vector<48x96xf32> to vector<48x8xf32>
    %62 = vector.shape_cast %61 : vector<48x8xf32> to vector<2x24x8xf32>
    %63 = vector.extract_strided_slice %38 {offsets = [0, 88], sizes = [48, 8], strides = [1, 1]} : vector<48x96xf32> to vector<48x8xf32>
    %64 = vector.shape_cast %63 : vector<48x8xf32> to vector<2x24x8xf32>
    %65 = tpu.concatenate %58, %60, %62, %64 in 0 : vector<2x24x8xf32>, vector<2x24x8xf32>, vector<2x24x8xf32>, vector<2x24x8xf32> -> vector<8x24x8xf32>
    "tpu.trace_start"() <{level = 10 : i32, message = "nqe,nke->nqk"}> : () -> ()
    %cst_20 = arith.constant dense<0.000000e+00> : vector<8x24x24xf32>
    %66 = tpu.matmul %47, %56, %cst_20 {dimension_numbers = #tpu.dot_dimension_numbers<[2], [2], [1], [1], [0, 0, 0, 1, 1, 1], [0], [0]>} : vector<8x24x8xf32>, vector<8x24x8xf32>, vector<8x24x24xf32> -> vector<8x24x24xf32>
    "tpu.trace_stop"() : () -> ()
    %cst_21 = arith.constant 0.353553385 : f32
    %67 = vector.broadcast %cst_21 : f32 to vector<8x24x24xf32>
    %68 = arith.mulf %66, %67 : vector<8x24x24xf32>
    %c0_22 = arith.constant 0 : index
    %c0_23 = arith.constant 0 : index
    %69 = vector.load %arg8[%c0_22, %c0_23] : memref<1x24xf32, #tpu.memory_space<vmem>>, vector<1x24xf32>
    %70 = vector.shape_cast %69 : vector<1x24xf32> to vector<1x1x24xf32>
    %71 = vector.broadcast %70 : vector<1x1x24xf32> to vector<8x24x24xf32>
    %72 = arith.addf %68, %71 : vector<8x24x24xf32>
    %cst_24 = arith.constant dense<0xFF800000> : vector<8x24xf32>
    %73 = vector.multi_reduction <maximumf>, %72, %cst_24 [2] : vector<8x24x24xf32> to vector<8x24xf32>
    %74 = vector.shape_cast %73 : vector<8x24xf32> to vector<8x24x1xf32>
    %75 = vector.broadcast %74 : vector<8x24x1xf32> to vector<8x24x24xf32>
    %76 = arith.subf %72, %75 : vector<8x24x24xf32>
    %77 = math.exp %76 : vector<8x24x24xf32>
    %cst_25 = arith.constant dense<0.000000e+00> : vector<8x24xf32>
    %78 = vector.multi_reduction <add>, %77, %cst_25 [2] : vector<8x24x24xf32> to vector<8x24xf32>
    %79 = vector.shape_cast %78 : vector<8x24xf32> to vector<8x24x1xf32>
    %80 = tpu.reciprocal %79 {approx = true} : vector<8x24x1xf32> -> vector<8x24x1xf32>
    %81 = vector.broadcast %80 : vector<8x24x1xf32> to vector<8x24x24xf32>
    %82 = arith.mulf %77, %81 : vector<8x24x24xf32>
    "tpu.trace_start"() <{level = 10 : i32, message = "nqk,nke->nqe"}> : () -> ()
    %cst_26 = arith.constant dense<0.000000e+00> : vector<8x24x8xf32>
    %83 = tpu.matmul %82, %65, %cst_26 {dimension_numbers = #tpu.dot_dimension_numbers<[2], [1], [1], [2], [0, 0, 0, 1, 1, 2], [0], [0]>} : vector<8x24x24xf32>, vector<8x24x8xf32>, vector<8x24x8xf32> -> vector<8x24x8xf32>
    "tpu.trace_stop"() : () -> ()
    %84 = vector.extract_strided_slice %83 {offsets = [0, 0, 0], sizes = [2, 24, 8], strides = [1, 1, 1]} : vector<8x24x8xf32> to vector<2x24x8xf32>
    %85 = vector.extract_strided_slice %83 {offsets = [2, 0, 0], sizes = [2, 24, 8], strides = [1, 1, 1]} : vector<8x24x8xf32> to vector<2x24x8xf32>
    %86 = vector.extract_strided_slice %83 {offsets = [4, 0, 0], sizes = [2, 24, 8], strides = [1, 1, 1]} : vector<8x24x8xf32> to vector<2x24x8xf32>
    %87 = vector.extract_strided_slice %83 {offsets = [6, 0, 0], sizes = [2, 24, 8], strides = [1, 1, 1]} : vector<8x24x8xf32> to vector<2x24x8xf32>
    %88 = tpu.concatenate %84, %85, %86, %87 in 2 : vector<2x24x8xf32>, vector<2x24x8xf32>, vector<2x24x8xf32>, vector<2x24x8xf32> -> vector<2x24x32xf32>
    %89 = vector.shape_cast %88 : vector<2x24x32xf32> to vector<48x32xf32>
    %90 = arith.truncf %89 : vector<48x32xf32> to vector<48x32xbf16>
    %c0_27 = arith.constant 0 : index
    %c0_28 = arith.constant 0 : index
    %c0_29 = arith.constant 0 : index
    %91 = vector.load %arg13[%c0_27, %c0_28, %c0_29] : memref<1x32x32xbf16, #tpu.memory_space<vmem>>, vector<1x32x32xbf16>
    %92 = vector.shape_cast %91 : vector<1x32x32xbf16> to vector<32x32xbf16>
    %cst_30 = arith.constant dense<0.000000e+00> : vector<48x32xf32>
    %93 = tpu.matmul %90, %92, %cst_30 {dimension_numbers = #tpu.dot_dimension_numbers<[1], [0], [0], [1], [0, 0, 1, 1], [], []>} : vector<48x32xbf16>, vector<32x32xbf16>, vector<48x32xf32> -> vector<48x32xf32>
    %c0_31 = arith.constant 0 : index
    %c0_32 = arith.constant 0 : index
    %c0_33 = arith.constant 0 : index
    %94 = vector.load %arg14[%c0_31, %c0_32, %c0_33] : memref<1x1x32xf32, #tpu.memory_space<vmem>>, vector<1x1x32xf32>
    %95 = vector.shape_cast %94 : vector<1x1x32xf32> to vector<1x32xf32>
    %96 = vector.broadcast %95 : vector<1x32xf32> to vector<48x32xf32>
    %97 = arith.addf %93, %96 : vector<48x32xf32>
    %98 = arith.addf %4, %97 : vector<48x32xf32>
    %c0_34 = arith.constant 0 : index
    %c0_35 = arith.constant 0 : index
    %c0_36 = arith.constant 0 : index
    %99 = vector.load %arg15[%c0_34, %c0_35, %c0_36] : memref<1x1x32xf32, #tpu.memory_space<vmem>>, vector<1x1x32xf32>
    %100 = vector.shape_cast %99 : vector<1x1x32xf32> to vector<1x32xf32>
    %c0_37 = arith.constant 0 : index
    %c0_38 = arith.constant 0 : index
    %c0_39 = arith.constant 0 : index
    %101 = vector.load %arg16[%c0_37, %c0_38, %c0_39] : memref<1x1x32xf32, #tpu.memory_space<vmem>>, vector<1x1x32xf32>
    %102 = vector.shape_cast %101 : vector<1x1x32xf32> to vector<1x32xf32>
    %cst_40 = arith.constant dense<0.000000e+00> : vector<48xf32>
    %103 = vector.multi_reduction <add>, %98, %cst_40 [1] : vector<48x32xf32> to vector<48xf32>
    %104 = vector.shape_cast %103 : vector<48xf32> to vector<48x1xf32>
    %cst_41 = arith.constant 3.200000e+01 : f32
    %105 = vector.broadcast %cst_41 : f32 to vector<48x1xf32>
    %106 = arith.divf %104, %105 : vector<48x1xf32>
    %107 = vector.broadcast %106 : vector<48x1xf32> to vector<48x32xf32>
    %108 = arith.subf %98, %107 : vector<48x32xf32>
    %109 = arith.mulf %108, %108 : vector<48x32xf32>
    %cst_42 = arith.constant dense<0.000000e+00> : vector<48xf32>
    %110 = vector.multi_reduction <add>, %109, %cst_42 [1] : vector<48x32xf32> to vector<48xf32>
    %111 = vector.shape_cast %110 : vector<48xf32> to vector<48x1xf32>
    %cst_43 = arith.constant 3.200000e+01 : f32
    %112 = vector.broadcast %cst_43 : f32 to vector<48x1xf32>
    %113 = arith.divf %111, %112 : vector<48x1xf32>
    %114 = vector.broadcast %106 : vector<48x1xf32> to vector<48x32xf32>
    %115 = arith.subf %98, %114 : vector<48x32xf32>
    %cst_44 = arith.constant 9.99999974E-6 : f32
    %116 = vector.broadcast %cst_44 : f32 to vector<48x1xf32>
    %117 = arith.addf %113, %116 : vector<48x1xf32>
    %118 = math.rsqrt %117 : vector<48x1xf32>
    %119 = vector.broadcast %118 : vector<48x1xf32> to vector<48x32xf32>
    %120 = arith.mulf %115, %119 : vector<48x32xf32>
    %121 = vector.broadcast %100 : vector<1x32xf32> to vector<48x32xf32>
    %122 = arith.mulf %120, %121 : vector<48x32xf32>
    %123 = vector.broadcast %102 : vector<1x32xf32> to vector<48x32xf32>
    %124 = arith.addf %122, %123 : vector<48x32xf32>
    %125 = arith.truncf %124 : vector<48x32xf32> to vector<48x32xbf16>
    %c0_45 = arith.constant 0 : index
    %c0_46 = arith.constant 0 : index
    %c0_47 = arith.constant 0 : index
    %126 = vector.load %arg17[%c0_45, %c0_46, %c0_47] : memref<1x32x64xbf16, #tpu.memory_space<vmem>>, vector<1x32x64xbf16>
    %127 = vector.shape_cast %126 : vector<1x32x64xbf16> to vector<32x64xbf16>
    %cst_48 = arith.constant dense<0.000000e+00> : vector<48x64xf32>
    %128 = tpu.matmul %125, %127, %cst_48 {dimension_numbers = #tpu.dot_dimension_numbers<[1], [0], [0], [1], [0, 0, 1, 1], [], []>} : vector<48x32xbf16>, vector<32x64xbf16>, vector<48x64xf32> -> vector<48x64xf32>
    %c0_49 = arith.constant 0 : index
    %c0_50 = arith.constant 0 : index
    %c0_51 = arith.constant 0 : index
    %129 = vector.load %arg18[%c0_49, %c0_50, %c0_51] : memref<1x1x64xf32, #tpu.memory_space<vmem>>, vector<1x1x64xf32>
    %130 = vector.shape_cast %129 : vector<1x1x64xf32> to vector<1x64xf32>
    %131 = vector.broadcast %130 : vector<1x64xf32> to vector<48x64xf32>
    %132 = arith.addf %128, %131 : vector<48x64xf32>
    %133 = arith.mulf %132, %132 : vector<48x64xf32>
    %134 = arith.mulf %132, %133 : vector<48x64xf32>
    %cst_52 = arith.constant 4.471500e-02 : f32
    %135 = vector.broadcast %cst_52 : f32 to vector<48x64xf32>
    %136 = arith.mulf %135, %134 : vector<48x64xf32>
    %137 = arith.addf %132, %136 : vector<48x64xf32>
    %cst_53 = arith.constant 0.797884583 : f32
    %138 = vector.broadcast %cst_53 : f32 to vector<48x64xf32>
    %139 = arith.mulf %138, %137 : vector<48x64xf32>
    %140 = math.tanh %139 : vector<48x64xf32>
    %cst_54 = arith.constant 1.000000e+00 : f32
    %141 = vector.broadcast %cst_54 : f32 to vector<48x64xf32>
    %142 = arith.addf %141, %140 : vector<48x64xf32>
    %cst_55 = arith.constant 5.000000e-01 : f32
    %143 = vector.broadcast %cst_55 : f32 to vector<48x64xf32>
    %144 = arith.mulf %143, %142 : vector<48x64xf32>
    %145 = arith.mulf %132, %144 : vector<48x64xf32>
    %146 = arith.truncf %145 : vector<48x64xf32> to vector<48x64xbf16>
    %c0_56 = arith.constant 0 : index
    %c0_57 = arith.constant 0 : index
    %c0_58 = arith.constant 0 : index
    %147 = vector.load %arg19[%c0_56, %c0_57, %c0_58] : memref<1x64x32xbf16, #tpu.memory_space<vmem>>, vector<1x64x32xbf16>
    %148 = vector.shape_cast %147 : vector<1x64x32xbf16> to vector<64x32xbf16>
    %cst_59 = arith.constant dense<0.000000e+00> : vector<48x32xf32>
    %149 = tpu.matmul %146, %148, %cst_59 {dimension_numbers = #tpu.dot_dimension_numbers<[1], [0], [0], [1], [0, 0, 1, 1], [], []>} : vector<48x64xbf16>, vector<64x32xbf16>, vector<48x32xf32> -> vector<48x32xf32>
    %c0_60 = arith.constant 0 : index
    %c0_61 = arith.constant 0 : index
    %c0_62 = arith.constant 0 : index
    %150 = vector.load %arg20[%c0_60, %c0_61, %c0_62] : memref<1x1x32xf32, #tpu.memory_space<vmem>>, vector<1x1x32xf32>
    %151 = vector.shape_cast %150 : vector<1x1x32xf32> to vector<1x32xf32>
    %152 = vector.broadcast %151 : vector<1x32xf32> to vector<48x32xf32>
    %153 = arith.addf %149, %152 : vector<48x32xf32>
    %154 = arith.addf %98, %153 : vector<48x32xf32>
    %155 = vector.shape_cast %154 : vector<48x32xf32> to vector<2x24x32xf32>
    %c0_63 = arith.constant 0 : index
    %c0_64 = arith.constant 0 : index
    %c0_65 = arith.constant 0 : index
    %156 = vector.load %arg29[%c0_63, %c0_64, %c0_65] : memref<2x24x32xf32, #tpu.memory_space<vmem>>, vector<2x24x32xf32>
    tpu.vector_store %arg29[%c0_63, %c0_64, %c0_65], %155 {strides = array<i32>} : memref<2x24x32xf32, #tpu.memory_space<vmem>>, vector<2x24x32xf32>,
    %c1_i32 = arith.constant 1 : i32
    %157 = arith.cmpi eq, %arg0, %c1_i32 : i32
    %158 = arith.extui %157 : i1 to i32
    %c0_i32_66 = arith.constant 0 : i32
    %159 = arith.cmpi ne, %158, %c0_i32_66 : i32
    scf.if %159 {
      %160 = vector.shape_cast %154 : vector<48x32xf32> to vector<2x24x32xf32>
      %161 = vector.extract_strided_slice %160 {offsets = [0, 16, 0], sizes = [2, 1, 32], strides = [1, 1, 1]} : vector<2x24x32xf32> to vector<2x1x32xf32>
      %162 = vector.shape_cast %161 : vector<2x1x32xf32> to vector<2x32xf32>
      %c0_67 = arith.constant 0 : index
      %c0_68 = arith.constant 0 : index
      %163 = vector.load %arg28[%c0_67, %c0_68] : memref<2x32xf32, #tpu.memory_space<vmem>>, vector<2x32xf32>
      tpu.vector_store %arg28[%c0_67, %c0_68], %162 {strides = array<i32>} : memref<2x32xf32, #tpu.memory_space<vmem>>, vector<2x32xf32>,
      %c0_69 = arith.constant 0 : index
      %c0_70 = arith.constant 0 : index
      %164 = vector.load %arg21[%c0_69, %c0_70] : memref<1x32xf32, #tpu.memory_space<vmem>>, vector<1x32xf32>
      %c0_71 = arith.constant 0 : index
      %c0_72 = arith.constant 0 : index
      %165 = vector.load %arg22[%c0_71, %c0_72] : memref<1x32xf32, #tpu.memory_space<vmem>>, vector<1x32xf32>
      %cst_73 = arith.constant dense<0.000000e+00> : vector<2xf32>
      %166 = vector.multi_reduction <add>, %162, %cst_73 [1] : vector<2x32xf32> to vector<2xf32>
      %167 = vector.shape_cast %166 : vector<2xf32> to vector<2x1xf32>
      %cst_74 = arith.constant 3.200000e+01 : f32
      %168 = vector.broadcast %cst_74 : f32 to vector<2x1xf32>
      %169 = arith.divf %167, %168 : vector<2x1xf32>
      %170 = vector.broadcast %169 : vector<2x1xf32> to vector<2x32xf32>
      %171 = arith.subf %162, %170 : vector<2x32xf32>
      %172 = arith.mulf %171, %171 : vector<2x32xf32>
      %cst_75 = arith.constant dense<0.000000e+00> : vector<2xf32>
      %173 = vector.multi_reduction <add>, %172, %cst_75 [1] : vector<2x32xf32> to vector<2xf32>
      %174 = vector.shape_cast %173 : vector<2xf32> to vector<2x1xf32>
      %cst_76 = arith.constant 3.200000e+01 : f32
      %175 = vector.broadcast %cst_76 : f32 to vector<2x1xf32>
      %176 = arith.divf %174, %175 : vector<2x1xf32>
      %177 = vector.broadcast %169 : vector<2x1xf32> to vector<2x32xf32>
      %178 = arith.subf %162, %177 : vector<2x32xf32>
      %cst_77 = arith.constant 9.99999974E-6 : f32
      %179 = vector.broadcast %cst_77 : f32 to vector<2x1xf32>
      %180 = arith.addf %176, %179 : vector<2x1xf32>
      %181 = math.rsqrt %180 : vector<2x1xf32>
      %182 = vector.broadcast %181 : vector<2x1xf32> to vector<2x32xf32>
      %183 = arith.mulf %178, %182 : vector<2x32xf32>
      %184 = vector.broadcast %164 : vector<1x32xf32> to vector<2x32xf32>
      %185 = arith.mulf %183, %184 : vector<2x32xf32>
      %186 = vector.broadcast %165 : vector<1x32xf32> to vector<2x32xf32>
      %187 = arith.addf %185, %186 : vector<2x32xf32>
      %c0_78 = arith.constant 0 : index
      %c0_79 = arith.constant 0 : index
      %188 = vector.load %arg23[%c0_78, %c0_79] : memref<32x16xf32, #tpu.memory_space<vmem>>, vector<32x16xf32>
      %cst_80 = arith.constant dense<0.000000e+00> : vector<2x16xf32>
      %189 = tpu.matmul %187, %188, %cst_80 {dimension_numbers = #tpu.dot_dimension_numbers<[1], [0], [0], [1], [0, 0, 1, 1], [], []>} : vector<2x32xf32>, vector<32x16xf32>, vector<2x16xf32> -> vector<2x16xf32>
      %c0_81 = arith.constant 0 : index
      %c0_82 = arith.constant 0 : index
      %190 = vector.load %arg24[%c0_81, %c0_82] : memref<1x16xf32, #tpu.memory_space<vmem>>, vector<1x16xf32>
      %191 = vector.broadcast %190 : vector<1x16xf32> to vector<2x16xf32>
      %192 = arith.addf %189, %191 : vector<2x16xf32>
      %193 = arith.mulf %192, %192 : vector<2x16xf32>
      %194 = arith.mulf %192, %193 : vector<2x16xf32>
      %cst_83 = arith.constant 4.471500e-02 : f32
      %195 = vector.broadcast %cst_83 : f32 to vector<2x16xf32>
      %196 = arith.mulf %195, %194 : vector<2x16xf32>
      %197 = arith.addf %192, %196 : vector<2x16xf32>
      %cst_84 = arith.constant 0.797884583 : f32
      %198 = vector.broadcast %cst_84 : f32 to vector<2x16xf32>
      %199 = arith.mulf %198, %197 : vector<2x16xf32>
      %200 = math.tanh %199 : vector<2x16xf32>
      %cst_85 = arith.constant 1.000000e+00 : f32
      %201 = vector.broadcast %cst_85 : f32 to vector<2x16xf32>
      %202 = arith.addf %201, %200 : vector<2x16xf32>
      %cst_86 = arith.constant 5.000000e-01 : f32
      %203 = vector.broadcast %cst_86 : f32 to vector<2x16xf32>
      %204 = arith.mulf %203, %202 : vector<2x16xf32>
      %205 = arith.mulf %192, %204 : vector<2x16xf32>
      %c0_87 = arith.constant 0 : index
      %c0_88 = arith.constant 0 : index
      %206 = vector.load %arg25[%c0_87, %c0_88] : memref<16x10xf32, #tpu.memory_space<vmem>>, vector<16x10xf32>
      %cst_89 = arith.constant dense<0.000000e+00> : vector<2x10xf32>
      %207 = tpu.matmul %205, %206, %cst_89 {dimension_numbers = #tpu.dot_dimension_numbers<[1], [0], [0], [1], [0, 0, 1, 1], [], []>} : vector<2x16xf32>, vector<16x10xf32>, vector<2x10xf32> -> vector<2x10xf32>
      %c0_90 = arith.constant 0 : index
      %c0_91 = arith.constant 0 : index
      %208 = vector.load %arg26[%c0_90, %c0_91] : memref<1x10xf32, #tpu.memory_space<vmem>>, vector<1x10xf32>
      %209 = vector.broadcast %208 : vector<1x10xf32> to vector<2x10xf32>
      %210 = arith.addf %207, %209 : vector<2x10xf32>
      %c0_92 = arith.constant 0 : index
      %c0_93 = arith.constant 0 : index
      %211 = vector.load %arg27[%c0_92, %c0_93] : memref<2x10xf32, #tpu.memory_space<vmem>>, vector<2x10xf32>
      tpu.vector_store %arg27[%c0_92, %c0_93], %210 {strides = array<i32>} : memref<2x10xf32, #tpu.memory_space<vmem>>, vector<2x10xf32>,
    } else {
    }
    return
  }
  func.func @transform_0(%arg0: i32) -> (i32, i32) {
    %c0_i32 = arith.constant 0 : i32
    %c0_i32_0 = arith.constant 0 : i32
    %c0_i32_1 = arith.constant 0 : i32
    return %c0_i32, %c0_i32_0 : i32, i32
  }
  func.func @transform_1(%arg0: i32) -> (i32, i32) {
    %c0_i32 = arith.constant 0 : i32
    %c0_i32_0 = arith.constant 0 : i32
    %c0_i32_1 = arith.constant 0 : i32
    return %c0_i32, %c0_i32_0 : i32, i32
  }
  func.func @transform_2(%arg0: i32) -> (i32, i32) {
    %c0_i32 = arith.constant 0 : i32
    %c0_i32_0 = arith.constant 0 : i32
    %c0_i32_1 = arith.constant 0 : i32
    return %c0_i32, %c0_i32_0 : i32, i32
  }
  func.func @transform_3(%arg0: i32) -> (i32, i32) {
    %c0_i32 = arith.constant 0 : i32
    %c0_i32_0 = arith.constant 0 : i32
    %c0_i32_1 = arith.constant 0 : i32
    return %c0_i32, %c0_i32_0 : i32, i32
  }
  func.func @transform_4(%arg0: i32) -> (i32, i32) {
    %c0_i32 = arith.constant 0 : i32
    %c0_i32_0 = arith.constant 0 : i32
    %c0_i32_1 = arith.constant 0 : i32
    return %c0_i32, %c0_i32_0 : i32, i32
  }
  func.func @transform_5(%arg0: i32) -> (i32, i32) {
    %c0_i32 = arith.constant 0 : i32
    %c0_i32_0 = arith.constant 0 : i32
    %c0_i32_1 = arith.constant 0 : i32
    return %c0_i32, %c0_i32_0 : i32, i32
  }
  func.func @transform_6(%arg0: i32) -> (i32, i32) {
    %c0_i32 = arith.constant 0 : i32
    %c0_i32_0 = arith.constant 0 : i32
    %c0_i32_1 = arith.constant 0 : i32
    return %c0_i32, %c0_i32_0 : i32, i32
  }
  func.func @transform_7(%arg0: i32) -> (i32, i32) {
    %c0_i32 = arith.constant 0 : i32
    %c0_i32_0 = arith.constant 0 : i32
    %c0_i32_1 = arith.constant 0 : i32
    return %c0_i32, %c0_i32_0 : i32, i32
  }
  func.func @transform_8(%arg0: i32) -> (i32, i32, i32) {
    %c0_i32 = arith.constant 0 : i32
    %c0_i32_0 = arith.constant 0 : i32
    %c0_i32_1 = arith.constant 0 : i32
    return %arg0, %c0_i32, %c0_i32_0 : i32, i32, i32
  }
  func.func @transform_9(%arg0: i32) -> (i32, i32, i32) {
    %c0_i32 = arith.constant 0 : i32
    %c0_i32_0 = arith.constant 0 : i32
    %c0_i32_1 = arith.constant 0 : i32
    return %arg0, %c0_i32, %c0_i32_0 : i32, i32, i32
  }
  func.func @transform_10(%arg0: i32) -> (i32, i32, i32) {
    %c0_i32 = arith.constant 0 : i32
    %c0_i32_0 = arith.constant 0 : i32
    %c0_i32_1 = arith.constant 0 : i32
    return %arg0, %c0_i32, %c0_i32_0 : i32, i32, i32
  }
  func.func @transform_11(%arg0: i32) -> (i32, i32, i32) {
    %c0_i32 = arith.constant 0 : i32
    %c0_i32_0 = arith.constant 0 : i32
    %c0_i32_1 = arith.constant 0 : i32
    return %arg0, %c0_i32, %c0_i32_0 : i32, i32, i32
  }
  func.func @transform_12(%arg0: i32) -> (i32, i32, i32) {
    %c0_i32 = arith.constant 0 : i32
    %c0_i32_0 = arith.constant 0 : i32
    %c0_i32_1 = arith.constant 0 : i32
    return %arg0, %c0_i32, %c0_i32_0 : i32, i32, i32
  }
  func.func @transform_13(%arg0: i32) -> (i32, i32, i32) {
    %c0_i32 = arith.constant 0 : i32
    %c0_i32_0 = arith.constant 0 : i32
    %c0_i32_1 = arith.constant 0 : i32
    return %arg0, %c0_i32, %c0_i32_0 : i32, i32, i32
  }
  func.func @transform_14(%arg0: i32) -> (i32, i32, i32) {
    %c0_i32 = arith.constant 0 : i32
    %c0_i32_0 = arith.constant 0 : i32
    %c0_i32_1 = arith.constant 0 : i32
    return %arg0, %c0_i32, %c0_i32_0 : i32, i32, i32
  }
  func.func @transform_15(%arg0: i32) -> (i32, i32, i32) {
    %c0_i32 = arith.constant 0 : i32
    %c0_i32_0 = arith.constant 0 : i32
    %c0_i32_1 = arith.constant 0 : i32
    return %arg0, %c0_i32, %c0_i32_0 : i32, i32, i32
  }
  func.func @transform_16(%arg0: i32) -> (i32, i32, i32) {
    %c0_i32 = arith.constant 0 : i32
    %c0_i32_0 = arith.constant 0 : i32
    %c0_i32_1 = arith.constant 0 : i32
    return %arg0, %c0_i32, %c0_i32_0 : i32, i32, i32
  }
  func.func @transform_17(%arg0: i32) -> (i32, i32, i32) {
    %c0_i32 = arith.constant 0 : i32
    %c0_i32_0 = arith.constant 0 : i32
    %c0_i32_1 = arith.constant 0 : i32
    return %arg0, %c0_i32, %c0_i32_0 : i32, i32, i32
  }
  func.func @transform_18(%arg0: i32) -> (i32, i32, i32) {
    %c0_i32 = arith.constant 0 : i32
    %c0_i32_0 = arith.constant 0 : i32
    %c0_i32_1 = arith.constant 0 : i32
    return %arg0, %c0_i32, %c0_i32_0 : i32, i32, i32
  }
  func.func @transform_19(%arg0: i32) -> (i32, i32, i32) {
    %c0_i32 = arith.constant 0 : i32
    %c0_i32_0 = arith.constant 0 : i32
    %c0_i32_1 = arith.constant 0 : i32
    return %arg0, %c0_i32, %c0_i32_0 : i32, i32, i32
  }
  func.func @transform_20(%arg0: i32) -> (i32, i32) {
    %c0_i32 = arith.constant 0 : i32
    %c0_i32_0 = arith.constant 0 : i32
    %c0_i32_1 = arith.constant 0 : i32
    return %c0_i32, %c0_i32_0 : i32, i32
  }
  func.func @transform_21(%arg0: i32) -> (i32, i32) {
    %c0_i32 = arith.constant 0 : i32
    %c0_i32_0 = arith.constant 0 : i32
    %c0_i32_1 = arith.constant 0 : i32
    return %c0_i32, %c0_i32_0 : i32, i32
  }
  func.func @transform_22(%arg0: i32) -> (i32, i32) {
    %c0_i32 = arith.constant 0 : i32
    %c0_i32_0 = arith.constant 0 : i32
    %c0_i32_1 = arith.constant 0 : i32
    return %c0_i32, %c0_i32_0 : i32, i32
  }
  func.func @transform_23(%arg0: i32) -> (i32, i32) {
    %c0_i32 = arith.constant 0 : i32
    %c0_i32_0 = arith.constant 0 : i32
    %c0_i32_1 = arith.constant 0 : i32
    return %c0_i32, %c0_i32_0 : i32, i32
  }
  func.func @transform_24(%arg0: i32) -> (i32, i32) {
    %c0_i32 = arith.constant 0 : i32
    %c0_i32_0 = arith.constant 0 : i32
    %c0_i32_1 = arith.constant 0 : i32
    return %c0_i32, %c0_i32_0 : i32, i32
  }
  func.func @transform_25(%arg0: i32) -> (i32, i32) {
    %c0_i32 = arith.constant 0 : i32
    %c0_i32_0 = arith.constant 0 : i32
    %c0_i32_1 = arith.constant 0 : i32
    return %c0_i32, %c0_i32_0 : i32, i32
  }
  func.func @transform_26(%arg0: i32) -> (i32, i32) {
    %c0_i32 = arith.constant 0 : i32
    %c0_i32_0 = arith.constant 0 : i32
    %c0_i32_1 = arith.constant 0 : i32
    return %c0_i32, %c0_i32_0 : i32, i32
  }
  func.func @transform_27(%arg0: i32) -> (i32, i32) {
    %c0_i32 = arith.constant 0 : i32
    %c0_i32_0 = arith.constant 0 : i32
    %c0_i32_1 = arith.constant 0 : i32
    return %c0_i32, %c0_i32_0 : i32, i32
  }
}

</mosaic_0001>

<llo_original>
// kernel: _lambda_.1
$region0: #{_lambda_.1}
  #allocation0 [shape = 'u32[]', space=smem, size = 0x4, offset = 0x4, fixed_abs, tag = 'smem constant byte address 0x4 - core index']
  #allocation1 [shape = 'u32[144,128]{1,0:T(1,128)}', space=vmem, size = 0x12000, scoped, tag = 'internal scratch']
  #allocation2 [shape = 'f32[2,24,32]{2,1,0:T(8,128)}', space=vmem, size = 0x6000, scoped, tag = 'scratch operand']
  %s0 = inlined_call_operand.vmem [shape: f32[32,576], index: 0, kind: input, shape index: {}]
  %s1 = inlined_call_operand.vmem [shape: f32[576,128], index: 1, kind: input, shape index: {}]
  %s2 = inlined_call_operand.vmem [shape: f32[1,128], index: 2, kind: input, shape index: {}]
  %s3 = inlined_call_operand.vmem [shape: f32[128,32], index: 3, kind: input, shape index: {}]
  %s4 = inlined_call_operand.vmem [shape: f32[1,32], index: 4, kind: input, shape index: {}, may-alias: {4,21}]
  %s5 = inlined_call_operand.vmem [shape: f32[16,32], index: 5, kind: input, shape index: {}]
  %s6 = inlined_call_operand.vmem [shape: f32[8,32], index: 6, kind: input, shape index: {}]
  %s7 = inlined_call_operand.vmem [shape: f32[1,24], index: 7, kind: input, shape index: {}]
  %s8 = inlined_call_operand.vmem [shape: f32[2,1,32], index: 8, kind: input, shape index: {}, may-alias: {8,14}]
  %s9 = inlined_call_operand.vmem [shape: f32[2,1,32], index: 9, kind: input, shape index: {}, may-alias: {9,13,15,19}]
  %s10 = inlined_call_operand.vmem [shape: bf16[2,32,96], index: 10, kind: input, shape index: {}]
  %s11 = inlined_call_operand.vmem [shape: f32[2,1,96], index: 11, kind: input, shape index: {}]
  %s12 = inlined_call_operand.vmem [shape: bf16[2,32,32], index: 12, kind: input, shape index: {}]
  %s13 = inlined_call_operand.vmem [shape: f32[2,1,32], index: 13, kind: input, shape index: {}, may-alias: {9,13,15,19}]
  %s14 = inlined_call_operand.vmem [shape: f32[2,1,32], index: 14, kind: input, shape index: {}, may-alias: {8,14}]
  %s15 = inlined_call_operand.vmem [shape: f32[2,1,32], index: 15, kind: input, shape index: {}, may-alias: {9,13,15,19}]
  %s16 = inlined_call_operand.vmem [shape: bf16[2,32,64], index: 16, kind: input, shape index: {}]
  %s17 = inlined_call_operand.vmem [shape: f32[2,1,64], index: 17, kind: input, shape index: {}]
  %s18 = inlined_call_operand.vmem [shape: bf16[2,64,32], index: 18, kind: input, shape index: {}]
  %s19 = inlined_call_operand.vmem [shape: f32[2,1,32], index: 19, kind: input, shape index: {}, may-alias: {9,13,15,19}]
  %s20 = inlined_call_operand.vmem [shape: f32[1,32], index: 20, kind: input, shape index: {}]
  %s21 = inlined_call_operand.vmem [shape: f32[1,32], index: 21, kind: input, shape index: {}, may-alias: {4,21}]
  %s22 = inlined_call_operand.vmem [shape: f32[32,16], index: 22, kind: input, shape index: {}]
  %s23 = inlined_call_operand.vmem [shape: f32[1,16], index: 23, kind: input, shape index: {}]
  %s24 = inlined_call_operand.vmem [shape: f32[16,10], index: 24, kind: input, shape index: {}]
  %s25 = inlined_call_operand.vmem [shape: f32[1,10], index: 25, kind: input, shape index: {}]
  %s26 = inlined_call_operand.hbm [shape: f32[2,10], index: 26, kind: output, shape index: {0}]
  %s27 = inlined_call_operand.hbm [shape: f32[2,32], index: 27, kind: output, shape index: {1}]
  %28 = xla_tuple %s26, %s27
  %s29 = sld [smem:[#allocation0]]
  $region153: #{_lambda_.1} parent=0
    _
  %s31 = ssub.s32 1, %s29
  %s32 = scalar_select 0, %s31, %s29
  $region1: #{_lambda_.1} parent=0
    #allocation3 [shape = 'u8[1024]{0}', space=vmem, size = 0x400, scoped, tag = 'output window, operand 0, single buffered']
    #allocation4 [shape = 's32[2]{0}', space=sflag, size = 0x8, scoped, tag = 'scoped memory for _lambda_.1']
    #allocation5 [shape = 'u8[1024]{0}', space=vmem, size = 0x400, scoped, tag = 'output window, operand 1, single buffered']
    #allocation6 [shape = 's32[1]{0}', space=sflag, size = 0x4, scoped, tag = 'scoped memory for _lambda_.1']
    %33 = vsyncpa [#allocation4], 0
    %34 = vsyncpa [#allocation6], 0
    loop: start=0, step=1, limit=4
    $region2: #{_lambda_.1} parent=1 // loop_pre_header
      _
    $region3: #{_lambda_.1} parent=1 // loop_header
      %s36 = sphi 0, %s40
      %p37 = scmp.ge.s32.totalorder %s36, 4
      %s44 = sphi 0, %s44
      %s46 = sphi 0, %s44
      %s47 = sphi 0, %s46
      %s61 = sphi 0, %s47
      %s65 = sphi 0, %s65
      %s67 = sphi 0, %s65
      %s68 = sphi 0, %s67
      %s82 = sphi 0, %s68
      %s86 = sphi 0, %s86
      %s88 = sphi 0, %s86
      %s89 = sphi 0, %s88
      %s103 = sphi 0, %s89
      %s107 = sphi 0, %s107
      %s109 = sphi 0, %s107
      %s110 = sphi 0, %s109
      %s124 = sphi 0, %s110
      %s128 = sphi 0, %s128
      %s130 = sphi 0, %s128
      %s131 = sphi 0, %s130
      %s145 = sphi 0, %s131
      %s149 = sphi 0, %s149
      %s151 = sphi 0, %s149
      %s152 = sphi 0, %s151
      %s166 = sphi 0, %s152
      %s170 = sphi 0, %s170
      %s172 = sphi 0, %s170
      %s173 = sphi 0, %s172
      %s187 = sphi 0, %s173
      %s191 = sphi 0, %s191
      %s193 = sphi 0, %s191
      %s194 = sphi 0, %s193
      %s208 = sphi 0, %s194
      %s214 = sphi 0, %s216
      %s217 = sphi 0, %s214
      %s218 = sphi 0, %s217
      %s234 = sphi 0, %s218
      %s240 = sphi 0, %s242
      %s243 = sphi 0, %s240
      %s244 = sphi 0, %s243
      %s260 = sphi 0, %s244
      %s266 = sphi 0, %s268
      %s269 = sphi 0, %s266
      %s270 = sphi 0, %s269
      %s286 = sphi 0, %s270
      %s292 = sphi 0, %s294
      %s295 = sphi 0, %s292
      %s296 = sphi 0, %s295
      %s312 = sphi 0, %s296
      %s318 = sphi 0, %s320
      %s321 = sphi 0, %s318
      %s322 = sphi 0, %s321
      %s338 = sphi 0, %s322
      %s344 = sphi 0, %s346
      %s347 = sphi 0, %s344
      %s348 = sphi 0, %s347
      %s364 = sphi 0, %s348
      %s370 = sphi 0, %s372
      %s373 = sphi 0, %s370
      %s374 = sphi 0, %s373
      %s390 = sphi 0, %s374
      %s396 = sphi 0, %s398
      %s399 = sphi 0, %s396
      %s400 = sphi 0, %s399
      %s416 = sphi 0, %s400
      %s422 = sphi 0, %s424
      %s425 = sphi 0, %s422
      %s426 = sphi 0, %s425
      %s442 = sphi 0, %s426
      %s448 = sphi 0, %s450
      %s451 = sphi 0, %s448
      %s452 = sphi 0, %s451
      %s468 = sphi 0, %s452
      %s474 = sphi 0, %s476
      %s477 = sphi 0, %s474
      %s478 = sphi 0, %s477
      %s494 = sphi 0, %s478
      %s500 = sphi 0, %s502
      %s503 = sphi 0, %s500
      %s504 = sphi 0, %s503
      %s520 = sphi 0, %s504
      %s524 = sphi 0, %s524
      %s526 = sphi 0, %s524
      %s527 = sphi 0, %s526
      %s541 = sphi 0, %s527
      %s545 = sphi 0, %s545
      %s547 = sphi 0, %s545
      %s548 = sphi 0, %s547
      %s562 = sphi 0, %s548
      %s566 = sphi 0, %s566
      %s568 = sphi 0, %s566
      %s569 = sphi 0, %s568
      %s583 = sphi 0, %s569
      %s587 = sphi 0, %s587
      %s589 = sphi 0, %s587
      %s590 = sphi 0, %s589
      %s604 = sphi 0, %s590
      %s608 = sphi 0, %s608
      %s610 = sphi 0, %s608
      %s611 = sphi 0, %s610
      %s625 = sphi 0, %s611
      %s629 = sphi 0, %s629
      %s631 = sphi 0, %s629
      %s632 = sphi 0, %s631
      %s646 = sphi 0, %s632
      %s650 = sphi 0, %s650
      %s652 = sphi 0, %s650
      %s653 = sphi 0, %s652
      %s667 = sphi 0, %s653
      %s671 = sphi 0, %s671
      %s673 = sphi 0, %s671
      %s674 = sphi 0, %s673
      %s688 = sphi 0, %s674
    $region4: #{_lambda_.1} parent=1 // loop_header_branch
      %39 = sbr.rel (%p37) target = $region8
    $region5: #{_lambda_.1} parent=1 // loop_body
      %s41 = ssub.s32 %s36, 1
      %s42 = ssub.s32 %s36, 2
      %s43 = sadd.s32 %s36, 1
      %s45 = sadd.s32 %s44, 1
      %p48 = scmp.eq.s32.totalorder %s36, 1
      %p49 = scmp.ne.s32.totalorder %s44, %s46
      %p50 = scmp.eq.s32.totalorder %s36, 0
      %p51 = por %p49, %p50
      %p52 = scmp.ne.s32.totalorder %s44, %s46
      %p53 = scmp.eq.s32.totalorder %s41, 1
      %p54 = por %p52, %p53
      %p55 = scmp.ne.s32.totalorder %s46, %s47
      %p56 = scmp.eq.s32.totalorder %s41, 0
      %p57 = por %p55, %p56
      %p58 = scmp.ne.s32.totalorder %s46, %s47
      %p59 = scmp.eq.s32.totalorder %s42, 1
      %p60 = por %p58, %p59
      %p62 = scmp.ne.s32.totalorder %s47, %s61
      %p63 = scmp.eq.s32.totalorder %s42, 0
      %p64 = por %p62, %p63
      %s66 = sadd.s32 %s65, 1
      %p69 = scmp.eq.s32.totalorder %s36, 1
      %p70 = scmp.ne.s32.totalorder %s65, %s67
      %p71 = scmp.eq.s32.totalorder %s36, 0
      %p72 = por %p70, %p71
      %p73 = scmp.ne.s32.totalorder %s65, %s67
      %p74 = scmp.eq.s32.totalorder %s41, 1
      %p75 = por %p73, %p74
      %p76 = scmp.ne.s32.totalorder %s67, %s68
      %p77 = scmp.eq.s32.totalorder %s41, 0
      %p78 = por %p76, %p77
      %p79 = scmp.ne.s32.totalorder %s67, %s68
      %p80 = scmp.eq.s32.totalorder %s42, 1
      %p81 = por %p79, %p80
      %p83 = scmp.ne.s32.totalorder %s68, %s82
      %p84 = scmp.eq.s32.totalorder %s42, 0
      %p85 = por %p83, %p84
      %s87 = sadd.s32 %s86, 1
      %p90 = scmp.eq.s32.totalorder %s36, 1
      %p91 = scmp.ne.s32.totalorder %s86, %s88
      %p92 = scmp.eq.s32.totalorder %s36, 0
      %p93 = por %p91, %p92
      %p94 = scmp.ne.s32.totalorder %s86, %s88
      %p95 = scmp.eq.s32.totalorder %s41, 1
      %p96 = por %p94, %p95
      %p97 = scmp.ne.s32.totalorder %s88, %s89
      %p98 = scmp.eq.s32.totalorder %s41, 0
      %p99 = por %p97, %p98
      %p100 = scmp.ne.s32.totalorder %s88, %s89
      %p101 = scmp.eq.s32.totalorder %s42, 1
      %p102 = por %p100, %p101
      %p104 = scmp.ne.s32.totalorder %s89, %s103
      %p105 = scmp.eq.s32.totalorder %s42, 0
      %p106 = por %p104, %p105
      %s108 = sadd.s32 %s107, 1
      %p111 = scmp.eq.s32.totalorder %s36, 1
      %p112 = scmp.ne.s32.totalorder %s107, %s109
      %p113 = scmp.eq.s32.totalorder %s36, 0
      %p114 = por %p112, %p113
      %p115 = scmp.ne.s32.totalorder %s107, %s109
      %p116 = scmp.eq.s32.totalorder %s41, 1
      %p117 = por %p115, %p116
      %p118 = scmp.ne.s32.totalorder %s109, %s110
      %p119 = scmp.eq.s32.totalorder %s41, 0
      %p120 = por %p118, %p119
      %p121 = scmp.ne.s32.totalorder %s109, %s110
      %p122 = scmp.eq.s32.totalorder %s42, 1
      %p123 = por %p121, %p122
      %p125 = scmp.ne.s32.totalorder %s110, %s124
      %p126 = scmp.eq.s32.totalorder %s42, 0
      %p127 = por %p125, %p126
      %s129 = sadd.s32 %s128, 1
      %p132 = scmp.eq.s32.totalorder %s36, 1
      %p133 = scmp.ne.s32.totalorder %s128, %s130
      %p134 = scmp.eq.s32.totalorder %s36, 0
      %p135 = por %p133, %p134
      %p136 = scmp.ne.s32.totalorder %s128, %s130
      %p137 = scmp.eq.s32.totalorder %s41, 1
      %p138 = por %p136, %p137
      %p139 = scmp.ne.s32.totalorder %s130, %s131
      %p140 = scmp.eq.s32.totalorder %s41, 0
      %p141 = por %p139, %p140
      %p142 = scmp.ne.s32.totalorder %s130, %s131
      %p143 = scmp.eq.s32.totalorder %s42, 1
      %p144 = por %p142, %p143
      %p146 = scmp.ne.s32.totalorder %s131, %s145
      %p147 = scmp.eq.s32.totalorder %s42, 0
      %p148 = por %p146, %p147
      %s150 = sadd.s32 %s149, 1
      %p153 = scmp.eq.s32.totalorder %s36, 1
      %p154 = scmp.ne.s32.totalorder %s149, %s151
      %p155 = scmp.eq.s32.totalorder %s36, 0
      %p156 = por %p154, %p155
      %p157 = scmp.ne.s32.totalorder %s149, %s151
      %p158 = scmp.eq.s32.totalorder %s41, 1
      %p159 = por %p157, %p158
      %p160 = scmp.ne.s32.totalorder %s151, %s152
      %p161 = scmp.eq.s32.totalorder %s41, 0
      %p162 = por %p160, %p161
      %p163 = scmp.ne.s32.totalorder %s151, %s152
      %p164 = scmp.eq.s32.totalorder %s42, 1
      %p165 = por %p163, %p164
      %p167 = scmp.ne.s32.totalorder %s152, %s166
      %p168 = scmp.eq.s32.totalorder %s42, 0
      %p169 = por %p167, %p168
      %s171 = sadd.s32 %s170, 1
      %p174 = scmp.eq.s32.totalorder %s36, 1
      %p175 = scmp.ne.s32.totalorder %s170, %s172
      %p176 = scmp.eq.s32.totalorder %s36, 0
      %p177 = por %p175, %p176
      %p178 = scmp.ne.s32.totalorder %s170, %s172
      %p179 = scmp.eq.s32.totalorder %s41, 1
      %p180 = por %p178, %p179
      %p181 = scmp.ne.s32.totalorder %s172, %s173
      %p182 = scmp.eq.s32.totalorder %s41, 0
      %p183 = por %p181, %p182
      %p184 = scmp.ne.s32.totalorder %s172, %s173
      %p185 = scmp.eq.s32.totalorder %s42, 1
      %p186 = por %p184, %p185
      %p188 = scmp.ne.s32.totalorder %s173, %s187
      %p189 = scmp.eq.s32.totalorder %s42, 0
      %p190 = por %p188, %p189
      %s192 = sadd.s32 %s191, 1
      %p195 = scmp.eq.s32.totalorder %s36, 1
      %p196 = scmp.ne.s32.totalorder %s191, %s193
      %p197 = scmp.eq.s32.totalorder %s36, 0
      %p198 = por %p196, %p197
      %p199 = scmp.ne.s32.totalorder %s191, %s193
      %p200 = scmp.eq.s32.totalorder %s41, 1
      %p201 = por %p199, %p200
      %p202 = scmp.ne.s32.totalorder %s193, %s194
      %p203 = scmp.eq.s32.totalorder %s41, 0
      %p204 = por %p202, %p203
      %p205 = scmp.ne.s32.totalorder %s193, %s194
      %p206 = scmp.eq.s32.totalorder %s42, 1
      %p207 = por %p205, %p206
      %p209 = scmp.ne.s32.totalorder %s194, %s208
      %p210 = scmp.eq.s32.totalorder %s42, 0
      %p211 = por %p209, %p210
      %s212 = ssub.s32 %s36, %s43
      %p213 = scmp.eq.s32.totalorder %s212, 0
      %s215 = sadd.s32 %s214, 1
      %s216 = scalar_select %p213, %s214, %s215
      %p219 = pneg %p213
      %p220 = scmp.eq.s32.totalorder %s36, 1
      %p221 = por %p219, %p220
      %p222 = scmp.ne.s32.totalorder %s214, %s217
      %p223 = scmp.eq.s32.totalorder %s36, 0
      %p224 = por %p222, %p223
      %p225 = scmp.ne.s32.totalorder %s214, %s217
      %p226 = scmp.eq.s32.totalorder %s41, 1
      %p227 = por %p225, %p226
      %p228 = scmp.ne.s32.totalorder %s217, %s218
      %p229 = scmp.eq.s32.totalorder %s41, 0
      %p230 = por %p228, %p229
      %p231 = scmp.ne.s32.totalorder %s217, %s218
      %p232 = scmp.eq.s32.totalorder %s42, 1
      %p233 = por %p231, %p232
      %p235 = scmp.ne.s32.totalorder %s218, %s234
      %p236 = scmp.eq.s32.totalorder %s42, 0
      %p237 = por %p235, %p236
      %s238 = ssub.s32 %s36, %s43
      %p239 = scmp.eq.s32.totalorder %s238, 0
      %s241 = sadd.s32 %s240, 1
      %s242 = scalar_select %p239, %s240, %s241
      %p245 = pneg %p239
      %p246 = scmp.eq.s32.totalorder %s36, 1
      %p247 = por %p245, %p246
      %p248 = scmp.ne.s32.totalorder %s240, %s243
      %p249 = scmp.eq.s32.totalorder %s36, 0
      %p250 = por %p248, %p249
      %p251 = scmp.ne.s32.totalorder %s240, %s243
      %p252 = scmp.eq.s32.totalorder %s41, 1
      %p253 = por %p251, %p252
      %p254 = scmp.ne.s32.totalorder %s243, %s244
      %p255 = scmp.eq.s32.totalorder %s41, 0
      %p256 = por %p254, %p255
      %p257 = scmp.ne.s32.totalorder %s243, %s244
      %p258 = scmp.eq.s32.totalorder %s42, 1
      %p259 = por %p257, %p258
      %p261 = scmp.ne.s32.totalorder %s244, %s260
      %p262 = scmp.eq.s32.totalorder %s42, 0
      %p263 = por %p261, %p262
      %s264 = ssub.s32 %s36, %s43
      %p265 = scmp.eq.s32.totalorder %s264, 0
      %s267 = sadd.s32 %s266, 1
      %s268 = scalar_select %p265, %s266, %s267
      %p271 = pneg %p265
      %p272 = scmp.eq.s32.totalorder %s36, 1
      %p273 = por %p271, %p272
      %p274 = scmp.ne.s32.totalorder %s266, %s269
      %p275 = scmp.eq.s32.totalorder %s36, 0
      %p276 = por %p274, %p275
      %p277 = scmp.ne.s32.totalorder %s266, %s269
      %p278 = scmp.eq.s32.totalorder %s41, 1
      %p279 = por %p277, %p278
      %p280 = scmp.ne.s32.totalorder %s269, %s270
      %p281 = scmp.eq.s32.totalorder %s41, 0
      %p282 = por %p280, %p281
      %p283 = scmp.ne.s32.totalorder %s269, %s270
      %p284 = scmp.eq.s32.totalorder %s42, 1
      %p285 = por %p283, %p284
      %p287 = scmp.ne.s32.totalorder %s270, %s286
      %p288 = scmp.eq.s32.totalorder %s42, 0
      %p289 = por %p287, %p288
      %s290 = ssub.s32 %s36, %s43
      %p291 = scmp.eq.s32.totalorder %s290, 0
      %s293 = sadd.s32 %s292, 1
      %s294 = scalar_select %p291, %s292, %s293
      %p297 = pneg %p291
      %p298 = scmp.eq.s32.totalorder %s36, 1
      %p299 = por %p297, %p298
      %p300 = scmp.ne.s32.totalorder %s292, %s295
      %p301 = scmp.eq.s32.totalorder %s36, 0
      %p302 = por %p300, %p301
      %p303 = scmp.ne.s32.totalorder %s292, %s295
      %p304 = scmp.eq.s32.totalorder %s41, 1
      %p305 = por %p303, %p304
      %p306 = scmp.ne.s32.totalorder %s295, %s296
      %p307 = scmp.eq.s32.totalorder %s41, 0
      %p308 = por %p306, %p307
      %p309 = scmp.ne.s32.totalorder %s295, %s296
      %p310 = scmp.eq.s32.totalorder %s42, 1
      %p311 = por %p309, %p310
      %p313 = scmp.ne.s32.totalorder %s296, %s312
      %p314 = scmp.eq.s32.totalorder %s42, 0
      %p315 = por %p313, %p314
      %s316 = ssub.s32 %s36, %s43
      %p317 = scmp.eq.s32.totalorder %s316, 0
      %s319 = sadd.s32 %s318, 1
      %s320 = scalar_select %p317, %s318, %s319
      %p323 = pneg %p317
      %p324 = scmp.eq.s32.totalorder %s36, 1
      %p325 = por %p323, %p324
      %p326 = scmp.ne.s32.totalorder %s318, %s321
      %p327 = scmp.eq.s32.totalorder %s36, 0
      %p328 = por %p326, %p327
      %p329 = scmp.ne.s32.totalorder %s318, %s321
      %p330 = scmp.eq.s32.totalorder %s41, 1
      %p331 = por %p329, %p330
      %p332 = scmp.ne.s32.totalorder %s321, %s322
      %p333 = scmp.eq.s32.totalorder %s41, 0
      %p334 = por %p332, %p333
      %p335 = scmp.ne.s32.totalorder %s321, %s322
      %p336 = scmp.eq.s32.totalorder %s42, 1
      %p337 = por %p335, %p336
      %p339 = scmp.ne.s32.totalorder %s322, %s338
      %p340 = scmp.eq.s32.totalorder %s42, 0
      %p341 = por %p339, %p340
      %s342 = ssub.s32 %s36, %s43
      %p343 = scmp.eq.s32.totalorder %s342, 0
      %s345 = sadd.s32 %s344, 1
      %s346 = scalar_select %p343, %s344, %s345
      %p349 = pneg %p343
      %p350 = scmp.eq.s32.totalorder %s36, 1
      %p351 = por %p349, %p350
      %p352 = scmp.ne.s32.totalorder %s344, %s347
      %p353 = scmp.eq.s32.totalorder %s36, 0
      %p354 = por %p352, %p353
      %p355 = scmp.ne.s32.totalorder %s344, %s347
      %p356 = scmp.eq.s32.totalorder %s41, 1
      %p357 = por %p355, %p356
      %p358 = scmp.ne.s32.totalorder %s347, %s348
      %p359 = scmp.eq.s32.totalorder %s41, 0
      %p360 = por %p358, %p359
      %p361 = scmp.ne.s32.totalorder %s347, %s348
      %p362 = scmp.eq.s32.totalorder %s42, 1
      %p363 = por %p361, %p362
      %p365 = scmp.ne.s32.totalorder %s348, %s364
      %p366 = scmp.eq.s32.totalorder %s42, 0
      %p367 = por %p365, %p366
      %s368 = ssub.s32 %s36, %s43
      %p369 = scmp.eq.s32.totalorder %s368, 0
      %s371 = sadd.s32 %s370, 1
      %s372 = scalar_select %p369, %s370, %s371
      %p375 = pneg %p369
      %p376 = scmp.eq.s32.totalorder %s36, 1
      %p377 = por %p375, %p376
      %p378 = scmp.ne.s32.totalorder %s370, %s373
      %p379 = scmp.eq.s32.totalorder %s36, 0
      %p380 = por %p378, %p379
      %p381 = scmp.ne.s32.totalorder %s370, %s373
      %p382 = scmp.eq.s32.totalorder %s41, 1
      %p383 = por %p381, %p382
      %p384 = scmp.ne.s32.totalorder %s373, %s374
      %p385 = scmp.eq.s32.totalorder %s41, 0
      %p386 = por %p384, %p385
      %p387 = scmp.ne.s32.totalorder %s373, %s374
      %p388 = scmp.eq.s32.totalorder %s42, 1
      %p389 = por %p387, %p388
      %p391 = scmp.ne.s32.totalorder %s374, %s390
      %p392 = scmp.eq.s32.totalorder %s42, 0
      %p393 = por %p391, %p392
      %s394 = ssub.s32 %s36, %s43
      %p395 = scmp.eq.s32.totalorder %s394, 0
      %s397 = sadd.s32 %s396, 1
      %s398 = scalar_select %p395, %s396, %s397
      %p401 = pneg %p395
      %p402 = scmp.eq.s32.totalorder %s36, 1
      %p403 = por %p401, %p402
      %p404 = scmp.ne.s32.totalorder %s396, %s399
      %p405 = scmp.eq.s32.totalorder %s36, 0
      %p406 = por %p404, %p405
      %p407 = scmp.ne.s32.totalorder %s396, %s399
      %p408 = scmp.eq.s32.totalorder %s41, 1
      %p409 = por %p407, %p408
      %p410 = scmp.ne.s32.totalorder %s399, %s400
      %p411 = scmp.eq.s32.totalorder %s41, 0
      %p412 = por %p410, %p411
      %p413 = scmp.ne.s32.totalorder %s399, %s400
      %p414 = scmp.eq.s32.totalorder %s42, 1
      %p415 = por %p413, %p414
      %p417 = scmp.ne.s32.totalorder %s400, %s416
      %p418 = scmp.eq.s32.totalorder %s42, 0
      %p419 = por %p417, %p418
      %s420 = ssub.s32 %s36, %s43
      %p421 = scmp.eq.s32.totalorder %s420, 0
      %s423 = sadd.s32 %s422, 1
      %s424 = scalar_select %p421, %s422, %s423
      %p427 = pneg %p421
      %p428 = scmp.eq.s32.totalorder %s36, 1
      %p429 = por %p427, %p428
      %p430 = scmp.ne.s32.totalorder %s422, %s425
      %p431 = scmp.eq.s32.totalorder %s36, 0
      %p432 = por %p430, %p431
      %p433 = scmp.ne.s32.totalorder %s422, %s425
      %p434 = scmp.eq.s32.totalorder %s41, 1
      %p435 = por %p433, %p434
      %p436 = scmp.ne.s32.totalorder %s425, %s426
      %p437 = scmp.eq.s32.totalorder %s41, 0
      %p438 = por %p436, %p437
      %p439 = scmp.ne.s32.totalorder %s425, %s426
      %p440 = scmp.eq.s32.totalorder %s42, 1
      %p441 = por %p439, %p440
      %p443 = scmp.ne.s32.totalorder %s426, %s442
      %p444 = scmp.eq.s32.totalorder %s42, 0
      %p445 = por %p443, %p444
      %s446 = ssub.s32 %s36, %s43
      %p447 = scmp.eq.s32.totalorder %s446, 0
      %s449 = sadd.s32 %s448, 1
      %s450 = scalar_select %p447, %s448, %s449
      %p453 = pneg %p447
      %p454 = scmp.eq.s32.totalorder %s36, 1
      %p455 = por %p453, %p454
      %p456 = scmp.ne.s32.totalorder %s448, %s451
      %p457 = scmp.eq.s32.totalorder %s36, 0
      %p458 = por %p456, %p457
      %p459 = scmp.ne.s32.totalorder %s448, %s451
      %p460 = scmp.eq.s32.totalorder %s41, 1
      %p461 = por %p459, %p460
      %p462 = scmp.ne.s32.totalorder %s451, %s452
      %p463 = scmp.eq.s32.totalorder %s41, 0
      %p464 = por %p462, %p463
      %p465 = scmp.ne.s32.totalorder %s451, %s452
      %p466 = scmp.eq.s32.totalorder %s42, 1
      %p467 = por %p465, %p466
      %p469 = scmp.ne.s32.totalorder %s452, %s468
      %p470 = scmp.eq.s32.totalorder %s42, 0
      %p471 = por %p469, %p470
      %s472 = ssub.s32 %s36, %s43
      %p473 = scmp.eq.s32.totalorder %s472, 0
      %s475 = sadd.s32 %s474, 1
      %s476 = scalar_select %p473, %s474, %s475
      %p479 = pneg %p473
      %p480 = scmp.eq.s32.totalorder %s36, 1
      %p481 = por %p479, %p480
      %p482 = scmp.ne.s32.totalorder %s474, %s477
      %p483 = scmp.eq.s32.totalorder %s36, 0
      %p484 = por %p482, %p483
      %p485 = scmp.ne.s32.totalorder %s474, %s477
      %p486 = scmp.eq.s32.totalorder %s41, 1
      %p487 = por %p485, %p486
      %p488 = scmp.ne.s32.totalorder %s477, %s478
      %p489 = scmp.eq.s32.totalorder %s41, 0
      %p490 = por %p488, %p489
      %p491 = scmp.ne.s32.totalorder %s477, %s478
      %p492 = scmp.eq.s32.totalorder %s42, 1
      %p493 = por %p491, %p492
      %p495 = scmp.ne.s32.totalorder %s478, %s494
      %p496 = scmp.eq.s32.totalorder %s42, 0
      %p497 = por %p495, %p496
      %s498 = ssub.s32 %s36, %s43
      %p499 = scmp.eq.s32.totalorder %s498, 0
      %s501 = sadd.s32 %s500, 1
      %s502 = scalar_select %p499, %s500, %s501
      %p505 = pneg %p499
      %p506 = scmp.eq.s32.totalorder %s36, 1
      %p507 = por %p505, %p506
      %p508 = scmp.ne.s32.totalorder %s500, %s503
      %p509 = scmp.eq.s32.totalorder %s36, 0
      %p510 = por %p508, %p509
      %p511 = scmp.ne.s32.totalorder %s500, %s503
      %p512 = scmp.eq.s32.totalorder %s41, 1
      %p513 = por %p511, %p512
      %p514 = scmp.ne.s32.totalorder %s503, %s504
      %p515 = scmp.eq.s32.totalorder %s41, 0
      %p516 = por %p514, %p515
      %p517 = scmp.ne.s32.totalorder %s503, %s504
      %p518 = scmp.eq.s32.totalorder %s42, 1
      %p519 = por %p517, %p518
      %p521 = scmp.ne.s32.totalorder %s504, %s520
      %p522 = scmp.eq.s32.totalorder %s42, 0
      %p523 = por %p521, %p522
      %s525 = sadd.s32 %s524, 1
      %p528 = scmp.eq.s32.totalorder %s36, 1
      %p529 = scmp.ne.s32.totalorder %s524, %s526
      %p530 = scmp.eq.s32.totalorder %s36, 0
      %p531 = por %p529, %p530
      %p532 = scmp.ne.s32.totalorder %s524, %s526
      %p533 = scmp.eq.s32.totalorder %s41, 1
      %p534 = por %p532, %p533
      %p535 = scmp.ne.s32.totalorder %s526, %s527
      %p536 = scmp.eq.s32.totalorder %s41, 0
      %p537 = por %p535, %p536
      %p538 = scmp.ne.s32.totalorder %s526, %s527
      %p539 = scmp.eq.s32.totalorder %s42, 1
      %p540 = por %p538, %p539
      %p542 = scmp.ne.s32.totalorder %s527, %s541
      %p543 = scmp.eq.s32.totalorder %s42, 0
      %p544 = por %p542, %p543
      %s546 = sadd.s32 %s545, 1
      %p549 = scmp.eq.s32.totalorder %s36, 1
      %p550 = scmp.ne.s32.totalorder %s545, %s547
      %p551 = scmp.eq.s32.totalorder %s36, 0
      %p552 = por %p550, %p551
      %p553 = scmp.ne.s32.totalorder %s545, %s547
      %p554 = scmp.eq.s32.totalorder %s41, 1
      %p555 = por %p553, %p554
      %p556 = scmp.ne.s32.totalorder %s547, %s548
      %p557 = scmp.eq.s32.totalorder %s41, 0
      %p558 = por %p556, %p557
      %p559 = scmp.ne.s32.totalorder %s547, %s548
      %p560 = scmp.eq.s32.totalorder %s42, 1
      %p561 = por %p559, %p560
      %p563 = scmp.ne.s32.totalorder %s548, %s562
      %p564 = scmp.eq.s32.totalorder %s42, 0
      %p565 = por %p563, %p564
      %s567 = sadd.s32 %s566, 1
      %p570 = scmp.eq.s32.totalorder %s36, 1
      %p571 = scmp.ne.s32.totalorder %s566, %s568
      %p572 = scmp.eq.s32.totalorder %s36, 0
      %p573 = por %p571, %p572
      %p574 = scmp.ne.s32.totalorder %s566, %s568
      %p575 = scmp.eq.s32.totalorder %s41, 1
      %p576 = por %p574, %p575
      %p577 = scmp.ne.s32.totalorder %s568, %s569
      %p578 = scmp.eq.s32.totalorder %s41, 0
      %p579 = por %p577, %p578
      %p580 = scmp.ne.s32.totalorder %s568, %s569
      %p581 = scmp.eq.s32.totalorder %s42, 1
      %p582 = por %p580, %p581
      %p584 = scmp.ne.s32.totalorder %s569, %s583
      %p585 = scmp.eq.s32.totalorder %s42, 0
      %p586 = por %p584, %p585
      %s588 = sadd.s32 %s587, 1
      %p591 = scmp.eq.s32.totalorder %s36, 1
      %p592 = scmp.ne.s32.totalorder %s587, %s589
      %p593 = scmp.eq.s32.totalorder %s36, 0
      %p594 = por %p592, %p593
      %p595 = scmp.ne.s32.totalorder %s587, %s589
      %p596 = scmp.eq.s32.totalorder %s41, 1
      %p597 = por %p595, %p596
      %p598 = scmp.ne.s32.totalorder %s589, %s590
      %p599 = scmp.eq.s32.totalorder %s41, 0
      %p600 = por %p598, %p599
      %p601 = scmp.ne.s32.totalorder %s589, %s590
      %p602 = scmp.eq.s32.totalorder %s42, 1
      %p603 = por %p601, %p602
      %p605 = scmp.ne.s32.totalorder %s590, %s604
      %p606 = scmp.eq.s32.totalorder %s42, 0
      %p607 = por %p605, %p606
      %s609 = sadd.s32 %s608, 1
      %p612 = scmp.eq.s32.totalorder %s36, 1
      %p613 = scmp.ne.s32.totalorder %s608, %s610
      %p614 = scmp.eq.s32.totalorder %s36, 0
      %p615 = por %p613, %p614
      %p616 = scmp.ne.s32.totalorder %s608, %s610
      %p617 = scmp.eq.s32.totalorder %s41, 1
      %p618 = por %p616, %p617
      %p619 = scmp.ne.s32.totalorder %s610, %s611
      %p620 = scmp.eq.s32.totalorder %s41, 0
      %p621 = por %p619, %p620
      %p622 = scmp.ne.s32.totalorder %s610, %s611
      %p623 = scmp.eq.s32.totalorder %s42, 1
      %p624 = por %p622, %p623
      %p626 = scmp.ne.s32.totalorder %s611, %s625
      %p627 = scmp.eq.s32.totalorder %s42, 0
      %p628 = por %p626, %p627
      %s630 = sadd.s32 %s629, 1
      %p633 = scmp.eq.s32.totalorder %s36, 1
      %p634 = scmp.ne.s32.totalorder %s629, %s631
      %p635 = scmp.eq.s32.totalorder %s36, 0
      %p636 = por %p634, %p635
      %p637 = scmp.ne.s32.totalorder %s629, %s631
      %p638 = scmp.eq.s32.totalorder %s41, 1
      %p639 = por %p637, %p638
      %p640 = scmp.ne.s32.totalorder %s631, %s632
      %p641 = scmp.eq.s32.totalorder %s41, 0
      %p642 = por %p640, %p641
      %p643 = scmp.ne.s32.totalorder %s631, %s632
      %p644 = scmp.eq.s32.totalorder %s42, 1
      %p645 = por %p643, %p644
      %p647 = scmp.ne.s32.totalorder %s632, %s646
      %p648 = scmp.eq.s32.totalorder %s42, 0
      %p649 = por %p647, %p648
      %s651 = sadd.s32 %s650, 1
      %p654 = scmp.eq.s32.totalorder %s36, 1
      %p655 = scmp.ne.s32.totalorder %s650, %s652
      %p656 = scmp.eq.s32.totalorder %s36, 0
      %p657 = por %p655, %p656
      %p658 = scmp.ne.s32.totalorder %s650, %s652
      %p659 = scmp.eq.s32.totalorder %s41, 1
      %p660 = por %p658, %p659
      %p661 = scmp.ne.s32.totalorder %s652, %s653
      %p662 = scmp.eq.s32.totalorder %s41, 0
      %p663 = por %p661, %p662
      %p664 = scmp.ne.s32.totalorder %s652, %s653
      %p665 = scmp.eq.s32.totalorder %s42, 1
      %p666 = por %p664, %p665
      %p668 = scmp.ne.s32.totalorder %s653, %s667
      %p669 = scmp.eq.s32.totalorder %s42, 0
      %p670 = por %p668, %p669
      %s672 = sadd.s32 %s671, 1
      %p675 = scmp.eq.s32.totalorder %s36, 1
      %p676 = scmp.ne.s32.totalorder %s671, %s673
      %p677 = scmp.eq.s32.totalorder %s36, 0
      %p678 = por %p676, %p677
      %p679 = scmp.ne.s32.totalorder %s671, %s673
      %p680 = scmp.eq.s32.totalorder %s41, 1
      %p681 = por %p679, %p680
      %p682 = scmp.ne.s32.totalorder %s673, %s674
      %p683 = scmp.eq.s32.totalorder %s41, 0
      %p684 = por %p682, %p683
      %p685 = scmp.ne.s32.totalorder %s673, %s674
      %p686 = scmp.eq.s32.totalorder %s42, 1
      %p687 = por %p685, %p686
      %p689 = scmp.ne.s32.totalorder %s674, %s688
      %p690 = scmp.eq.s32.totalorder %s42, 0
      %p691 = por %p689, %p690
      %p692 = scmp.le.s32.totalorder 1, %s36
      %p693 = scmp.lt.s32.totalorder %s36, 3
      %p694 = pnand %p692, %p693
      %p695 = pneg %p694
      // Predicated region
      $region9: #{_lambda_.1} parent=5 // pred_check
        _
      $region10: #{_lambda_.1} parent=5 // pred_check_branch
        %697 = sbr.rel (%p694) target = $region12
      $region11: #{_lambda_.1} parent=5 // pred_region
        %s698 = ssub.s32 %s36, 1
        // Predicated region
        $region13: #{_lambda_.1} parent=11 // pred_check
          %p699 = pneg %p57
        $region14: #{_lambda_.1} parent=11 // pred_check_branch
          %701 = sbr.rel (%p699) target = $region16
        $region15: #{_lambda_.1} parent=11 // pred_region
          _
        $region16: #{_lambda_.1} parent=11 // pred_fallthru
          _
        // Predicated region
        $region17: #{_lambda_.1} parent=11 // pred_check
          %p702 = pneg %p78
        $region18: #{_lambda_.1} parent=11 // pred_check_branch
          %704 = sbr.rel (%p702) target = $region20
        $region19: #{_lambda_.1} parent=11 // pred_region
          _
        $region20: #{_lambda_.1} parent=11 // pred_fallthru
          _
        // Predicated region
        $region21: #{_lambda_.1} parent=11 // pred_check
          %p705 = pneg %p99
        $region22: #{_lambda_.1} parent=11 // pred_check_branch
          %707 = sbr.rel (%p705) target = $region24
        $region23: #{_lambda_.1} parent=11 // pred_region
          _
        $region24: #{_lambda_.1} parent=11 // pred_fallthru
          _
        // Predicated region
        $region25: #{_lambda_.1} parent=11 // pred_check
          %p708 = pneg %p120
        $region26: #{_lambda_.1} parent=11 // pred_check_branch
          %710 = sbr.rel (%p708) target = $region28
        $region27: #{_lambda_.1} parent=11 // pred_region
          _
        $region28: #{_lambda_.1} parent=11 // pred_fallthru
          _
        // Predicated region
        $region29: #{_lambda_.1} parent=11 // pred_check
          %p711 = pneg %p141
        $region30: #{_lambda_.1} parent=11 // pred_check_branch
          %713 = sbr.rel (%p711) target = $region32
        $region31: #{_lambda_.1} parent=11 // pred_region
          _
        $region32: #{_lambda_.1} parent=11 // pred_fallthru
          _
        // Predicated region
        $region33: #{_lambda_.1} parent=11 // pred_check
          %p714 = pneg %p162
        $region34: #{_lambda_.1} parent=11 // pred_check_branch
          %716 = sbr.rel (%p714) target = $region36
        $region35: #{_lambda_.1} parent=11 // pred_region
          _
        $region36: #{_lambda_.1} parent=11 // pred_fallthru
          _
        // Predicated region
        $region37: #{_lambda_.1} parent=11 // pred_check
          %p717 = pneg %p183
        $region38: #{_lambda_.1} parent=11 // pred_check_branch
          %719 = sbr.rel (%p717) target = $region40
        $region39: #{_lambda_.1} parent=11 // pred_region
          _
        $region40: #{_lambda_.1} parent=11 // pred_fallthru
          _
        // Predicated region
        $region41: #{_lambda_.1} parent=11 // pred_check
          %p720 = pneg %p204
        $region42: #{_lambda_.1} parent=11 // pred_check_branch
          %722 = sbr.rel (%p720) target = $region44
        $region43: #{_lambda_.1} parent=11 // pred_region
          _
        $region44: #{_lambda_.1} parent=11 // pred_fallthru
          _
        // Predicated region
        $region45: #{_lambda_.1} parent=11 // pred_check
          %p723 = pneg %p537
        $region46: #{_lambda_.1} parent=11 // pred_check_branch
          %725 = sbr.rel (%p723) target = $region48
        $region47: #{_lambda_.1} parent=11 // pred_region
          _
        $region48: #{_lambda_.1} parent=11 // pred_fallthru
          _
        // Predicated region
        $region49: #{_lambda_.1} parent=11 // pred_check
          %p726 = pneg %p558
        $region50: #{_lambda_.1} parent=11 // pred_check_branch
          %728 = sbr.rel (%p726) target = $region52
        $region51: #{_lambda_.1} parent=11 // pred_region
          _
        $region52: #{_lambda_.1} parent=11 // pred_fallthru
          _
        // Predicated region
        $region53: #{_lambda_.1} parent=11 // pred_check
          %p729 = pneg %p579
        $region54: #{_lambda_.1} parent=11 // pred_check_branch
          %731 = sbr.rel (%p729) target = $region56
        $region55: #{_lambda_.1} parent=11 // pred_region
          _
        $region56: #{_lambda_.1} parent=11 // pred_fallthru
          _
        // Predicated region
        $region57: #{_lambda_.1} parent=11 // pred_check
          %p732 = pneg %p600
        $region58: #{_lambda_.1} parent=11 // pred_check_branch
          %734 = sbr.rel (%p732) target = $region60
        $region59: #{_lambda_.1} parent=11 // pred_region
          _
        $region60: #{_lambda_.1} parent=11 // pred_fallthru
          _
        // Predicated region
        $region61: #{_lambda_.1} parent=11 // pred_check
          %p735 = pneg %p621
        $region62: #{_lambda_.1} parent=11 // pred_check_branch
          %737 = sbr.rel (%p735) target = $region64
        $region63: #{_lambda_.1} parent=11 // pred_region
          _
        $region64: #{_lambda_.1} parent=11 // pred_fallthru
          _
        // Predicated region
        $region65: #{_lambda_.1} parent=11 // pred_check
          %p738 = pneg %p642
        $region66: #{_lambda_.1} parent=11 // pred_check_branch
          %740 = sbr.rel (%p738) target = $region68
        $region67: #{_lambda_.1} parent=11 // pred_region
          _
        $region68: #{_lambda_.1} parent=11 // pred_fallthru
          _
      $region12: #{_lambda_.1} parent=5 // pred_fallthru
        _
      %p741 = scmp.lt.s32.totalorder %s36, 2
      // Predicated region
      $region69: #{_lambda_.1} parent=5 // pred_check
        %p742 = pneg %p741
      $region70: #{_lambda_.1} parent=5 // pred_check_branch
        %744 = sbr.rel (%p742) target = $region72
      $region71: #{_lambda_.1} parent=5 // pred_region
        // Predicated region
        $region73: #{_lambda_.1} parent=71 // pred_check
          %p745 = pneg %p224
        $region74: #{_lambda_.1} parent=71 // pred_check_branch
          %747 = sbr.rel (%p745) target = $region76
        $region75: #{_lambda_.1} parent=71 // pred_region
          %p748 = scmp.lt.s32.totalorder %s36, 1
          %s749 = scalar_select %p748, %s36, 1
          %s750 = scalar_lea.vmem %s8, %s749
        $region76: #{_lambda_.1} parent=71 // pred_fallthru
          _
        // Predicated region
        $region77: #{_lambda_.1} parent=71 // pred_check
          %p751 = pneg %p250
        $region78: #{_lambda_.1} parent=71 // pred_check_branch
          %753 = sbr.rel (%p751) target = $region80
        $region79: #{_lambda_.1} parent=71 // pred_region
          %p754 = scmp.lt.s32.totalorder %s36, 1
          %s755 = scalar_select %p754, %s36, 1
          %s756 = scalar_lea.vmem %s9, %s755
        $region80: #{_lambda_.1} parent=71 // pred_fallthru
          _
        // Predicated region
        $region81: #{_lambda_.1} parent=71 // pred_check
          %p757 = pneg %p276
        $region82: #{_lambda_.1} parent=71 // pred_check_branch
          %759 = sbr.rel (%p757) target = $region84
        $region83: #{_lambda_.1} parent=71 // pred_region
          %p760 = scmp.lt.s32.totalorder %s36, 1
          %s761 = scalar_select %p760, %s36, 1
          %s762 = smul.addr %s761, 4
          %s763 = smul.addr %s762, 4
          %s764 = scalar_lea.vmem %s10, %s763
        $region84: #{_lambda_.1} parent=71 // pred_fallthru
          _
        // Predicated region
        $region85: #{_lambda_.1} parent=71 // pred_check
          %p765 = pneg %p302
        $region86: #{_lambda_.1} parent=71 // pred_check_branch
          %767 = sbr.rel (%p765) target = $region88
        $region87: #{_lambda_.1} parent=71 // pred_region
          %p768 = scmp.lt.s32.totalorder %s36, 1
          %s769 = scalar_select %p768, %s36, 1
          %s770 = scalar_lea.vmem %s11, %s769
        $region88: #{_lambda_.1} parent=71 // pred_fallthru
          _
        // Predicated region
        $region89: #{_lambda_.1} parent=71 // pred_check
          %p771 = pneg %p328
        $region90: #{_lambda_.1} parent=71 // pred_check_branch
          %773 = sbr.rel (%p771) target = $region92
        $region91: #{_lambda_.1} parent=71 // pred_region
          %p774 = scmp.lt.s32.totalorder %s36, 1
          %s775 = scalar_select %p774, %s36, 1
          %s776 = smul.addr %s775, 4
          %s777 = smul.addr %s776, 4
          %s778 = scalar_lea.vmem %s12, %s777
        $region92: #{_lambda_.1} parent=71 // pred_fallthru
          _
        // Predicated region
        $region93: #{_lambda_.1} parent=71 // pred_check
          %p779 = pneg %p354
        $region94: #{_lambda_.1} parent=71 // pred_check_branch
          %781 = sbr.rel (%p779) target = $region96
        $region95: #{_lambda_.1} parent=71 // pred_region
          %p782 = scmp.lt.s32.totalorder %s36, 1
          %s783 = scalar_select %p782, %s36, 1
          %s784 = scalar_lea.vmem %s13, %s783
        $region96: #{_lambda_.1} parent=71 // pred_fallthru
          _
        // Predicated region
        $region97: #{_lambda_.1} parent=71 // pred_check
          %p785 = pneg %p380
        $region98: #{_lambda_.1} parent=71 // pred_check_branch
          %787 = sbr.rel (%p785) target = $region100
        $region99: #{_lambda_.1} parent=71 // pred_region
          %p788 = scmp.lt.s32.totalorder %s36, 1
          %s789 = scalar_select %p788, %s36, 1
          %s790 = scalar_lea.vmem %s14, %s789
        $region100: #{_lambda_.1} parent=71 // pred_fallthru
          _
        // Predicated region
        $region101: #{_lambda_.1} parent=71 // pred_check
          %p791 = pneg %p406
        $region102: #{_lambda_.1} parent=71 // pred_check_branch
          %793 = sbr.rel (%p791) target = $region104
        $region103: #{_lambda_.1} parent=71 // pred_region
          %p794 = scmp.lt.s32.totalorder %s36, 1
          %s795 = scalar_select %p794, %s36, 1
          %s796 = scalar_lea.vmem %s15, %s795
        $region104: #{_lambda_.1} parent=71 // pred_fallthru
          _
        // Predicated region
        $region105: #{_lambda_.1} parent=71 // pred_check
          %p797 = pneg %p432
        $region106: #{_lambda_.1} parent=71 // pred_check_branch
          %799 = sbr.rel (%p797) target = $region108
        $region107: #{_lambda_.1} parent=71 // pred_region
          %p800 = scmp.lt.s32.totalorder %s36, 1
          %s801 = scalar_select %p800, %s36, 1
          %s802 = smul.addr %s801, 4
          %s803 = smul.addr %s802, 4
          %s804 = scalar_lea.vmem %s16, %s803
        $region108: #{_lambda_.1} parent=71 // pred_fallthru
          _
        // Predicated region
        $region109: #{_lambda_.1} parent=71 // pred_check
          %p805 = pneg %p458
        $region110: #{_lambda_.1} parent=71 // pred_check_branch
          %807 = sbr.rel (%p805) target = $region112
        $region111: #{_lambda_.1} parent=71 // pred_region
          %p808 = scmp.lt.s32.totalorder %s36, 1
          %s809 = scalar_select %p808, %s36, 1
          %s810 = scalar_lea.vmem %s17, %s809
        $region112: #{_lambda_.1} parent=71 // pred_fallthru
          _
        // Predicated region
        $region113: #{_lambda_.1} parent=71 // pred_check
          %p811 = pneg %p484
        $region114: #{_lambda_.1} parent=71 // pred_check_branch
          %813 = sbr.rel (%p811) target = $region116
        $region115: #{_lambda_.1} parent=71 // pred_region
          %p814 = scmp.lt.s32.totalorder %s36, 1
          %s815 = scalar_select %p814, %s36, 1
          %s816 = smul.addr %s815, 8
          %s817 = smul.addr %s816, 4
          %s818 = scalar_lea.vmem %s18, %s817
        $region116: #{_lambda_.1} parent=71 // pred_fallthru
          _
        // Predicated region
        $region117: #{_lambda_.1} parent=71 // pred_check
          %p819 = pneg %p510
        $region118: #{_lambda_.1} parent=71 // pred_check_branch
          %821 = sbr.rel (%p819) target = $region120
        $region119: #{_lambda_.1} parent=71 // pred_region
          %p822 = scmp.lt.s32.totalorder %s36, 1
          %s823 = scalar_select %p822, %s36, 1
          %s824 = scalar_lea.vmem %s19, %s823
        $region120: #{_lambda_.1} parent=71 // pred_fallthru
          _
      $region72: #{_lambda_.1} parent=5 // pred_fallthru
        _
      %p825 = scmp.le.s32.totalorder 1, %s36
      %p826 = scmp.lt.s32.totalorder %s36, 3
      %p827 = pnand %p825, %p826
      %p828 = pneg %p827
      // Predicated region
      $region121: #{_lambda_.1} parent=5 // pred_check
        _
      $region122: #{_lambda_.1} parent=5 // pred_check_branch
        %830 = sbr.rel (%p827) target = $region124
      $region123: #{_lambda_.1} parent=5 // pred_region
        %s831 = ssub.s32 %s36, 1
        %p832 = pneg %p57
        %p833 = pneg %p54
        %p834 = pneg %p78
        %p835 = pneg %p75
        %p836 = pneg %p99
        %p837 = pneg %p96
        %p838 = pneg %p120
        %p839 = pneg %p117
        %p840 = pneg %p141
        %p841 = pneg %p138
        %p842 = pneg %p162
        %p843 = pneg %p159
        %p844 = pneg %p183
        %p845 = pneg %p180
        %p846 = pneg %p204
        %p847 = pneg %p201
        %p848 = scmp.lt.s32.totalorder %s41, 1
        %s849 = scalar_select %p848, %s41, 1
        %s850 = scalar_lea.vmem %s8, %s849
        %p851 = pneg %p230
        %p852 = pneg %p227
        %p853 = scmp.lt.s32.totalorder %s41, 1
        %s854 = scalar_select %p853, %s41, 1
        %s855 = scalar_lea.vmem %s9, %s854
        %p856 = pneg %p256
        %p857 = pneg %p253
        %p858 = scmp.lt.s32.totalorder %s41, 1
        %s859 = scalar_select %p858, %s41, 1
        %s860 = smul.addr %s859, 4
        %s861 = smul.addr %s860, 4
        %s862 = scalar_lea.vmem %s10, %s861
        %p863 = pneg %p282
        %p864 = pneg %p279
        %p865 = scmp.lt.s32.totalorder %s41, 1
        %s866 = scalar_select %p865, %s41, 1
        %s867 = scalar_lea.vmem %s11, %s866
        %p868 = pneg %p308
        %p869 = pneg %p305
        %p870 = scmp.lt.s32.totalorder %s41, 1
        %s871 = scalar_select %p870, %s41, 1
        %s872 = smul.addr %s871, 4
        %s873 = smul.addr %s872, 4
        %s874 = scalar_lea.vmem %s12, %s873
        %p875 = pneg %p334
        %p876 = pneg %p331
        %p877 = scmp.lt.s32.totalorder %s41, 1
        %s878 = scalar_select %p877, %s41, 1
        %s879 = scalar_lea.vmem %s13, %s878
        %p880 = pneg %p360
        %p881 = pneg %p357
        %p882 = scmp.lt.s32.totalorder %s41, 1
        %s883 = scalar_select %p882, %s41, 1
        %s884 = scalar_lea.vmem %s14, %s883
        %p885 = pneg %p386
        %p886 = pneg %p383
        %p887 = scmp.lt.s32.totalorder %s41, 1
        %s888 = scalar_select %p887, %s41, 1
        %s889 = scalar_lea.vmem %s15, %s888
        %p890 = pneg %p412
        %p891 = pneg %p409
        %p892 = scmp.lt.s32.totalorder %s41, 1
        %s893 = scalar_select %p892, %s41, 1
        %s894 = smul.addr %s893, 4
        %s895 = smul.addr %s894, 4
        %s896 = scalar_lea.vmem %s16, %s895
        %p897 = pneg %p438
        %p898 = pneg %p435
        %p899 = scmp.lt.s32.totalorder %s41, 1
        %s900 = scalar_select %p899, %s41, 1
        %s901 = scalar_lea.vmem %s17, %s900
        %p902 = pneg %p464
        %p903 = pneg %p461
        %p904 = scmp.lt.s32.totalorder %s41, 1
        %s905 = scalar_select %p904, %s41, 1
        %s906 = smul.addr %s905, 8
        %s907 = smul.addr %s906, 4
        %s908 = scalar_lea.vmem %s18, %s907
        %p909 = pneg %p490
        %p910 = pneg %p487
        %p911 = scmp.lt.s32.totalorder %s41, 1
        %s912 = scalar_select %p911, %s41, 1
        %s913 = scalar_lea.vmem %s19, %s912
        %p914 = pneg %p516
        %p915 = pneg %p513
        %p916 = pneg %p537
        %p917 = pneg %p534
        %p918 = pneg %p558
        %p919 = pneg %p555
        %p920 = pneg %p579
        %p921 = pneg %p576
        %p922 = pneg %p600
        %p923 = pneg %p597
        %p924 = pneg %p621
        %p925 = pneg %p618
        %p926 = pneg %p642
        %p927 = pneg %p639
        %p928 = pneg %p663
        %p929 = pneg %p660
        %p930 = pneg %p684
        %p931 = pneg %p681
        %p932 = scmp.lt.s32.totalorder %s41, 1
        %s933 = scalar_select %p932, %s41, 1
        %s934 = scalar_lea.vmem %s8, %s933
        %p935 = scmp.lt.s32.totalorder %s41, 1
        %s936 = scalar_select %p935, %s41, 1
        %s937 = scalar_lea.vmem %s9, %s936
        %p938 = scmp.lt.s32.totalorder %s41, 1
        %s939 = scalar_select %p938, %s41, 1
        %s940 = smul.addr %s939, 4
        %s941 = smul.addr %s940, 4
        %s942 = scalar_lea.vmem %s10, %s941
        %p943 = scmp.lt.s32.totalorder %s41, 1
        %s944 = scalar_select %p943, %s41, 1
        %s945 = scalar_lea.vmem %s11, %s944
        %p946 = scmp.lt.s32.totalorder %s41, 1
        %s947 = scalar_select %p946, %s41, 1
        %s948 = smul.addr %s947, 4
        %s949 = smul.addr %s948, 4
        %s950 = scalar_lea.vmem %s12, %s949
        %p951 = scmp.lt.s32.totalorder %s41, 1
        %s952 = scalar_select %p951, %s41, 1
        %s953 = scalar_lea.vmem %s13, %s952
        %p954 = scmp.lt.s32.totalorder %s41, 1
        %s955 = scalar_select %p954, %s41, 1
        %s956 = scalar_lea.vmem %s14, %s955
        %p957 = scmp.lt.s32.totalorder %s41, 1
        %s958 = scalar_select %p957, %s41, 1
        %s959 = scalar_lea.vmem %s15, %s958
        %p960 = scmp.lt.s32.totalorder %s41, 1
        %s961 = scalar_select %p960, %s41, 1
        %s962 = smul.addr %s961, 4
        %s963 = smul.addr %s962, 4
        %s964 = scalar_lea.vmem %s16, %s963
        %p965 = scmp.lt.s32.totalorder %s41, 1
        %s966 = scalar_select %p965, %s41, 1
        %s967 = scalar_lea.vmem %s17, %s966
        %p968 = scmp.lt.s32.totalorder %s41, 1
        %s969 = scalar_select %p968, %s41, 1
        %s970 = smul.addr %s969, 8
        %s971 = smul.addr %s970, 4
        %s972 = scalar_lea.vmem %s18, %s971
        %p973 = scmp.lt.s32.totalorder %s41, 1
        %s974 = scalar_select %p973, %s41, 1
        %s975 = scalar_lea.vmem %s19, %s974
        %p977 = scmp.eq.s32.totalorder %s41, 0
        // Predicated region
        $region125: #{_lambda_.1} parent=123 // pred_check
          %p978 = pneg %p977
        $region126: #{_lambda_.1} parent=123 // pred_check_branch
          %980 = sbr.rel (%p978) target = $region128
        $region127: #{_lambda_.1} parent=123 // pred_region
          %v981 = vld [vmem:[%s0] sm:$0xff]
          %v982 = vld [vmem:[%s0 + $0x8] sm:$0xff]
          %v983 = vld [vmem:[%s0 + $0x10] sm:$0xff]
          %v984 = vld [vmem:[%s0 + $0x18] sm:$0xff]
          %v985 = vld [vmem:[%s0 + $0x20] sm:$0xff]
          %v986 = vld [vmem:[%s0 + $0x28] sm:$0xff]
          %v987 = vld [vmem:[%s0 + $0x30] sm:$0xff]
          %v988 = vld [vmem:[%s0 + $0x38] sm:$0xff]
          %v989 = vld [vmem:[%s0 + $0x40] sm:$0xff]
          %v990 = vld [vmem:[%s0 + $0x48] sm:$0xff]
          %v991 = vld [vmem:[%s0 + $0x50] sm:$0xff]
          %v992 = vld [vmem:[%s0 + $0x58] sm:$0xff]
          %v993 = vld [vmem:[%s0 + $0x60] sm:$0xff]
          %v994 = vld [vmem:[%s0 + $0x68] sm:$0xff]
          %v995 = vld [vmem:[%s0 + $0x70] sm:$0xff]
          %v996 = vld [vmem:[%s0 + $0x78] sm:$0xff]
          %v997 = vld [vmem:[%s0 + $0x80] sm:$0xff]
          %v998 = vld [vmem:[%s0 + $0x88] sm:$0xff]
          %v999 = vld [vmem:[%s0 + $0x90] sm:$0xff]
          %v1000 = vld [vmem:[%s0 + $0x98] sm:$0xff]
          %v1001 = vld [vmem:[%s1] sm:$0xff]
          %v1002 = vld [vmem:[%s1 + $0x8] sm:$0xff]
          %v1003 = vld [vmem:[%s1 + $0x10] sm:$0xff]
          %v1004 = vld [vmem:[%s1 + $0x18] sm:$0xff]
          %v1005 = vld [vmem:[%s1 + $0x20] sm:$0xff]
          %v1006 = vld [vmem:[%s1 + $0x28] sm:$0xff]
          %v1007 = vld [vmem:[%s1 + $0x30] sm:$0xff]
          %v1008 = vld [vmem:[%s1 + $0x38] sm:$0xff]
          %v1009 = vld [vmem:[%s1 + $0x40] sm:$0xff]
          %v1010 = vld [vmem:[%s1 + $0x48] sm:$0xff]
          %v1011 = vld [vmem:[%s1 + $0x50] sm:$0xff]
          %v1012 = vld [vmem:[%s1 + $0x58] sm:$0xff]
          %v1013 = vld [vmem:[%s1 + $0x60] sm:$0xff]
          %v1014 = vld [vmem:[%s1 + $0x68] sm:$0xff]
          %v1015 = vld [vmem:[%s1 + $0x70] sm:$0xff]
          %v1016 = vld [vmem:[%s1 + $0x78] sm:$0xff]
          %v1017 = vld [vmem:[%s1 + $0x80] sm:$0xff]
          %v1018 = vld [vmem:[%s1 + $0x88] sm:$0xff]
          %v1019 = vld [vmem:[%s1 + $0x90] sm:$0xff]
          %v1020 = vld [vmem:[%s1 + $0x98] sm:$0xff]
          %v1021 = vld [vmem:[%s1 + $0xa0] sm:$0xff]
          %v1022 = vld [vmem:[%s1 + $0xa8] sm:$0xff]
          %v1023 = vld [vmem:[%s1 + $0xb0] sm:$0xff]
          %v1024 = vld [vmem:[%s1 + $0xb8] sm:$0xff]
          %v1025 = vld [vmem:[%s1 + $0xc0] sm:$0xff]
          %v1026 = vld [vmem:[%s1 + $0xc8] sm:$0xff]
          %v1027 = vld [vmem:[%s1 + $0xd0] sm:$0xff]
          %v1028 = vld [vmem:[%s1 + $0xd8] sm:$0xff]
          %v1029 = vld [vmem:[%s1 + $0xe0] sm:$0xff]
          %v1030 = vld [vmem:[%s1 + $0xe8] sm:$0xff]
          %v1031 = vld [vmem:[%s1 + $0xf0] sm:$0xff]
          %v1032 = vld [vmem:[%s1 + $0xf8] sm:$0xff]
          %v1033 = vld [vmem:[%s1 + $0x100] sm:$0xff]
          %v1034 = vld [vmem:[%s1 + $0x108] sm:$0xff]
          %v1035 = vld [vmem:[%s1 + $0x110] sm:$0xff]
          %v1036 = vld [vmem:[%s1 + $0x118] sm:$0xff]
          %v1037 = vld [vmem:[%s1 + $0x120] sm:$0xff]
          %v1038 = vld [vmem:[%s1 + $0x128] sm:$0xff]
          %v1039 = vld [vmem:[%s1 + $0x130] sm:$0xff]
          %v1040 = vld [vmem:[%s1 + $0x138] sm:$0xff]
          %v1041 = vld [vmem:[%s1 + $0x140] sm:$0xff]
          %v1042 = vld [vmem:[%s1 + $0x148] sm:$0xff]
          %v1043 = vld [vmem:[%s1 + $0x150] sm:$0xff]
          %v1044 = vld [vmem:[%s1 + $0x158] sm:$0xff]
          %v1045 = vld [vmem:[%s1 + $0x160] sm:$0xff]
          %v1046 = vld [vmem:[%s1 + $0x168] sm:$0xff]
          %v1047 = vld [vmem:[%s1 + $0x170] sm:$0xff]
          %v1048 = vld [vmem:[%s1 + $0x178] sm:$0xff]
          %v1049 = vld [vmem:[%s1 + $0x180] sm:$0xff]
          %v1050 = vld [vmem:[%s1 + $0x188] sm:$0xff]
          %v1051 = vld [vmem:[%s1 + $0x190] sm:$0xff]
          %v1052 = vld [vmem:[%s1 + $0x198] sm:$0xff]
          %v1053 = vld [vmem:[%s1 + $0x1a0] sm:$0xff]
          %v1054 = vld [vmem:[%s1 + $0x1a8] sm:$0xff]
          %v1055 = vld [vmem:[%s1 + $0x1b0] sm:$0xff]
          %v1056 = vld [vmem:[%s1 + $0x1b8] sm:$0xff]
          %v1057 = vld [vmem:[%s1 + $0x1c0] sm:$0xff]
          %v1058 = vld [vmem:[%s1 + $0x1c8] sm:$0xff]
          %v1059 = vld [vmem:[%s1 + $0x1d0] sm:$0xff]
          %v1060 = vld [vmem:[%s1 + $0x1d8] sm:$0xff]
          %v1061 = vld [vmem:[%s1 + $0x1e0] sm:$0xff]
          %v1062 = vld [vmem:[%s1 + $0x1e8] sm:$0xff]
          %v1063 = vld [vmem:[%s1 + $0x1f0] sm:$0xff]
          %v1064 = vld [vmem:[%s1 + $0x1f8] sm:$0xff]
          %v1065 = vld [vmem:[%s1 + $0x200] sm:$0xff]
          %v1066 = vld [vmem:[%s1 + $0x208] sm:$0xff]
          %v1067 = vld [vmem:[%s1 + $0x210] sm:$0xff]
          %v1068 = vld [vmem:[%s1 + $0x218] sm:$0xff]
          %v1069 = vld [vmem:[%s1 + $0x220] sm:$0xff]
          %v1070 = vld [vmem:[%s1 + $0x228] sm:$0xff]
          %v1071 = vld [vmem:[%s1 + $0x230] sm:$0xff]
          %v1072 = vld [vmem:[%s1 + $0x238] sm:$0xff]
          %v1073 = vld [vmem:[%s2] sm:$0x1]
          %v1075 = vlaneseq
          %v1076 = vshrl.u32 %v1075, 7
          %v1077 = vsub.s32 0, %v1076
          %v1078 = vrot.slane %v1073, %v1077
          %vm1080 = vcmask 523264
          %v1082 = vsel %vm1080, %v985, 0
          %v1085 = vsel %vm1080, %v990, 0
          %v1088 = vsel %vm1080, %v995, 0
          %v1091 = vsel %vm1080, %v1000, 0
          %1093 = vmatprep.subr.mxu0 0.0
          %1094 = vmatpush1.msra.mxu0 %v1001
          %1095 = vmatprep.subr.mxu0 0.0
          %1096 = vmatpush1.msra.mxu0 %v1002
          %1097 = vmatprep.subr.mxu0 0.0
          %1098 = vmatpush1.msra.mxu0 %v1003
          %1099 = vmatprep.subr.mxu0 0.0
          %1100 = vmatpush1.msra.mxu0 %v1004
          %1101 = vmatprep.subr.mxu0 0.0
          %1102 = vmatpush1.msra.mxu0 %v1005
          %1103 = vmatprep.subr.mxu0 0.0
          %1104 = vmatpush1.msra.mxu0 %v1006
          %1105 = vmatprep.subr.mxu0 0.0
          %1106 = vmatpush1.msra.mxu0 %v1007
          %1107 = vmatprep.subr.mxu0 0.0
          %1108 = vmatpush1.msra.mxu0 %v1008
          %1109 = vmatprep.subr.mxu0 0.0
          %1110 = vmatpush1.msra.mxu0 %v1009
          %1111 = vmatprep.subr.mxu0 0.0
          %1112 = vmatpush1.msra.mxu0 %v1010
          %1113 = vmatprep.subr.mxu0 0.0
          %1114 = vmatpush1.msra.mxu0 %v1011
          %1115 = vmatprep.subr.mxu0 0.0
          %1116 = vmatpush1.msra.mxu0 %v1012
          %1117 = vmatprep.subr.mxu0 0.0
          %1118 = vmatpush1.msra.mxu0 %v1013
          %1119 = vmatprep.subr.mxu0 0.0
          %1120 = vmatpush1.msra.mxu0 %v1014
          %1121 = vmatprep.subr.mxu0 0.0
          %1122 = vmatpush1.msra.mxu0 %v1015
          %1123 = vmatprep.subr.mxu0 0.0
          %1124 = vmatpush1.msra.mxu0 %v1016
          %1125 = vmatprep.subr.mxu0 0.0
          %1126 = vmatpush1.msra.mxu0 %v1017
          %1127 = vmatprep.subr.mxu0 0.0
          %1128 = vmatpush1.msra.mxu0 %v1018
          %1129 = vmatprep.subr.mxu0 0.0
          %1130 = vmatpush1.msra.mxu0 %v1019
          %1131 = vmatprep.subr.mxu0 0.0
          %1132 = vmatpush1.msra.mxu0 %v1020
          %1133 = vmatprep.subr.mxu0 0.0
          %1134 = vmatpush1.msra.mxu0 %v1021
          %1135 = vmatprep.subr.mxu0 0.0
          %1136 = vmatpush1.msra.mxu0 %v1022
          %1137 = vmatprep.subr.mxu0 0.0
          %1138 = vmatpush1.msra.mxu0 %v1023
          %1139 = vmatprep.subr.mxu0 0.0
          %1140 = vmatpush1.msra.mxu0 %v1024
          %1141 = vmatprep.subr.mxu0 0.0
          %1142 = vmatpush1.msra.mxu0 %v1025
          %1143 = vmatprep.subr.mxu0 0.0
          %1144 = vmatpush1.msra.mxu0 %v1026
          %1145 = vmatprep.subr.mxu0 0.0
          %1146 = vmatpush1.msra.mxu0 %v1027
          %1147 = vmatprep.subr.mxu0 0.0
          %1148 = vmatpush1.msra.mxu0 %v1028
          %1149 = vmatprep.subr.mxu0 0.0
          %1150 = vmatpush1.msra.mxu0 %v1029
          %1151 = vmatprep.subr.mxu0 0.0
          %1152 = vmatpush1.msra.mxu0 %v1030
          %1153 = vmatprep.subr.mxu0 0.0
          %1154 = vmatpush1.msra.mxu0 %v1031
          %1155 = vmatprep.subr.mxu0 0.0
          %1156 = vmatpush1.msra.mxu0 %v1032
          %1157 = vmatprep.mubr.f32.mxu0 %v982
          %1158 = vmatmul.mubr.f32.gmra.mrb[0].mxu0 %v981
          %v1159 = vpop.f32.mrb[0].mxu0
          %v1160 = vadd.f32 %v1078, %v1159
          %v1161 = vpop.f32.mrb[0].mxu0
          %1162 = vmatprep.mubr.f32.mxu0 %v987
          %1163 = vmatmul.mubr.f32.gmra.mrb[0].mxu0 %v986
          %v1164 = vpop.f32.mrb[0].mxu0
          %v1165 = vadd.f32 %v1078, %v1164
          %v1166 = vpop.f32.mrb[0].mxu0
          %1167 = vmatprep.mubr.f32.mxu0 %v992
          %1168 = vmatmul.mubr.f32.gmra.mrb[0].mxu0 %v991
          %v1169 = vpop.f32.mrb[0].mxu0
          %v1170 = vadd.f32 %v1078, %v1169
          %v1171 = vpop.f32.mrb[0].mxu0
          %1172 = vmatprep.mubr.f32.mxu0 %v997
          %1173 = vmatmul.mubr.f32.gmra.mrb[0].mxu0 %v996
          %v1174 = vpop.f32.mrb[0].mxu0
          %v1175 = vadd.f32 %v1078, %v1174
          %v1176 = vpop.f32.mrb[0].mxu0
          %1177 = vdwg.mxu0
          %1178 = vmatprep.subr.mxu0 0.0
          %1179 = vmatpush1.msra.mxu0 %v1033
          %1180 = vmatprep.subr.mxu0 0.0
          %1181 = vmatpush1.msra.mxu0 %v1034
          %1182 = vmatprep.subr.mxu0 0.0
          %1183 = vmatpush1.msra.mxu0 %v1035
          %1184 = vmatprep.subr.mxu0 0.0
          %1185 = vmatpush1.msra.mxu0 %v1036
          %1186 = vmatprep.subr.mxu0 0.0
          %1187 = vmatpush1.msra.mxu0 %v1037
          %1188 = vmatprep.subr.mxu0 0.0
          %1189 = vmatpush1.msra.mxu0 %v1038
          %1190 = vmatprep.subr.mxu0 0.0
          %1191 = vmatpush1.msra.mxu0 %v1039
          %1192 = vmatprep.subr.mxu0 0.0
          %1193 = vmatpush1.msra.mxu0 %v1040
          %1194 = vmatprep.subr.mxu0 0.0
          %1195 = vmatpush1.msra.mxu0 %v1041
          %1196 = vmatprep.subr.mxu0 0.0
          %1197 = vmatpush1.msra.mxu0 %v1042
          %1198 = vmatprep.subr.mxu0 0.0
          %1199 = vmatpush1.msra.mxu0 %v1043
          %1200 = vmatprep.subr.mxu0 0.0
          %1201 = vmatpush1.msra.mxu0 %v1044
          %1202 = vmatprep.subr.mxu0 0.0
          %1203 = vmatpush1.msra.mxu0 %v1045
          %1204 = vmatprep.subr.mxu0 0.0
          %1205 = vmatpush1.msra.mxu0 %v1046
          %1206 = vmatprep.subr.mxu0 0.0
          %1207 = vmatpush1.msra.mxu0 %v1047
          %1208 = vmatprep.subr.mxu0 0.0
          %1209 = vmatpush1.msra.mxu0 %v1048
          %1210 = vmatprep.subr.mxu0 0.0
          %1211 = vmatpush1.msra.mxu0 %v1049
          %1212 = vmatprep.subr.mxu0 0.0
          %1213 = vmatpush1.msra.mxu0 %v1050
          %1214 = vmatprep.subr.mxu0 0.0
          %1215 = vmatpush1.msra.mxu0 %v1051
          %1216 = vmatprep.subr.mxu0 0.0
          %1217 = vmatpush1.msra.mxu0 %v1052
          %1218 = vmatprep.subr.mxu0 0.0
          %1219 = vmatpush1.msra.mxu0 %v1053
          %1220 = vmatprep.subr.mxu0 0.0
          %1221 = vmatpush1.msra.mxu0 %v1054
          %1222 = vmatprep.subr.mxu0 0.0
          %1223 = vmatpush1.msra.mxu0 %v1055
          %1224 = vmatprep.subr.mxu0 0.0
          %1225 = vmatpush1.msra.mxu0 %v1056
          %1226 = vmatprep.subr.mxu0 0.0
          %1227 = vmatpush1.msra.mxu0 %v1057
          %1228 = vmatprep.subr.mxu0 0.0
          %1229 = vmatpush1.msra.mxu0 %v1058
          %1230 = vmatprep.subr.mxu0 0.0
          %1231 = vmatpush1.msra.mxu0 %v1059
          %1232 = vmatprep.subr.mxu0 0.0
          %1233 = vmatpush1.msra.mxu0 %v1060
          %1234 = vmatprep.subr.mxu0 0.0
          %1235 = vmatpush1.msra.mxu0 %v1061
          %1236 = vmatprep.subr.mxu0 0.0
          %1237 = vmatpush1.msra.mxu0 %v1062
          %1238 = vmatprep.subr.mxu0 0.0
          %1239 = vmatpush1.msra.mxu0 %v1063
          %1240 = vmatprep.subr.mxu0 0.0
          %1241 = vmatpush1.msra.mxu0 %v1064
          %1242 = vmatprep.mubr.f32.mxu0 %v984
          %1243 = vmatmul.mubr.f32.gmra.mrb[0].mxu0 %v983
          %v1244 = vpop.f32.mrb[0].mxu0
          %v1245 = vadd.f32 %v1160, %v1244
          %v1246 = vpop.f32.mrb[0].mxu0
          %1247 = vmatprep.mubr.f32.mxu0 %v989
          %1248 = vmatmul.mubr.f32.gmra.mrb[0].mxu0 %v988
          %v1249 = vpop.f32.mrb[0].mxu0
          %v1250 = vadd.f32 %v1165, %v1249
          %v1251 = vpop.f32.mrb[0].mxu0
          %1252 = vmatprep.mubr.f32.mxu0 %v994
          %1253 = vmatmul.mubr.f32.gmra.mrb[0].mxu0 %v993
          %v1254 = vpop.f32.mrb[0].mxu0
          %v1255 = vadd.f32 %v1170, %v1254
          %v1256 = vpop.f32.mrb[0].mxu0
          %1257 = vmatprep.mubr.f32.mxu0 %v999
          %1258 = vmatmul.mubr.f32.gmra.mrb[0].mxu0 %v998
          %v1259 = vpop.f32.mrb[0].mxu0
          %v1260 = vadd.f32 %v1175, %v1259
          %v1261 = vpop.f32.mrb[0].mxu0
          %1262 = vdwg.mxu0
          %1263 = vmatprep.subr.mxu0 0.0
          %1264 = vmatpush1.msra.mxu0 %v1065
          %1265 = vmatprep.subr.mxu0 0.0
          %1266 = vmatpush1.msra.mxu0 %v1066
          %1267 = vmatprep.subr.mxu0 0.0
          %1268 = vmatpush1.msra.mxu0 %v1067
          %1269 = vmatprep.subr.mxu0 0.0
          %1270 = vmatpush1.msra.mxu0 %v1068
          %1271 = vmatprep.subr.mxu0 0.0
          %1272 = vmatpush1.msra.mxu0 %v1069
          %1273 = vmatprep.subr.mxu0 0.0
          %1274 = vmatpush1.msra.mxu0 %v1070
          %1275 = vmatprep.subr.mxu0 0.0
          %1276 = vmatpush1.msra.mxu0 %v1071
          %1277 = vmatprep.subr.mxu0 0.0
          %1278 = vmatpush1.msra.mxu0 %v1072
          %1279 = vmatprep.subr.mxu0 0.0
          %1280 = vmatpush1.msra.mxu0 0.0
          %1281 = vmatprep.subr.mxu0 0.0
          %1282 = vmatpush1.msra.mxu0 0.0
          %1283 = vmatprep.subr.mxu0 0.0
          %1284 = vmatpush1.msra.mxu0 0.0
          %1285 = vmatprep.subr.mxu0 0.0
          %1286 = vmatpush1.msra.mxu0 0.0
          %1287 = vmatprep.subr.mxu0 0.0
          %1288 = vmatpush1.msra.mxu0 0.0
          %1289 = vmatprep.subr.mxu0 0.0
          %1290 = vmatpush1.msra.mxu0 0.0
          %1291 = vmatprep.subr.mxu0 0.0
          %1292 = vmatpush1.msra.mxu0 0.0
          %1293 = vmatprep.subr.mxu0 0.0
          %1294 = vmatpush1.msra.mxu0 0.0
          %1295 = vmatprep.subr.mxu0 0.0
          %1296 = vmatpush1.msra.mxu0 0.0
          %1297 = vmatprep.subr.mxu0 0.0
          %1298 = vmatpush1.msra.mxu0 0.0
          %1299 = vmatprep.subr.mxu0 0.0
          %1300 = vmatpush1.msra.mxu0 0.0
          %1301 = vmatprep.subr.mxu0 0.0
          %1302 = vmatpush1.msra.mxu0 0.0
          %1303 = vmatprep.subr.mxu0 0.0
          %1304 = vmatpush1.msra.mxu0 0.0
          %1305 = vmatprep.subr.mxu0 0.0
          %1306 = vmatpush1.msra.mxu0 0.0
          %1307 = vmatprep.subr.mxu0 0.0
          %1308 = vmatpush1.msra.mxu0 0.0
          %1309 = vmatprep.subr.mxu0 0.0
          %1310 = vmatpush1.msra.mxu0 0.0
          %1311 = vmatprep.subr.mxu0 0.0
          %1312 = vmatpush1.msra.mxu0 0.0
          %1313 = vmatprep.subr.mxu0 0.0
          %1314 = vmatpush1.msra.mxu0 0.0
          %1315 = vmatprep.subr.mxu0 0.0
          %1316 = vmatpush1.msra.mxu0 0.0
          %1317 = vmatprep.subr.mxu0 0.0
          %1318 = vmatpush1.msra.mxu0 0.0
          %1319 = vmatprep.subr.mxu0 0.0
          %1320 = vmatpush1.msra.mxu0 0.0
          %1321 = vmatprep.subr.mxu0 0.0
          %1322 = vmatpush1.msra.mxu0 0.0
          %1323 = vmatprep.subr.mxu0 0.0
          %1324 = vmatpush1.msra.mxu0 0.0
          %1325 = vmatprep.subr.mxu0 0.0
          %1326 = vmatpush1.msra.mxu0 0.0
          %1327 = vmatprep.mubr.f32.mxu0 0.0
          %1328 = vmatmul.mubr.f32.gmra.mrb[0].mxu0 %v1082
          %v1329 = vpop.f32.mrb[0].mxu0
          %v1330 = vadd.f32 %v1245, %v1329
          %v1331 = vpop.f32.mrb[0].mxu0
          %1332 = vmatprep.mubr.f32.mxu0 0.0
          %1333 = vmatmul.mubr.f32.gmra.mrb[0].mxu0 %v1085
          %v1334 = vpop.f32.mrb[0].mxu0
          %v1335 = vadd.f32 %v1250, %v1334
          %v1336 = vpop.f32.mrb[0].mxu0
          %1337 = vmatprep.mubr.f32.mxu0 0.0
          %1338 = vmatmul.mubr.f32.gmra.mrb[0].mxu0 %v1088
          %v1339 = vpop.f32.mrb[0].mxu0
          %v1340 = vadd.f32 %v1255, %v1339
          %v1341 = vpop.f32.mrb[0].mxu0
          %1342 = vmatprep.mubr.f32.mxu0 0.0
          %1343 = vmatmul.mubr.f32.gmra.mrb[0].mxu0 %v1091
          %v1344 = vpop.f32.mrb[0].mxu0
          %v1345 = vadd.f32 %v1260, %v1344
          %v1346 = vpop.f32.mrb[0].mxu0
          %1347 = vdwg.mxu0
          %v1348 = vmul.f32 %v1330, %v1330
          %v1349 = vmul.f32 %v1335, %v1335
          %v1350 = vmul.f32 %v1340, %v1340
          %v1351 = vmul.f32 %v1345, %v1345
          %v1352 = vmul.f32 %v1330, %v1348
          %v1353 = vmul.f32 %v1335, %v1349
          %v1354 = vmul.f32 %v1340, %v1350
          %v1355 = vmul.f32 %v1345, %v1351
          %v1356 = vmul.f32 %v1352, 0.044715
          %v1357 = vmul.f32 %v1353, 0.044715
          %v1358 = vmul.f32 %v1354, 0.044715
          %v1359 = vmul.f32 %v1355, 0.044715
          %v1360 = vadd.f32 %v1330, %v1356
          %v1361 = vadd.f32 %v1335, %v1357
          %v1362 = vadd.f32 %v1340, %v1358
          %v1363 = vadd.f32 %v1345, %v1359
          %v1364 = vmul.f32 %v1360, 0.7978846
          %v1365 = vmul.f32 %v1361, 0.7978846
          %v1366 = vmul.f32 %v1362, 0.7978846
          %v1367 = vmul.f32 %v1363, 0.7978846
          %v1368 = vtanh.pop %v1364
          %v1369 = vtanh.pop %v1365
          %v1370 = vtanh.pop %v1366
          %v1371 = vtanh.pop %v1367
          %v1372 = vadd.f32 %v1368, 1.0
          %v1373 = vadd.f32 %v1369, 1.0
          %v1374 = vadd.f32 %v1370, 1.0
          %v1375 = vadd.f32 %v1371, 1.0
          %v1376 = vmul.f32 %v1372, 0.5
          %v1377 = vmul.f32 %v1373, 0.5
          %v1378 = vmul.f32 %v1374, 0.5
          %v1379 = vmul.f32 %v1375, 0.5
          %v1380 = vmul.f32 %v1330, %v1376
          %v1381 = vmul.f32 %v1335, %v1377
          %v1382 = vmul.f32 %v1340, %v1378
          %v1383 = vmul.f32 %v1345, %v1379
          %v1384 = vld [vmem:[%s3] sm:$0xff]
          %v1385 = vld [vmem:[%s3 + $0x8] sm:$0xff]
          %v1386 = vld [vmem:[%s3 + $0x10] sm:$0xff]
          %v1387 = vld [vmem:[%s3 + $0x18] sm:$0xff]
          %v1388 = vld [vmem:[%s3 + $0x20] sm:$0xff]
          %v1389 = vld [vmem:[%s3 + $0x28] sm:$0xff]
          %v1390 = vld [vmem:[%s3 + $0x30] sm:$0xff]
          %v1391 = vld [vmem:[%s3 + $0x38] sm:$0xff]
          %v1392 = vld [vmem:[%s3 + $0x40] sm:$0xff]
          %v1393 = vld [vmem:[%s3 + $0x48] sm:$0xff]
          %v1394 = vld [vmem:[%s3 + $0x50] sm:$0xff]
          %v1395 = vld [vmem:[%s3 + $0x58] sm:$0xff]
          %v1396 = vld [vmem:[%s3 + $0x60] sm:$0xff]
          %v1397 = vld [vmem:[%s3 + $0x68] sm:$0xff]
          %v1398 = vld [vmem:[%s3 + $0x70] sm:$0xff]
          %v1399 = vld [vmem:[%s3 + $0x78] sm:$0xff]
          %v1400 = vld [vmem:[%s4] sm:$0x1]
          %v1402 = vlaneseq
          %v1403 = vshrl.u32 %v1402, 7
          %v1404 = vsub.s32 0, %v1403
          %v1405 = vrot.slane %v1400, %v1404
          %1407 = vmatprep.subr.mxu0 0.0
          %1408 = vmatpush1.msra.mxu0 %v1384
          %1409 = vmatprep.subr.mxu0 0.0
          %1410 = vmatpush1.msra.mxu0 %v1385
          %1411 = vmatprep.subr.mxu0 0.0
          %1412 = vmatpush1.msra.mxu0 %v1386
          %1413 = vmatprep.subr.mxu0 0.0
          %1414 = vmatpush1.msra.mxu0 %v1387
          %1415 = vmatprep.subr.mxu0 0.0
          %1416 = vmatpush1.msra.mxu0 %v1388
          %1417 = vmatprep.subr.mxu0 0.0
          %1418 = vmatpush1.msra.mxu0 %v1389
          %1419 = vmatprep.subr.mxu0 0.0
          %1420 = vmatpush1.msra.mxu0 %v1390
          %1421 = vmatprep.subr.mxu0 0.0
          %1422 = vmatpush1.msra.mxu0 %v1391
          %1423 = vmatprep.subr.mxu0 0.0
          %1424 = vmatpush1.msra.mxu0 %v1392
          %1425 = vmatprep.subr.mxu0 0.0
          %1426 = vmatpush1.msra.mxu0 %v1393
          %1427 = vmatprep.subr.mxu0 0.0
          %1428 = vmatpush1.msra.mxu0 %v1394
          %1429 = vmatprep.subr.mxu0 0.0
          %1430 = vmatpush1.msra.mxu0 %v1395
          %1431 = vmatprep.subr.mxu0 0.0
          %1432 = vmatpush1.msra.mxu0 %v1396
          %1433 = vmatprep.subr.mxu0 0.0
          %1434 = vmatpush1.msra.mxu0 %v1397
          %1435 = vmatprep.subr.mxu0 0.0
          %1436 = vmatpush1.msra.mxu0 %v1398
          %1437 = vmatprep.subr.mxu0 0.0
          %1438 = vmatpush1.msra.mxu0 %v1399
          %1439 = vmatprep.subr.mxu0 0.0
          %1440 = vmatpush1.msra.mxu0 0.0
          %1441 = vmatprep.subr.mxu0 0.0
          %1442 = vmatpush1.msra.mxu0 0.0
          %1443 = vmatprep.subr.mxu0 0.0
          %1444 = vmatpush1.msra.mxu0 0.0
          %1445 = vmatprep.subr.mxu0 0.0
          %1446 = vmatpush1.msra.mxu0 0.0
          %1447 = vmatprep.subr.mxu0 0.0
          %1448 = vmatpush1.msra.mxu0 0.0
          %1449 = vmatprep.subr.mxu0 0.0
          %1450 = vmatpush1.msra.mxu0 0.0
          %1451 = vmatprep.subr.mxu0 0.0
          %1452 = vmatpush1.msra.mxu0 0.0
          %1453 = vmatprep.subr.mxu0 0.0
          %1454 = vmatpush1.msra.mxu0 0.0
          %1455 = vmatprep.subr.mxu0 0.0
          %1456 = vmatpush1.msra.mxu0 0.0
          %1457 = vmatprep.subr.mxu0 0.0
          %1458 = vmatpush1.msra.mxu0 0.0
          %1459 = vmatprep.subr.mxu0 0.0
          %1460 = vmatpush1.msra.mxu0 0.0
          %1461 = vmatprep.subr.mxu0 0.0
          %1462 = vmatpush1.msra.mxu0 0.0
          %1463 = vmatprep.subr.mxu0 0.0
          %1464 = vmatpush1.msra.mxu0 0.0
          %1465 = vmatprep.subr.mxu0 0.0
          %1466 = vmatpush1.msra.mxu0 0.0
          %1467 = vmatprep.subr.mxu0 0.0
          %1468 = vmatpush1.msra.mxu0 0.0
          %1469 = vmatprep.subr.mxu0 0.0
          %1470 = vmatpush1.msra.mxu0 0.0
          %1471 = vmatprep.mubr.f32.mxu0 0.0
          %1472 = vmatmul.mubr.f32.gmra.mrb[0].mxu0 %v1380
          %v1473 = vpop.f32.mrb[0].mxu0
          %v1474 = vadd.f32 %v1405, %v1473
          %v1475 = vpop.f32.mrb[0].mxu0
          %1476 = vmatprep.mubr.f32.mxu0 0.0
          %1477 = vmatmul.mubr.f32.gmra.mrb[0].mxu0 %v1381
          %v1478 = vpop.f32.mrb[0].mxu0
          %v1479 = vadd.f32 %v1405, %v1478
          %v1480 = vpop.f32.mrb[0].mxu0
          %1481 = vmatprep.mubr.f32.mxu0 0.0
          %1482 = vmatmul.mubr.f32.gmra.mrb[0].mxu0 %v1382
          %v1483 = vpop.f32.mrb[0].mxu0
          %v1484 = vadd.f32 %v1405, %v1483
          %v1485 = vpop.f32.mrb[0].mxu0
          %1486 = vmatprep.mubr.f32.mxu0 0.0
          %1487 = vmatmul.mubr.f32.gmra.mrb[0].mxu0 %v1383
          %v1488 = vpop.f32.mrb[0].mxu0
          %v1489 = vadd.f32 %v1405, %v1488
          %v1490 = vpop.f32.mrb[0].mxu0
          %1491 = vdwg.mxu0
          %v1492 = vld [vmem:[%s5] sm:$0xff]
          %v1493 = vld [vmem:[%s5 + $0x8] sm:$0xff]
          %v1494 = vadd.f32 %v1474, %v1492
          %v1495 = vadd.f32 %v1479, %v1493
          %v1496 = vadd.f32 %v1484, %v1492
          %v1497 = vadd.f32 %v1489, %v1493
          %vm1498 = vcmask 261120
          %1499 = vst.msk [vmem:[#allocation2] sm:$0xff] %vm1498, %v1494
          %1500 = vst.msk [vmem:[#allocation2 + $0x8] sm:$0xff] %vm1498, %v1495
          %1501 = vst.msk [vmem:[#allocation2 + $0x18] sm:$0xff] %vm1498, %v1496
          %1502 = vst.msk [vmem:[#allocation2 + $0x20] sm:$0xff] %vm1498, %v1497
          %v1503 = vld [vmem:[%s6] sm:$0xff]
          %1504 = vst.msk [vmem:[#allocation2 + $0x10] sm:$0xff] %vm1498, %v1503
          %1505 = vst.msk [vmem:[#allocation2 + $0x28] sm:$0xff] %vm1498, %v1503
        $region128: #{_lambda_.1} parent=123 // pred_fallthru
          _
        %v1506 = vld [vmem:[#allocation2] sm:$0xff]
        %v1507 = vld [vmem:[#allocation2 + $0x8] sm:$0xff]
        %v1508 = vld [vmem:[#allocation2 + $0x10] sm:$0xff]
        %v1509 = vld [vmem:[#allocation2 + $0x18] sm:$0xff]
        %v1510 = vld [vmem:[#allocation2 + $0x20] sm:$0xff]
        %v1511 = vld [vmem:[#allocation2 + $0x28] sm:$0xff]
        %v1512 = vld [vmem:[%s934] sm:$0x1]
        %v1513 = vld [vmem:[%s937] sm:$0x1]
        %vm1514 = vcmask 261120
        %v1515 = vsel %vm1514, %v1506, 0.0
        %1516 = vadd.xlane.f32.xlu0 %v1515
        %v1517 = vpop.xlane.xlu0 %1516
        %v1518 = vsel %vm1514, %v1507, 0.0
        %1519 = vadd.xlane.f32.xlu0 %v1518
        %v1520 = vpop.xlane.xlu0 %1519
        %v1521 = vsel %vm1514, %v1508, 0.0
        %1522 = vadd.xlane.f32.xlu0 %v1521
        %v1523 = vpop.xlane.xlu0 %1522
        %v1524 = vsel %vm1514, %v1509, 0.0
        %1525 = vadd.xlane.f32.xlu0 %v1524
        %v1526 = vpop.xlane.xlu0 %1525
        %v1527 = vsel %vm1514, %v1510, 0.0
        %1528 = vadd.xlane.f32.xlu0 %v1527
        %v1529 = vpop.xlane.xlu0 %1528
        %v1530 = vsel %vm1514, %v1511, 0.0
        %1531 = vadd.xlane.f32.xlu0 %v1530
        %v1532 = vpop.xlane.xlu0 %1531
        %v1533 = vrcp.pop 32.0
        %v1534 = vmul.f32 %v1517, %v1533
        %v1535 = vmul.f32 %v1520, %v1533
        %v1536 = vmul.f32 %v1523, %v1533
        %v1537 = vmul.f32 %v1526, %v1533
        %v1538 = vmul.f32 %v1529, %v1533
        %v1539 = vmul.f32 %v1532, %v1533
        %v1540 = vsub.f32 %v1506, %v1534
        %v1541 = vsub.f32 %v1507, %v1535
        %v1542 = vsub.f32 %v1508, %v1536
        %v1543 = vsub.f32 %v1509, %v1537
        %v1544 = vsub.f32 %v1510, %v1538
        %v1545 = vsub.f32 %v1511, %v1539
        %v1546 = vmul.f32 %v1540, %v1540
        %v1547 = vmul.f32 %v1541, %v1541
        %v1548 = vmul.f32 %v1542, %v1542
        %v1549 = vmul.f32 %v1543, %v1543
        %v1550 = vmul.f32 %v1544, %v1544
        %v1551 = vmul.f32 %v1545, %v1545
        %v1552 = vsel %vm1514, %v1546, 0.0
        %1553 = vadd.xlane.f32.xlu0 %v1552
        %v1554 = vpop.xlane.xlu0 %1553
        %v1555 = vsel %vm1514, %v1547, 0.0
        %1556 = vadd.xlane.f32.xlu0 %v1555
        %v1557 = vpop.xlane.xlu0 %1556
        %v1558 = vsel %vm1514, %v1548, 0.0
        %1559 = vadd.xlane.f32.xlu0 %v1558
        %v1560 = vpop.xlane.xlu0 %1559
        %v1561 = vsel %vm1514, %v1549, 0.0
        %1562 = vadd.xlane.f32.xlu0 %v1561
        %v1563 = vpop.xlane.xlu0 %1562
        %v1564 = vsel %vm1514, %v1550, 0.0
        %1565 = vadd.xlane.f32.xlu0 %v1564
        %v1566 = vpop.xlane.xlu0 %1565
        %v1567 = vsel %vm1514, %v1551, 0.0
        %1568 = vadd.xlane.f32.xlu0 %v1567
        %v1569 = vpop.xlane.xlu0 %1568
        %v1570 = vmul.f32 %v1554, %v1533
        %v1571 = vmul.f32 %v1557, %v1533
        %v1572 = vmul.f32 %v1560, %v1533
        %v1573 = vmul.f32 %v1563, %v1533
        %v1574 = vmul.f32 %v1566, %v1533
        %v1575 = vmul.f32 %v1569, %v1533
        %v1576 = vadd.f32 %v1570, 1e-05
        %v1577 = vadd.f32 %v1571, 1e-05
        %v1578 = vadd.f32 %v1572, 1e-05
        %v1579 = vadd.f32 %v1573, 1e-05
        %v1580 = vadd.f32 %v1574, 1e-05
        %v1581 = vadd.f32 %v1575, 1e-05
        %v1582 = vrsqrt.pop %v1576
        %v1583 = vrsqrt.pop %v1577
        %v1584 = vrsqrt.pop %v1578
        %v1585 = vrsqrt.pop %v1579
        %v1586 = vrsqrt.pop %v1580
        %v1587 = vrsqrt.pop %v1581
        %v1588 = vmul.f32 %v1540, %v1582
        %v1589 = vmul.f32 %v1541, %v1583
        %v1590 = vmul.f32 %v1542, %v1584
        %v1591 = vmul.f32 %v1543, %v1585
        %v1592 = vmul.f32 %v1544, %v1586
        %v1593 = vmul.f32 %v1545, %v1587
        %v1595 = vlaneseq
        %v1596 = vshrl.u32 %v1595, 7
        %v1597 = vsub.s32 0, %v1596
        %v1598 = vrot.slane %v1512, %v1597
        %v1600 = vmul.f32 %v1588, %v1598
        %v1601 = vmul.f32 %v1589, %v1598
        %v1602 = vmul.f32 %v1590, %v1598
        %v1603 = vmul.f32 %v1591, %v1598
        %v1604 = vmul.f32 %v1592, %v1598
        %v1605 = vmul.f32 %v1593, %v1598
        %v1607 = vlaneseq
        %v1608 = vshrl.u32 %v1607, 7
        %v1609 = vsub.s32 0, %v1608
        %v1610 = vrot.slane %v1513, %v1609
        %v1612 = vadd.f32 %v1600, %v1610
        %v1613 = vadd.f32 %v1601, %v1610
        %v1614 = vadd.f32 %v1602, %v1610
        %v1615 = vadd.f32 %v1603, %v1610
        %v1616 = vadd.f32 %v1604, %v1610
        %v1617 = vadd.f32 %v1605, %v1610
        %v1618 = vpack.c.bf16 %v1613, %v1612
        %v1619 = vpack.c.bf16 %v1615, %v1614
        %v1620 = vpack.c.bf16 %v1617, %v1616
        %v1621 = vld [vmem:[%s942] sm:$0xf]
        %v1622 = vld [vmem:[%s942 + $0x4] sm:$0xf]
        %v1623 = vld [vmem:[%s942 + $0x8] sm:$0xf]
        %v1624 = vld [vmem:[%s942 + $0xc] sm:$0xf]
        %v1625 = vld [vmem:[%s945] sm:$0x1]
        %v1627 = vlaneseq
        %v1628 = vshrl.u32 %v1627, 7
        %v1629 = vsub.s32 0, %v1628
        %v1630 = vrot.slane %v1625, %v1629
        %v1636 = vunpack.c.l.b16 %v1621
        %v1637 = vunpack.c.l.b16 %v1622
        %v1638 = vunpack.c.l.b16 %v1623
        %v1639 = vunpack.c.l.b16 %v1624
        %v1640 = vpack.c.b16 %v1637, %v1636
        %v1641 = vpack.c.b16 %v1639, %v1638
        %v1645 = vsel %vm1514, %v1618, 0
        %v1648 = vsel %vm1514, %v1619, 0
        %v1651 = vsel %vm1514, %v1620, 0
        %1653 = vmatprep.subr.bf16.mxu0 0
        %1654 = vmatpush1.bf16.msra.mxu0 %v1640
        %1655 = vmatprep.subr.bf16.mxu0 0
        %1656 = vmatpush1.bf16.msra.mxu0 %v1641
        %1657 = vmatprep.subr.bf16.mxu0 0
        %1658 = vmatpush1.bf16.msra.mxu0 0
        %1659 = vmatprep.subr.bf16.mxu0 0
        %1660 = vmatpush1.bf16.msra.mxu0 0
        %1661 = vmatprep.subr.bf16.mxu0 0
        %1662 = vmatpush1.bf16.msra.mxu0 0
        %1663 = vmatprep.subr.bf16.mxu0 0
        %1664 = vmatpush1.bf16.msra.mxu0 0
        %1665 = vmatprep.subr.bf16.mxu0 0
        %1666 = vmatpush1.bf16.msra.mxu0 0
        %1667 = vmatprep.subr.bf16.mxu0 0
        %1668 = vmatpush1.bf16.msra.mxu0 0
        %1669 = vmatprep.subr.bf16.mxu0 0
        %1670 = vmatpush1.bf16.msra.mxu0 0
        %1671 = vmatprep.subr.bf16.mxu0 0
        %1672 = vmatpush1.bf16.msra.mxu0 0
        %1673 = vmatprep.subr.bf16.mxu0 0
        %1674 = vmatpush1.bf16.msra.mxu0 0
        %1675 = vmatprep.subr.bf16.mxu0 0
        %1676 = vmatpush1.bf16.msra.mxu0 0
        %1677 = vmatprep.subr.bf16.mxu0 0
        %1678 = vmatpush1.bf16.msra.mxu0 0
        %1679 = vmatprep.subr.bf16.mxu0 0
        %1680 = vmatpush1.bf16.msra.mxu0 0
        %1681 = vmatprep.subr.bf16.mxu0 0
        %1682 = vmatpush1.bf16.msra.mxu0 0
        %1683 = vmatprep.subr.bf16.mxu0 0
        %1684 = vmatpush1.bf16.msra.mxu0 0
        %1685 = vmatprep.mubr.bf16.mxu0 0
        %1686 = vmatmul.mubr.bf16.gmra.mrb[0].mxu0 %v1645
        %v1687 = vpop.f32.mrb[0].mxu0
        %v1688 = vadd.f32 %v1630, %v1687
        %v1689 = vpop.f32.mrb[0].mxu0
        %v1690 = vpop.f32.mrb[0].mxu0
        %v1691 = vadd.f32 %v1630, %v1690
        %v1692 = vpop.f32.mrb[0].mxu0
        %1693 = vmatprep.mubr.bf16.mxu0 0
        %1694 = vmatmul.mubr.bf16.gmra.mrb[0].mxu0 %v1648
        %v1695 = vpop.f32.mrb[0].mxu0
        %v1696 = vadd.f32 %v1630, %v1695
        %v1697 = vpop.f32.mrb[0].mxu0
        %v1698 = vpop.f32.mrb[0].mxu0
        %v1699 = vadd.f32 %v1630, %v1698
        %v1700 = vpop.f32.mrb[0].mxu0
        %1701 = vmatprep.mubr.bf16.mxu0 0
        %1702 = vmatmul.mubr.bf16.gmra.mrb[0].mxu0 %v1651
        %v1703 = vpop.f32.mrb[0].mxu0
        %v1704 = vadd.f32 %v1630, %v1703
        %v1705 = vpop.f32.mrb[0].mxu0
        %v1706 = vpop.f32.mrb[0].mxu0
        %v1707 = vadd.f32 %v1630, %v1706
        %v1708 = vpop.f32.mrb[0].mxu0
        %1709 = vdwg.mxu0
        %1716 = vrot.lane.b32.xlu0 %v1688, 120
        %v1717 = vpop.permute.xlu0 %1716
        %1718 = vrot.lane.b32.xlu0 %v1691, 120
        %v1719 = vpop.permute.xlu0 %1718
        %1720 = vrot.lane.b32.xlu0 %v1696, 120
        %v1721 = vpop.permute.xlu0 %1720
        %1722 = vrot.lane.b32.xlu0 %v1699, 120
        %v1723 = vpop.permute.xlu0 %1722
        %1724 = vrot.lane.b32.xlu0 %v1704, 120
        %v1725 = vpop.permute.xlu0 %1724
        %1726 = vrot.lane.b32.xlu0 %v1707, 120
        %v1727 = vpop.permute.xlu0 %1726
        %1728 = vrot.lane.b32.xlu0 %v1688, 112
        %v1729 = vpop.permute.xlu0 %1728
        %1730 = vrot.lane.b32.xlu0 %v1691, 112
        %v1731 = vpop.permute.xlu0 %1730
        %1732 = vrot.lane.b32.xlu0 %v1696, 112
        %v1733 = vpop.permute.xlu0 %1732
        %1734 = vrot.lane.b32.xlu0 %v1699, 112
        %v1735 = vpop.permute.xlu0 %1734
        %1736 = vrot.lane.b32.xlu0 %v1704, 112
        %v1737 = vpop.permute.xlu0 %1736
        %1738 = vrot.lane.b32.xlu0 %v1707, 112
        %v1739 = vpop.permute.xlu0 %1738
        %1740 = vrot.lane.b32.xlu0 %v1688, 104
        %v1741 = vpop.permute.xlu0 %1740
        %1742 = vrot.lane.b32.xlu0 %v1691, 104
        %v1743 = vpop.permute.xlu0 %1742
        %1744 = vrot.lane.b32.xlu0 %v1696, 104
        %v1745 = vpop.permute.xlu0 %1744
        %1746 = vrot.lane.b32.xlu0 %v1699, 104
        %v1747 = vpop.permute.xlu0 %1746
        %1748 = vrot.lane.b32.xlu0 %v1704, 104
        %v1749 = vpop.permute.xlu0 %1748
        %1750 = vrot.lane.b32.xlu0 %v1707, 104
        %v1751 = vpop.permute.xlu0 %1750
        %1752 = vrot.lane.b32.xlu0 %v1688, 96
        %v1753 = vpop.permute.xlu0 %1752
        %1754 = vrot.lane.b32.xlu0 %v1691, 96
        %v1755 = vpop.permute.xlu0 %1754
        %1756 = vrot.lane.b32.xlu0 %v1696, 96
        %v1757 = vpop.permute.xlu0 %1756
        %vm1758 = vcmask 64512
        %v1759 = vsel %vm1758, %v1688, 0
        %v1761 = vsel %vm1758, %v1691, 0
        %v1763 = vsel %vm1758, %v1696, 0
        %v1765 = vsel %vm1758, %v1753, 0
        %v1767 = vsel %vm1758, %v1755, 0
        %v1769 = vsel %vm1758, %v1757, 0
        %1771 = vmatprep.subr.mxu0 0.0
        %1772 = vmatpush1.xpose.msra.mxu0 %v1765
        %1773 = vmatprep.subr.mxu0 0.0
        %1774 = vmatpush1.xpose.msra.mxu0 %v1767
        %1775 = vmatprep.subr.mxu0 0.0
        %1776 = vmatpush1.xpose.msra.mxu0 %v1769
        %1777 = vmatprep.subr.mxu0 0.0
        %1778 = vmatpush1.xpose.msra.mxu0 0.0
        %1779 = vmatprep.subr.mxu0 0.0
        %1780 = vmatpush1.xpose.msra.mxu0 0.0
        %1781 = vmatprep.subr.mxu0 0.0
        %1782 = vmatpush1.xpose.msra.mxu0 0.0
        %1783 = vmatprep.subr.mxu0 0.0
        %1784 = vmatpush1.xpose.msra.mxu0 0.0
        %1785 = vmatprep.subr.mxu0 0.0
        %1786 = vmatpush1.xpose.msra.mxu0 0.0
        %1787 = vmatprep.subr.mxu0 0.0
        %1788 = vmatpush1.xpose.msra.mxu0 0.0
        %1789 = vmatprep.subr.mxu0 0.0
        %1790 = vmatpush1.xpose.msra.mxu0 0.0
        %1791 = vmatprep.subr.mxu0 0.0
        %1792 = vmatpush1.xpose.msra.mxu0 0.0
        %1793 = vmatprep.subr.mxu0 0.0
        %1794 = vmatpush1.xpose.msra.mxu0 0.0
        %1795 = vmatprep.subr.mxu0 0.0
        %1796 = vmatpush1.xpose.msra.mxu0 0.0
        %1797 = vmatprep.subr.mxu0 0.0
        %1798 = vmatpush1.xpose.msra.mxu0 0.0
        %1799 = vmatprep.subr.mxu0 0.0
        %1800 = vmatpush1.xpose.msra.mxu0 0.0
        %1801 = vmatprep.subr.mxu0 0.0
        %1802 = vmatpush1.xpose.msra.mxu0 0.0
        %1803 = vmatprep.subr.mxu0 0.0
        %1804 = vmatpush1.xpose.msra.mxu0 0.0
        %1805 = vmatprep.subr.mxu0 0.0
        %1806 = vmatpush1.xpose.msra.mxu0 0.0
        %1807 = vmatprep.subr.mxu0 0.0
        %1808 = vmatpush1.xpose.msra.mxu0 0.0
        %1809 = vmatprep.subr.mxu0 0.0
        %1810 = vmatpush1.xpose.msra.mxu0 0.0
        %1811 = vmatprep.subr.mxu0 0.0
        %1812 = vmatpush1.xpose.msra.mxu0 0.0
        %1813 = vmatprep.subr.mxu0 0.0
        %1814 = vmatpush1.xpose.msra.mxu0 0.0
        %1815 = vmatprep.subr.mxu0 0.0
        %1816 = vmatpush1.xpose.msra.mxu0 0.0
        %1817 = vmatprep.subr.mxu0 0.0
        %1818 = vmatpush1.xpose.msra.mxu0 0.0
        %1819 = vmatprep.subr.mxu0 0.0
        %1820 = vmatpush1.xpose.msra.mxu0 0.0
        %1821 = vmatprep.subr.mxu0 0.0
        %1822 = vmatpush1.xpose.msra.mxu0 0.0
        %1823 = vmatprep.subr.mxu0 0.0
        %1824 = vmatpush1.xpose.msra.mxu0 0.0
        %1825 = vmatprep.subr.mxu0 0.0
        %1826 = vmatpush1.xpose.msra.mxu0 0.0
        %1827 = vmatprep.subr.mxu0 0.0
        %1828 = vmatpush1.xpose.msra.mxu0 0.0
        %1829 = vmatprep.subr.mxu0 0.0
        %1830 = vmatpush1.xpose.msra.mxu0 0.0
        %1831 = vmatprep.subr.mxu0 0.0
        %1832 = vmatpush1.xpose.msra.mxu0 0.0
        %1833 = vmatprep.subr.mxu0 0.0
        %1834 = vmatpush1.xpose.msra.mxu0 0.0
        %1835 = vmatprep.mubr.f32.mxu0 0.0
        %1836 = vmatmul.mubr.f32.gmra.mrb[0].mxu0 %v1759
        %v1837 = vpop.f32.mrb[0].mxu0
        %v1838 = vadd.f32 0.0, %v1837
        %v1839 = vpop.f32.mrb[0].mxu0
        %1840 = vmatprep.mubr.f32.mxu0 0.0
        %1841 = vmatmul.mubr.f32.gmra.mrb[0].mxu0 %v1761
        %v1842 = vpop.f32.mrb[0].mxu0
        %v1843 = vadd.f32 0.0, %v1842
        %v1844 = vpop.f32.mrb[0].mxu0
        %1845 = vmatprep.mubr.f32.mxu0 0.0
        %1846 = vmatmul.mubr.f32.gmra.mrb[0].mxu0 %v1763
        %v1847 = vpop.f32.mrb[0].mxu0
        %v1848 = vadd.f32 0.0, %v1847
        %v1849 = vpop.f32.mrb[0].mxu0
        %1850 = vdwg.mxu0
        %1851 = vrot.lane.b32.xlu0 %v1699, 96
        %v1852 = vpop.permute.xlu0 %1851
        %1853 = vrot.lane.b32.xlu0 %v1704, 96
        %v1854 = vpop.permute.xlu0 %1853
        %1855 = vrot.lane.b32.xlu0 %v1707, 96
        %v1856 = vpop.permute.xlu0 %1855
        %v1857 = vsel %vm1758, %v1699, 0
        %v1859 = vsel %vm1758, %v1704, 0
        %v1861 = vsel %vm1758, %v1707, 0
        %v1863 = vsel %vm1758, %v1852, 0
        %v1865 = vsel %vm1758, %v1854, 0
        %v1867 = vsel %vm1758, %v1856, 0
        %1869 = vmatprep.subr.mxu0 0.0
        %1870 = vmatpush1.xpose.msra.mxu0 %v1863
        %1871 = vmatprep.subr.mxu0 0.0
        %1872 = vmatpush1.xpose.msra.mxu0 %v1865
        %1873 = vmatprep.subr.mxu0 0.0
        %1874 = vmatpush1.xpose.msra.mxu0 %v1867
        %1875 = vmatprep.subr.mxu0 0.0
        %1876 = vmatpush1.xpose.msra.mxu0 0.0
        %1877 = vmatprep.subr.mxu0 0.0
        %1878 = vmatpush1.xpose.msra.mxu0 0.0
        %1879 = vmatprep.subr.mxu0 0.0
        %1880 = vmatpush1.xpose.msra.mxu0 0.0
        %1881 = vmatprep.subr.mxu0 0.0
        %1882 = vmatpush1.xpose.msra.mxu0 0.0
        %1883 = vmatprep.subr.mxu0 0.0
        %1884 = vmatpush1.xpose.msra.mxu0 0.0
        %1885 = vmatprep.subr.mxu0 0.0
        %1886 = vmatpush1.xpose.msra.mxu0 0.0
        %1887 = vmatprep.subr.mxu0 0.0
        %1888 = vmatpush1.xpose.msra.mxu0 0.0
        %1889 = vmatprep.subr.mxu0 0.0
        %1890 = vmatpush1.xpose.msra.mxu0 0.0
        %1891 = vmatprep.subr.mxu0 0.0
        %1892 = vmatpush1.xpose.msra.mxu0 0.0
        %1893 = vmatprep.subr.mxu0 0.0
        %1894 = vmatpush1.xpose.msra.mxu0 0.0
        %1895 = vmatprep.subr.mxu0 0.0
        %1896 = vmatpush1.xpose.msra.mxu0 0.0
        %1897 = vmatprep.subr.mxu0 0.0
        %1898 = vmatpush1.xpose.msra.mxu0 0.0
        %1899 = vmatprep.subr.mxu0 0.0
        %1900 = vmatpush1.xpose.msra.mxu0 0.0
        %1901 = vmatprep.subr.mxu0 0.0
        %1902 = vmatpush1.xpose.msra.mxu0 0.0
        %1903 = vmatprep.subr.mxu0 0.0
        %1904 = vmatpush1.xpose.msra.mxu0 0.0
        %1905 = vmatprep.subr.mxu0 0.0
        %1906 = vmatpush1.xpose.msra.mxu0 0.0
        %1907 = vmatprep.subr.mxu0 0.0
        %1908 = vmatpush1.xpose.msra.mxu0 0.0
        %1909 = vmatprep.subr.mxu0 0.0
        %1910 = vmatpush1.xpose.msra.mxu0 0.0
        %1911 = vmatprep.subr.mxu0 0.0
        %1912 = vmatpush1.xpose.msra.mxu0 0.0
        %1913 = vmatprep.subr.mxu0 0.0
        %1914 = vmatpush1.xpose.msra.mxu0 0.0
        %1915 = vmatprep.subr.mxu0 0.0
        %1916 = vmatpush1.xpose.msra.mxu0 0.0
        %1917 = vmatprep.subr.mxu0 0.0
        %1918 = vmatpush1.xpose.msra.mxu0 0.0
        %1919 = vmatprep.subr.mxu0 0.0
        %1920 = vmatpush1.xpose.msra.mxu0 0.0
        %1921 = vmatprep.subr.mxu0 0.0
        %1922 = vmatpush1.xpose.msra.mxu0 0.0
        %1923 = vmatprep.subr.mxu0 0.0
        %1924 = vmatpush1.xpose.msra.mxu0 0.0
        %1925 = vmatprep.subr.mxu0 0.0
        %1926 = vmatpush1.xpose.msra.mxu0 0.0
        %1927 = vmatprep.subr.mxu0 0.0
        %1928 = vmatpush1.xpose.msra.mxu0 0.0
        %1929 = vmatprep.subr.mxu0 0.0
        %1930 = vmatpush1.xpose.msra.mxu0 0.0
        %1931 = vmatprep.subr.mxu0 0.0
        %1932 = vmatpush1.xpose.msra.mxu0 0.0
        %1933 = vmatprep.mubr.f32.mxu0 0.0
        %1934 = vmatmul.mubr.f32.gmra.mrb[0].mxu0 %v1857
        %v1935 = vpop.f32.mrb[0].mxu0
        %v1936 = vadd.f32 0.0, %v1935
        %v1937 = vpop.f32.mrb[0].mxu0
        %1938 = vmatprep.mubr.f32.mxu0 0.0
        %1939 = vmatmul.mubr.f32.gmra.mrb[0].mxu0 %v1859
        %v1940 = vpop.f32.mrb[0].mxu0
        %v1941 = vadd.f32 0.0, %v1940
        %v1942 = vpop.f32.mrb[0].mxu0
        %1943 = vmatprep.mubr.f32.mxu0 0.0
        %1944 = vmatmul.mubr.f32.gmra.mrb[0].mxu0 %v1861
        %v1945 = vpop.f32.mrb[0].mxu0
        %v1946 = vadd.f32 0.0, %v1945
        %v1947 = vpop.f32.mrb[0].mxu0
        %1948 = vdwg.mxu0
        %1949 = vrot.lane.b32.xlu0 %v1717, 96
        %v1950 = vpop.permute.xlu0 %1949
        %1951 = vrot.lane.b32.xlu0 %v1719, 96
        %v1952 = vpop.permute.xlu0 %1951
        %1953 = vrot.lane.b32.xlu0 %v1721, 96
        %v1954 = vpop.permute.xlu0 %1953
        %v1955 = vsel %vm1758, %v1717, 0
        %v1957 = vsel %vm1758, %v1719, 0
        %v1959 = vsel %vm1758, %v1721, 0
        %v1961 = vsel %vm1758, %v1950, 0
        %v1963 = vsel %vm1758, %v1952, 0
        %v1965 = vsel %vm1758, %v1954, 0
        %1967 = vmatprep.subr.mxu0 0.0
        %1968 = vmatpush1.xpose.msra.mxu0 %v1961
        %1969 = vmatprep.subr.mxu0 0.0
        %1970 = vmatpush1.xpose.msra.mxu0 %v1963
        %1971 = vmatprep.subr.mxu0 0.0
        %1972 = vmatpush1.xpose.msra.mxu0 %v1965
        %1973 = vmatprep.subr.mxu0 0.0
        %1974 = vmatpush1.xpose.msra.mxu0 0.0
        %1975 = vmatprep.subr.mxu0 0.0
        %1976 = vmatpush1.xpose.msra.mxu0 0.0
        %1977 = vmatprep.subr.mxu0 0.0
        %1978 = vmatpush1.xpose.msra.mxu0 0.0
        %1979 = vmatprep.subr.mxu0 0.0
        %1980 = vmatpush1.xpose.msra.mxu0 0.0
        %1981 = vmatprep.subr.mxu0 0.0
        %1982 = vmatpush1.xpose.msra.mxu0 0.0
        %1983 = vmatprep.subr.mxu0 0.0
        %1984 = vmatpush1.xpose.msra.mxu0 0.0
        %1985 = vmatprep.subr.mxu0 0.0
        %1986 = vmatpush1.xpose.msra.mxu0 0.0
        %1987 = vmatprep.subr.mxu0 0.0
        %1988 = vmatpush1.xpose.msra.mxu0 0.0
        %1989 = vmatprep.subr.mxu0 0.0
        %1990 = vmatpush1.xpose.msra.mxu0 0.0
        %1991 = vmatprep.subr.mxu0 0.0
        %1992 = vmatpush1.xpose.msra.mxu0 0.0
        %1993 = vmatprep.subr.mxu0 0.0
        %1994 = vmatpush1.xpose.msra.mxu0 0.0
        %1995 = vmatprep.subr.mxu0 0.0
        %1996 = vmatpush1.xpose.msra.mxu0 0.0
        %1997 = vmatprep.subr.mxu0 0.0
        %1998 = vmatpush1.xpose.msra.mxu0 0.0
        %1999 = vmatprep.subr.mxu0 0.0
        %2000 = vmatpush1.xpose.msra.mxu0 0.0
        %2001 = vmatprep.subr.mxu0 0.0
        %2002 = vmatpush1.xpose.msra.mxu0 0.0
        %2003 = vmatprep.subr.mxu0 0.0
        %2004 = vmatpush1.xpose.msra.mxu0 0.0
        %2005 = vmatprep.subr.mxu0 0.0
        %2006 = vmatpush1.xpose.msra.mxu0 0.0
        %2007 = vmatprep.subr.mxu0 0.0
        %2008 = vmatpush1.xpose.msra.mxu0 0.0
        %2009 = vmatprep.subr.mxu0 0.0
        %2010 = vmatpush1.xpose.msra.mxu0 0.0
        %2011 = vmatprep.subr.mxu0 0.0
        %2012 = vmatpush1.xpose.msra.mxu0 0.0
        %2013 = vmatprep.subr.mxu0 0.0
        %2014 = vmatpush1.xpose.msra.mxu0 0.0
        %2015 = vmatprep.subr.mxu0 0.0
        %2016 = vmatpush1.xpose.msra.mxu0 0.0
        %2017 = vmatprep.subr.mxu0 0.0
        %2018 = vmatpush1.xpose.msra.mxu0 0.0
        %2019 = vmatprep.subr.mxu0 0.0
        %2020 = vmatpush1.xpose.msra.mxu0 0.0
        %2021 = vmatprep.subr.mxu0 0.0
        %2022 = vmatpush1.xpose.msra.mxu0 0.0
        %2023 = vmatprep.subr.mxu0 0.0
        %2024 = vmatpush1.xpose.msra.mxu0 0.0
        %2025 = vmatprep.subr.mxu0 0.0
        %2026 = vmatpush1.xpose.msra.mxu0 0.0
        %2027 = vmatprep.subr.mxu0 0.0
        %2028 = vmatpush1.xpose.msra.mxu0 0.0
        %2029 = vmatprep.subr.mxu0 0.0
        %2030 = vmatpush1.xpose.msra.mxu0 0.0
        %2031 = vmatprep.mubr.f32.mxu0 0.0
        %2032 = vmatmul.mubr.f32.gmra.mrb[0].mxu0 %v1955
        %v2033 = vpop.f32.mrb[0].mxu0
        %v2034 = vadd.f32 0.0, %v2033
        %v2035 = vpop.f32.mrb[0].mxu0
        %2036 = vmatprep.mubr.f32.mxu0 0.0
        %2037 = vmatmul.mubr.f32.gmra.mrb[0].mxu0 %v1957
        %v2038 = vpop.f32.mrb[0].mxu0
        %v2039 = vadd.f32 0.0, %v2038
        %v2040 = vpop.f32.mrb[0].mxu0
        %2041 = vmatprep.mubr.f32.mxu0 0.0
        %2042 = vmatmul.mubr.f32.gmra.mrb[0].mxu0 %v1959
        %v2043 = vpop.f32.mrb[0].mxu0
        %v2044 = vadd.f32 0.0, %v2043
        %v2045 = vpop.f32.mrb[0].mxu0
        %2046 = vdwg.mxu0
        %2047 = vrot.lane.b32.xlu0 %v1723, 96
        %v2048 = vpop.permute.xlu0 %2047
        %2049 = vrot.lane.b32.xlu0 %v1725, 96
        %v2050 = vpop.permute.xlu0 %2049
        %2051 = vrot.lane.b32.xlu0 %v1727, 96
        %v2052 = vpop.permute.xlu0 %2051
        %v2053 = vsel %vm1758, %v1723, 0
        %v2055 = vsel %vm1758, %v1725, 0
        %v2057 = vsel %vm1758, %v1727, 0
        %v2059 = vsel %vm1758, %v2048, 0
        %v2061 = vsel %vm1758, %v2050, 0
        %v2063 = vsel %vm1758, %v2052, 0
        %2065 = vmatprep.subr.mxu0 0.0
        %2066 = vmatpush1.xpose.msra.mxu0 %v2059
        %2067 = vmatprep.subr.mxu0 0.0
        %2068 = vmatpush1.xpose.msra.mxu0 %v2061
        %2069 = vmatprep.subr.mxu0 0.0
        %2070 = vmatpush1.xpose.msra.mxu0 %v2063
        %2071 = vmatprep.subr.mxu0 0.0
        %2072 = vmatpush1.xpose.msra.mxu0 0.0
        %2073 = vmatprep.subr.mxu0 0.0
        %2074 = vmatpush1.xpose.msra.mxu0 0.0
        %2075 = vmatprep.subr.mxu0 0.0
        %2076 = vmatpush1.xpose.msra.mxu0 0.0
        %2077 = vmatprep.subr.mxu0 0.0
        %2078 = vmatpush1.xpose.msra.mxu0 0.0
        %2079 = vmatprep.subr.mxu0 0.0
        %2080 = vmatpush1.xpose.msra.mxu0 0.0
        %2081 = vmatprep.subr.mxu0 0.0
        %2082 = vmatpush1.xpose.msra.mxu0 0.0
        %2083 = vmatprep.subr.mxu0 0.0
        %2084 = vmatpush1.xpose.msra.mxu0 0.0
        %2085 = vmatprep.subr.mxu0 0.0
        %2086 = vmatpush1.xpose.msra.mxu0 0.0
        %2087 = vmatprep.subr.mxu0 0.0
        %2088 = vmatpush1.xpose.msra.mxu0 0.0
        %2089 = vmatprep.subr.mxu0 0.0
        %2090 = vmatpush1.xpose.msra.mxu0 0.0
        %2091 = vmatprep.subr.mxu0 0.0
        %2092 = vmatpush1.xpose.msra.mxu0 0.0
        %2093 = vmatprep.subr.mxu0 0.0
        %2094 = vmatpush1.xpose.msra.mxu0 0.0
        %2095 = vmatprep.subr.mxu0 0.0
        %2096 = vmatpush1.xpose.msra.mxu0 0.0
        %2097 = vmatprep.subr.mxu0 0.0
        %2098 = vmatpush1.xpose.msra.mxu0 0.0
        %2099 = vmatprep.subr.mxu0 0.0
        %2100 = vmatpush1.xpose.msra.mxu0 0.0
        %2101 = vmatprep.subr.mxu0 0.0
        %2102 = vmatpush1.xpose.msra.mxu0 0.0
        %2103 = vmatprep.subr.mxu0 0.0
        %2104 = vmatpush1.xpose.msra.mxu0 0.0
        %2105 = vmatprep.subr.mxu0 0.0
        %2106 = vmatpush1.xpose.msra.mxu0 0.0
        %2107 = vmatprep.subr.mxu0 0.0
        %2108 = vmatpush1.xpose.msra.mxu0 0.0
        %2109 = vmatprep.subr.mxu0 0.0
        %2110 = vmatpush1.xpose.msra.mxu0 0.0
        %2111 = vmatprep.subr.mxu0 0.0
        %2112 = vmatpush1.xpose.msra.mxu0 0.0
        %2113 = vmatprep.subr.mxu0 0.0
        %2114 = vmatpush1.xpose.msra.mxu0 0.0
        %2115 = vmatprep.subr.mxu0 0.0
        %2116 = vmatpush1.xpose.msra.mxu0 0.0
        %2117 = vmatprep.subr.mxu0 0.0
        %2118 = vmatpush1.xpose.msra.mxu0 0.0
        %2119 = vmatprep.subr.mxu0 0.0
        %2120 = vmatpush1.xpose.msra.mxu0 0.0
        %2121 = vmatprep.subr.mxu0 0.0
        %2122 = vmatpush1.xpose.msra.mxu0 0.0
        %2123 = vmatprep.subr.mxu0 0.0
        %2124 = vmatpush1.xpose.msra.mxu0 0.0
        %2125 = vmatprep.subr.mxu0 0.0
        %2126 = vmatpush1.xpose.msra.mxu0 0.0
        %2127 = vmatprep.subr.mxu0 0.0
        %2128 = vmatpush1.xpose.msra.mxu0 0.0
        %2129 = vmatprep.mubr.f32.mxu0 0.0
        %2130 = vmatmul.mubr.f32.gmra.mrb[0].mxu0 %v2053
        %v2131 = vpop.f32.mrb[0].mxu0
        %v2132 = vadd.f32 0.0, %v2131
        %v2133 = vpop.f32.mrb[0].mxu0
        %2134 = vmatprep.mubr.f32.mxu0 0.0
        %2135 = vmatmul.mubr.f32.gmra.mrb[0].mxu0 %v2055
        %v2136 = vpop.f32.mrb[0].mxu0
        %v2137 = vadd.f32 0.0, %v2136
        %v2138 = vpop.f32.mrb[0].mxu0
        %2139 = vmatprep.mubr.f32.mxu0 0.0
        %2140 = vmatmul.mubr.f32.gmra.mrb[0].mxu0 %v2057
        %v2141 = vpop.f32.mrb[0].mxu0
        %v2142 = vadd.f32 0.0, %v2141
        %v2143 = vpop.f32.mrb[0].mxu0
        %2144 = vdwg.mxu0
        %2145 = vrot.lane.b32.xlu0 %v1729, 96
        %v2146 = vpop.permute.xlu0 %2145
        %2147 = vrot.lane.b32.xlu0 %v1731, 96
        %v2148 = vpop.permute.xlu0 %2147
        %2149 = vrot.lane.b32.xlu0 %v1733, 96
        %v2150 = vpop.permute.xlu0 %2149
        %v2151 = vsel %vm1758, %v1729, 0
        %v2153 = vsel %vm1758, %v1731, 0
        %v2155 = vsel %vm1758, %v1733, 0
        %v2157 = vsel %vm1758, %v2146, 0
        %v2159 = vsel %vm1758, %v2148, 0
        %v2161 = vsel %vm1758, %v2150, 0
        %2163 = vmatprep.subr.mxu0 0.0
        %2164 = vmatpush1.xpose.msra.mxu0 %v2157
        %2165 = vmatprep.subr.mxu0 0.0
        %2166 = vmatpush1.xpose.msra.mxu0 %v2159
        %2167 = vmatprep.subr.mxu0 0.0
        %2168 = vmatpush1.xpose.msra.mxu0 %v2161
        %2169 = vmatprep.subr.mxu0 0.0
        %2170 = vmatpush1.xpose.msra.mxu0 0.0
        %2171 = vmatprep.subr.mxu0 0.0
        %2172 = vmatpush1.xpose.msra.mxu0 0.0
        %2173 = vmatprep.subr.mxu0 0.0
        %2174 = vmatpush1.xpose.msra.mxu0 0.0
        %2175 = vmatprep.subr.mxu0 0.0
        %2176 = vmatpush1.xpose.msra.mxu0 0.0
        %2177 = vmatprep.subr.mxu0 0.0
        %2178 = vmatpush1.xpose.msra.mxu0 0.0
        %2179 = vmatprep.subr.mxu0 0.0
        %2180 = vmatpush1.xpose.msra.mxu0 0.0
        %2181 = vmatprep.subr.mxu0 0.0
        %2182 = vmatpush1.xpose.msra.mxu0 0.0
        %2183 = vmatprep.subr.mxu0 0.0
        %2184 = vmatpush1.xpose.msra.mxu0 0.0
        %2185 = vmatprep.subr.mxu0 0.0
        %2186 = vmatpush1.xpose.msra.mxu0 0.0
        %2187 = vmatprep.subr.mxu0 0.0
        %2188 = vmatpush1.xpose.msra.mxu0 0.0
        %2189 = vmatprep.subr.mxu0 0.0
        %2190 = vmatpush1.xpose.msra.mxu0 0.0
        %2191 = vmatprep.subr.mxu0 0.0
        %2192 = vmatpush1.xpose.msra.mxu0 0.0
        %2193 = vmatprep.subr.mxu0 0.0
        %2194 = vmatpush1.xpose.msra.mxu0 0.0
        %2195 = vmatprep.subr.mxu0 0.0
        %2196 = vmatpush1.xpose.msra.mxu0 0.0
        %2197 = vmatprep.subr.mxu0 0.0
        %2198 = vmatpush1.xpose.msra.mxu0 0.0
        %2199 = vmatprep.subr.mxu0 0.0
        %2200 = vmatpush1.xpose.msra.mxu0 0.0
        %2201 = vmatprep.subr.mxu0 0.0
        %2202 = vmatpush1.xpose.msra.mxu0 0.0
        %2203 = vmatprep.subr.mxu0 0.0
        %2204 = vmatpush1.xpose.msra.mxu0 0.0
        %2205 = vmatprep.subr.mxu0 0.0
        %2206 = vmatpush1.xpose.msra.mxu0 0.0
        %2207 = vmatprep.subr.mxu0 0.0
        %2208 = vmatpush1.xpose.msra.mxu0 0.0
        %2209 = vmatprep.subr.mxu0 0.0
        %2210 = vmatpush1.xpose.msra.mxu0 0.0
        %2211 = vmatprep.subr.mxu0 0.0
        %2212 = vmatpush1.xpose.msra.mxu0 0.0
        %2213 = vmatprep.subr.mxu0 0.0
        %2214 = vmatpush1.xpose.msra.mxu0 0.0
        %2215 = vmatprep.subr.mxu0 0.0
        %2216 = vmatpush1.xpose.msra.mxu0 0.0
        %2217 = vmatprep.subr.mxu0 0.0
        %2218 = vmatpush1.xpose.msra.mxu0 0.0
        %2219 = vmatprep.subr.mxu0 0.0
        %2220 = vmatpush1.xpose.msra.mxu0 0.0
        %2221 = vmatprep.subr.mxu0 0.0
        %2222 = vmatpush1.xpose.msra.mxu0 0.0
        %2223 = vmatprep.subr.mxu0 0.0
        %2224 = vmatpush1.xpose.msra.mxu0 0.0
        %2225 = vmatprep.subr.mxu0 0.0
        %2226 = vmatpush1.xpose.msra.mxu0 0.0
        %2227 = vmatprep.mubr.f32.mxu0 0.0
        %2228 = vmatmul.mubr.f32.gmra.mrb[0].mxu0 %v2151
        %v2229 = vpop.f32.mrb[0].mxu0
        %v2230 = vadd.f32 0.0, %v2229
        %v2231 = vpop.f32.mrb[0].mxu0
        %2232 = vmatprep.mubr.f32.mxu0 0.0
        %2233 = vmatmul.mubr.f32.gmra.mrb[0].mxu0 %v2153
        %v2234 = vpop.f32.mrb[0].mxu0
        %v2235 = vadd.f32 0.0, %v2234
        %v2236 = vpop.f32.mrb[0].mxu0
        %2237 = vmatprep.mubr.f32.mxu0 0.0
        %2238 = vmatmul.mubr.f32.gmra.mrb[0].mxu0 %v2155
        %v2239 = vpop.f32.mrb[0].mxu0
        %v2240 = vadd.f32 0.0, %v2239
        %v2241 = vpop.f32.mrb[0].mxu0
        %2242 = vdwg.mxu0
        %2243 = vrot.lane.b32.xlu0 %v1735, 96
        %v2244 = vpop.permute.xlu0 %2243
        %2245 = vrot.lane.b32.xlu0 %v1737, 96
        %v2246 = vpop.permute.xlu0 %2245
        %2247 = vrot.lane.b32.xlu0 %v1739, 96
        %v2248 = vpop.permute.xlu0 %2247
        %v2249 = vsel %vm1758, %v1735, 0
        %v2251 = vsel %vm1758, %v1737, 0
        %v2253 = vsel %vm1758, %v1739, 0
        %v2255 = vsel %vm1758, %v2244, 0
        %v2257 = vsel %vm1758, %v2246, 0
        %v2259 = vsel %vm1758, %v2248, 0
        %2261 = vmatprep.subr.mxu0 0.0
        %2262 = vmatpush1.xpose.msra.mxu0 %v2255
        %2263 = vmatprep.subr.mxu0 0.0
        %2264 = vmatpush1.xpose.msra.mxu0 %v2257
        %2265 = vmatprep.subr.mxu0 0.0
        %2266 = vmatpush1.xpose.msra.mxu0 %v2259
        %2267 = vmatprep.subr.mxu0 0.0
        %2268 = vmatpush1.xpose.msra.mxu0 0.0
        %2269 = vmatprep.subr.mxu0 0.0
        %2270 = vmatpush1.xpose.msra.mxu0 0.0
        %2271 = vmatprep.subr.mxu0 0.0
        %2272 = vmatpush1.xpose.msra.mxu0 0.0
        %2273 = vmatprep.subr.mxu0 0.0
        %2274 = vmatpush1.xpose.msra.mxu0 0.0
        %2275 = vmatprep.subr.mxu0 0.0
        %2276 = vmatpush1.xpose.msra.mxu0 0.0
        %2277 = vmatprep.subr.mxu0 0.0
        %2278 = vmatpush1.xpose.msra.mxu0 0.0
        %2279 = vmatprep.subr.mxu0 0.0
        %2280 = vmatpush1.xpose.msra.mxu0 0.0
        %2281 = vmatprep.subr.mxu0 0.0
        %2282 = vmatpush1.xpose.msra.mxu0 0.0
        %2283 = vmatprep.subr.mxu0 0.0
        %2284 = vmatpush1.xpose.msra.mxu0 0.0
        %2285 = vmatprep.subr.mxu0 0.0
        %2286 = vmatpush1.xpose.msra.mxu0 0.0
        %2287 = vmatprep.subr.mxu0 0.0
        %2288 = vmatpush1.xpose.msra.mxu0 0.0
        %2289 = vmatprep.subr.mxu0 0.0
        %2290 = vmatpush1.xpose.msra.mxu0 0.0
        %2291 = vmatprep.subr.mxu0 0.0
        %2292 = vmatpush1.xpose.msra.mxu0 0.0
        %2293 = vmatprep.subr.mxu0 0.0
        %2294 = vmatpush1.xpose.msra.mxu0 0.0
        %2295 = vmatprep.subr.mxu0 0.0
        %2296 = vmatpush1.xpose.msra.mxu0 0.0
        %2297 = vmatprep.subr.mxu0 0.0
        %2298 = vmatpush1.xpose.msra.mxu0 0.0
        %2299 = vmatprep.subr.mxu0 0.0
        %2300 = vmatpush1.xpose.msra.mxu0 0.0
        %2301 = vmatprep.subr.mxu0 0.0
        %2302 = vmatpush1.xpose.msra.mxu0 0.0
        %2303 = vmatprep.subr.mxu0 0.0
        %2304 = vmatpush1.xpose.msra.mxu0 0.0
        %2305 = vmatprep.subr.mxu0 0.0
        %2306 = vmatpush1.xpose.msra.mxu0 0.0
        %2307 = vmatprep.subr.mxu0 0.0
        %2308 = vmatpush1.xpose.msra.mxu0 0.0
        %2309 = vmatprep.subr.mxu0 0.0
        %2310 = vmatpush1.xpose.msra.mxu0 0.0
        %2311 = vmatprep.subr.mxu0 0.0
        %2312 = vmatpush1.xpose.msra.mxu0 0.0
        %2313 = vmatprep.subr.mxu0 0.0
        %2314 = vmatpush1.xpose.msra.mxu0 0.0
        %2315 = vmatprep.subr.mxu0 0.0
        %2316 = vmatpush1.xpose.msra.mxu0 0.0
        %2317 = vmatprep.subr.mxu0 0.0
        %2318 = vmatpush1.xpose.msra.mxu0 0.0
        %2319 = vmatprep.subr.mxu0 0.0
        %2320 = vmatpush1.xpose.msra.mxu0 0.0
        %2321 = vmatprep.subr.mxu0 0.0
        %2322 = vmatpush1.xpose.msra.mxu0 0.0
        %2323 = vmatprep.subr.mxu0 0.0
        %2324 = vmatpush1.xpose.msra.mxu0 0.0
        %2325 = vmatprep.mubr.f32.mxu0 0.0
        %2326 = vmatmul.mubr.f32.gmra.mrb[0].mxu0 %v2249
        %v2327 = vpop.f32.mrb[0].mxu0
        %v2328 = vadd.f32 0.0, %v2327
        %v2329 = vpop.f32.mrb[0].mxu0
        %2330 = vmatprep.mubr.f32.mxu0 0.0
        %2331 = vmatmul.mubr.f32.gmra.mrb[0].mxu0 %v2251
        %v2332 = vpop.f32.mrb[0].mxu0
        %v2333 = vadd.f32 0.0, %v2332
        %v2334 = vpop.f32.mrb[0].mxu0
        %2335 = vmatprep.mubr.f32.mxu0 0.0
        %2336 = vmatmul.mubr.f32.gmra.mrb[0].mxu0 %v2253
        %v2337 = vpop.f32.mrb[0].mxu0
        %v2338 = vadd.f32 0.0, %v2337
        %v2339 = vpop.f32.mrb[0].mxu0
        %2340 = vdwg.mxu0
        %2341 = vrot.lane.b32.xlu0 %v1741, 96
        %v2342 = vpop.permute.xlu0 %2341
        %2343 = vrot.lane.b32.xlu0 %v1743, 96
        %v2344 = vpop.permute.xlu0 %2343
        %2345 = vrot.lane.b32.xlu0 %v1745, 96
        %v2346 = vpop.permute.xlu0 %2345
        %v2347 = vsel %vm1758, %v1741, 0
        %v2349 = vsel %vm1758, %v1743, 0
        %v2351 = vsel %vm1758, %v1745, 0
        %v2353 = vsel %vm1758, %v2342, 0
        %v2355 = vsel %vm1758, %v2344, 0
        %v2357 = vsel %vm1758, %v2346, 0
        %2359 = vmatprep.subr.mxu0 0.0
        %2360 = vmatpush1.xpose.msra.mxu0 %v2353
        %2361 = vmatprep.subr.mxu0 0.0
        %2362 = vmatpush1.xpose.msra.mxu0 %v2355
        %2363 = vmatprep.subr.mxu0 0.0
        %2364 = vmatpush1.xpose.msra.mxu0 %v2357
        %2365 = vmatprep.subr.mxu0 0.0
        %2366 = vmatpush1.xpose.msra.mxu0 0.0
        %2367 = vmatprep.subr.mxu0 0.0
        %2368 = vmatpush1.xpose.msra.mxu0 0.0
        %2369 = vmatprep.subr.mxu0 0.0
        %2370 = vmatpush1.xpose.msra.mxu0 0.0
        %2371 = vmatprep.subr.mxu0 0.0
        %2372 = vmatpush1.xpose.msra.mxu0 0.0
        %2373 = vmatprep.subr.mxu0 0.0
        %2374 = vmatpush1.xpose.msra.mxu0 0.0
        %2375 = vmatprep.subr.mxu0 0.0
        %2376 = vmatpush1.xpose.msra.mxu0 0.0
        %2377 = vmatprep.subr.mxu0 0.0
        %2378 = vmatpush1.xpose.msra.mxu0 0.0
        %2379 = vmatprep.subr.mxu0 0.0
        %2380 = vmatpush1.xpose.msra.mxu0 0.0
        %2381 = vmatprep.subr.mxu0 0.0
        %2382 = vmatpush1.xpose.msra.mxu0 0.0
        %2383 = vmatprep.subr.mxu0 0.0
        %2384 = vmatpush1.xpose.msra.mxu0 0.0
        %2385 = vmatprep.subr.mxu0 0.0
        %2386 = vmatpush1.xpose.msra.mxu0 0.0
        %2387 = vmatprep.subr.mxu0 0.0
        %2388 = vmatpush1.xpose.msra.mxu0 0.0
        %2389 = vmatprep.subr.mxu0 0.0
        %2390 = vmatpush1.xpose.msra.mxu0 0.0
        %2391 = vmatprep.subr.mxu0 0.0
        %2392 = vmatpush1.xpose.msra.mxu0 0.0
        %2393 = vmatprep.subr.mxu0 0.0
        %2394 = vmatpush1.xpose.msra.mxu0 0.0
        %2395 = vmatprep.subr.mxu0 0.0
        %2396 = vmatpush1.xpose.msra.mxu0 0.0
        %2397 = vmatprep.subr.mxu0 0.0
        %2398 = vmatpush1.xpose.msra.mxu0 0.0
        %2399 = vmatprep.subr.mxu0 0.0
        %2400 = vmatpush1.xpose.msra.mxu0 0.0
        %2401 = vmatprep.subr.mxu0 0.0
        %2402 = vmatpush1.xpose.msra.mxu0 0.0
        %2403 = vmatprep.subr.mxu0 0.0
        %2404 = vmatpush1.xpose.msra.mxu0 0.0
        %2405 = vmatprep.subr.mxu0 0.0
        %2406 = vmatpush1.xpose.msra.mxu0 0.0
        %2407 = vmatprep.subr.mxu0 0.0
        %2408 = vmatpush1.xpose.msra.mxu0 0.0
        %2409 = vmatprep.subr.mxu0 0.0
        %2410 = vmatpush1.xpose.msra.mxu0 0.0
        %2411 = vmatprep.subr.mxu0 0.0
        %2412 = vmatpush1.xpose.msra.mxu0 0.0
        %2413 = vmatprep.subr.mxu0 0.0
        %2414 = vmatpush1.xpose.msra.mxu0 0.0
        %2415 = vmatprep.subr.mxu0 0.0
        %2416 = vmatpush1.xpose.msra.mxu0 0.0
        %2417 = vmatprep.subr.mxu0 0.0
        %2418 = vmatpush1.xpose.msra.mxu0 0.0
        %2419 = vmatprep.subr.mxu0 0.0
        %2420 = vmatpush1.xpose.msra.mxu0 0.0
        %2421 = vmatprep.subr.mxu0 0.0
        %2422 = vmatpush1.xpose.msra.mxu0 0.0
        %2423 = vmatprep.mubr.f32.mxu0 0.0
        %2424 = vmatmul.mubr.f32.gmra.mrb[0].mxu0 %v2347
        %v2425 = vpop.f32.mrb[0].mxu0
        %v2426 = vadd.f32 0.0, %v2425
        %v2427 = vpop.f32.mrb[0].mxu0
        %2428 = vmatprep.mubr.f32.mxu0 0.0
        %2429 = vmatmul.mubr.f32.gmra.mrb[0].mxu0 %v2349
        %v2430 = vpop.f32.mrb[0].mxu0
        %v2431 = vadd.f32 0.0, %v2430
        %v2432 = vpop.f32.mrb[0].mxu0
        %2433 = vmatprep.mubr.f32.mxu0 0.0
        %2434 = vmatmul.mubr.f32.gmra.mrb[0].mxu0 %v2351
        %v2435 = vpop.f32.mrb[0].mxu0
        %v2436 = vadd.f32 0.0, %v2435
        %v2437 = vpop.f32.mrb[0].mxu0
        %2438 = vdwg.mxu0
        %2439 = vrot.lane.b32.xlu0 %v1747, 96
        %v2440 = vpop.permute.xlu0 %2439
        %2441 = vrot.lane.b32.xlu0 %v1749, 96
        %v2442 = vpop.permute.xlu0 %2441
        %2443 = vrot.lane.b32.xlu0 %v1751, 96
        %v2444 = vpop.permute.xlu0 %2443
        %v2445 = vsel %vm1758, %v1747, 0
        %v2447 = vsel %vm1758, %v1749, 0
        %v2449 = vsel %vm1758, %v1751, 0
        %v2451 = vsel %vm1758, %v2440, 0
        %v2453 = vsel %vm1758, %v2442, 0
        %v2455 = vsel %vm1758, %v2444, 0
        %2457 = vmatprep.subr.mxu0 0.0
        %2458 = vmatpush1.xpose.msra.mxu0 %v2451
        %2459 = vmatprep.subr.mxu0 0.0
        %2460 = vmatpush1.xpose.msra.mxu0 %v2453
        %2461 = vmatprep.subr.mxu0 0.0
        %2462 = vmatpush1.xpose.msra.mxu0 %v2455
        %2463 = vmatprep.subr.mxu0 0.0
        %2464 = vmatpush1.xpose.msra.mxu0 0.0
        %2465 = vmatprep.subr.mxu0 0.0
        %2466 = vmatpush1.xpose.msra.mxu0 0.0
        %2467 = vmatprep.subr.mxu0 0.0
        %2468 = vmatpush1.xpose.msra.mxu0 0.0
        %2469 = vmatprep.subr.mxu0 0.0
        %2470 = vmatpush1.xpose.msra.mxu0 0.0
        %2471 = vmatprep.subr.mxu0 0.0
        %2472 = vmatpush1.xpose.msra.mxu0 0.0
        %2473 = vmatprep.subr.mxu0 0.0
        %2474 = vmatpush1.xpose.msra.mxu0 0.0
        %2475 = vmatprep.subr.mxu0 0.0
        %2476 = vmatpush1.xpose.msra.mxu0 0.0
        %2477 = vmatprep.subr.mxu0 0.0
        %2478 = vmatpush1.xpose.msra.mxu0 0.0
        %2479 = vmatprep.subr.mxu0 0.0
        %2480 = vmatpush1.xpose.msra.mxu0 0.0
        %2481 = vmatprep.subr.mxu0 0.0
        %2482 = vmatpush1.xpose.msra.mxu0 0.0
        %2483 = vmatprep.subr.mxu0 0.0
        %2484 = vmatpush1.xpose.msra.mxu0 0.0
        %2485 = vmatprep.subr.mxu0 0.0
        %2486 = vmatpush1.xpose.msra.mxu0 0.0
        %2487 = vmatprep.subr.mxu0 0.0
        %2488 = vmatpush1.xpose.msra.mxu0 0.0
        %2489 = vmatprep.subr.mxu0 0.0
        %2490 = vmatpush1.xpose.msra.mxu0 0.0
        %2491 = vmatprep.subr.mxu0 0.0
        %2492 = vmatpush1.xpose.msra.mxu0 0.0
        %2493 = vmatprep.subr.mxu0 0.0
        %2494 = vmatpush1.xpose.msra.mxu0 0.0
        %2495 = vmatprep.subr.mxu0 0.0
        %2496 = vmatpush1.xpose.msra.mxu0 0.0
        %2497 = vmatprep.subr.mxu0 0.0
        %2498 = vmatpush1.xpose.msra.mxu0 0.0
        %2499 = vmatprep.subr.mxu0 0.0
        %2500 = vmatpush1.xpose.msra.mxu0 0.0
        %2501 = vmatprep.subr.mxu0 0.0
        %2502 = vmatpush1.xpose.msra.mxu0 0.0
        %2503 = vmatprep.subr.mxu0 0.0
        %2504 = vmatpush1.xpose.msra.mxu0 0.0
        %2505 = vmatprep.subr.mxu0 0.0
        %2506 = vmatpush1.xpose.msra.mxu0 0.0
        %2507 = vmatprep.subr.mxu0 0.0
        %2508 = vmatpush1.xpose.msra.mxu0 0.0
        %2509 = vmatprep.subr.mxu0 0.0
        %2510 = vmatpush1.xpose.msra.mxu0 0.0
        %2511 = vmatprep.subr.mxu0 0.0
        %2512 = vmatpush1.xpose.msra.mxu0 0.0
        %2513 = vmatprep.subr.mxu0 0.0
        %2514 = vmatpush1.xpose.msra.mxu0 0.0
        %2515 = vmatprep.subr.mxu0 0.0
        %2516 = vmatpush1.xpose.msra.mxu0 0.0
        %2517 = vmatprep.subr.mxu0 0.0
        %2518 = vmatpush1.xpose.msra.mxu0 0.0
        %2519 = vmatprep.subr.mxu0 0.0
        %2520 = vmatpush1.xpose.msra.mxu0 0.0
        %2521 = vmatprep.mubr.f32.mxu0 0.0
        %2522 = vmatmul.mubr.f32.gmra.mrb[0].mxu0 %v2445
        %v2523 = vpop.f32.mrb[0].mxu0
        %v2524 = vadd.f32 0.0, %v2523
        %v2525 = vpop.f32.mrb[0].mxu0
        %2526 = vmatprep.mubr.f32.mxu0 0.0
        %2527 = vmatmul.mubr.f32.gmra.mrb[0].mxu0 %v2447
        %v2528 = vpop.f32.mrb[0].mxu0
        %v2529 = vadd.f32 0.0, %v2528
        %v2530 = vpop.f32.mrb[0].mxu0
        %2531 = vmatprep.mubr.f32.mxu0 0.0
        %2532 = vmatmul.mubr.f32.gmra.mrb[0].mxu0 %v2449
        %v2533 = vpop.f32.mrb[0].mxu0
        %v2534 = vadd.f32 0.0, %v2533
        %v2535 = vpop.f32.mrb[0].mxu0
        %2536 = vdwg.mxu0
        %v2537 = vmul.f32 %v1838, 0.35355338
        %v2538 = vmul.f32 %v1843, 0.35355338
        %v2539 = vmul.f32 %v1848, 0.35355338
        %v2540 = vmul.f32 %v1936, 0.35355338
        %v2541 = vmul.f32 %v1941, 0.35355338
        %v2542 = vmul.f32 %v1946, 0.35355338
        %v2543 = vmul.f32 %v2034, 0.35355338
        %v2544 = vmul.f32 %v2039, 0.35355338
        %v2545 = vmul.f32 %v2044, 0.35355338
        %v2546 = vmul.f32 %v2132, 0.35355338
        %v2547 = vmul.f32 %v2137, 0.35355338
        %v2548 = vmul.f32 %v2142, 0.35355338
        %v2549 = vmul.f32 %v2230, 0.35355338
        %v2550 = vmul.f32 %v2235, 0.35355338
        %v2551 = vmul.f32 %v2240, 0.35355338
        %v2552 = vmul.f32 %v2328, 0.35355338
        %v2553 = vmul.f32 %v2333, 0.35355338
        %v2554 = vmul.f32 %v2338, 0.35355338
        %v2555 = vmul.f32 %v2426, 0.35355338
        %v2556 = vmul.f32 %v2431, 0.35355338
        %v2557 = vmul.f32 %v2436, 0.35355338
        %v2558 = vmul.f32 %v2524, 0.35355338
        %v2559 = vmul.f32 %v2529, 0.35355338
        %v2560 = vmul.f32 %v2534, 0.35355338
        %v2561 = vld [vmem:[%s7] sm:$0x1]
        %v2563 = vlaneseq
        %v2564 = vshrl.u32 %v2563, 7
        %v2565 = vsub.s32 0, %v2564
        %v2566 = vrot.slane %v2561, %v2565
        %v2568 = vadd.f32 %v2537, %v2566
        %v2569 = vadd.f32 %v2538, %v2566
        %v2570 = vadd.f32 %v2539, %v2566
        %v2571 = vadd.f32 %v2540, %v2566
        %v2572 = vadd.f32 %v2541, %v2566
        %v2573 = vadd.f32 %v2542, %v2566
        %v2574 = vadd.f32 %v2543, %v2566
        %v2575 = vadd.f32 %v2544, %v2566
        %v2576 = vadd.f32 %v2545, %v2566
        %v2577 = vadd.f32 %v2546, %v2566
        %v2578 = vadd.f32 %v2547, %v2566
        %v2579 = vadd.f32 %v2548, %v2566
        %v2580 = vadd.f32 %v2549, %v2566
        %v2581 = vadd.f32 %v2550, %v2566
        %v2582 = vadd.f32 %v2551, %v2566
        %v2583 = vadd.f32 %v2552, %v2566
        %v2584 = vadd.f32 %v2553, %v2566
        %v2585 = vadd.f32 %v2554, %v2566
        %v2586 = vadd.f32 %v2555, %v2566
        %v2587 = vadd.f32 %v2556, %v2566
        %v2588 = vadd.f32 %v2557, %v2566
        %v2589 = vadd.f32 %v2558, %v2566
        %v2590 = vadd.f32 %v2559, %v2566
        %v2591 = vadd.f32 %v2560, %v2566
        %vm2592 = vcmask 195584
        %v2593 = vsel %vm2592, %v2568, -inf
        %2594 = vmax.xlane.f32.xlu0 %v2593
        %v2595 = vpop.xlane.xlu0 %2594
        %v2596 = vsel %vm2592, %v2569, -inf
        %2597 = vmax.xlane.f32.xlu0 %v2596
        %v2598 = vpop.xlane.xlu0 %2597
        %v2599 = vsel %vm2592, %v2570, -inf
        %2600 = vmax.xlane.f32.xlu0 %v2599
        %v2601 = vpop.xlane.xlu0 %2600
        %v2602 = vsel %vm2592, %v2571, -inf
        %2603 = vmax.xlane.f32.xlu0 %v2602
        %v2604 = vpop.xlane.xlu0 %2603
        %v2605 = vsel %vm2592, %v2572, -inf
        %2606 = vmax.xlane.f32.xlu0 %v2605
        %v2607 = vpop.xlane.xlu0 %2606
        %v2608 = vsel %vm2592, %v2573, -inf
        %2609 = vmax.xlane.f32.xlu0 %v2608
        %v2610 = vpop.xlane.xlu0 %2609
        %v2611 = vsel %vm2592, %v2574, -inf
        %2612 = vmax.xlane.f32.xlu0 %v2611
        %v2613 = vpop.xlane.xlu0 %2612
        %v2614 = vsel %vm2592, %v2575, -inf
        %2615 = vmax.xlane.f32.xlu0 %v2614
        %v2616 = vpop.xlane.xlu0 %2615
        %v2617 = vsel %vm2592, %v2576, -inf
        %2618 = vmax.xlane.f32.xlu0 %v2617
        %v2619 = vpop.xlane.xlu0 %2618
        %v2620 = vsel %vm2592, %v2577, -inf
        %2621 = vmax.xlane.f32.xlu0 %v2620
        %v2622 = vpop.xlane.xlu0 %2621
        %v2623 = vsel %vm2592, %v2578, -inf
        %2624 = vmax.xlane.f32.xlu0 %v2623
        %v2625 = vpop.xlane.xlu0 %2624
        %v2626 = vsel %vm2592, %v2579, -inf
        %2627 = vmax.xlane.f32.xlu0 %v2626
        %v2628 = vpop.xlane.xlu0 %2627
        %v2629 = vsel %vm2592, %v2580, -inf
        %2630 = vmax.xlane.f32.xlu0 %v2629
        %v2631 = vpop.xlane.xlu0 %2630
        %v2632 = vsel %vm2592, %v2581, -inf
        %2633 = vmax.xlane.f32.xlu0 %v2632
        %v2634 = vpop.xlane.xlu0 %2633
        %v2635 = vsel %vm2592, %v2582, -inf
        %2636 = vmax.xlane.f32.xlu0 %v2635
        %v2637 = vpop.xlane.xlu0 %2636
        %v2638 = vsel %vm2592, %v2583, -inf
        %2639 = vmax.xlane.f32.xlu0 %v2638
        %v2640 = vpop.xlane.xlu0 %2639
        %v2641 = vsel %vm2592, %v2584, -inf
        %2642 = vmax.xlane.f32.xlu0 %v2641
        %v2643 = vpop.xlane.xlu0 %2642
        %v2644 = vsel %vm2592, %v2585, -inf
        %2645 = vmax.xlane.f32.xlu0 %v2644
        %v2646 = vpop.xlane.xlu0 %2645
        %v2647 = vsel %vm2592, %v2586, -inf
        %2648 = vmax.xlane.f32.xlu0 %v2647
        %v2649 = vpop.xlane.xlu0 %2648
        %v2650 = vsel %vm2592, %v2587, -inf
        %2651 = vmax.xlane.f32.xlu0 %v2650
        %v2652 = vpop.xlane.xlu0 %2651
        %v2653 = vsel %vm2592, %v2588, -inf
        %2654 = vmax.xlane.f32.xlu0 %v2653
        %v2655 = vpop.xlane.xlu0 %2654
        %v2656 = vsel %vm2592, %v2589, -inf
        %2657 = vmax.xlane.f32.xlu0 %v2656
        %v2658 = vpop.xlane.xlu0 %2657
        %v2659 = vsel %vm2592, %v2590, -inf
        %2660 = vmax.xlane.f32.xlu0 %v2659
        %v2661 = vpop.xlane.xlu0 %2660
        %v2662 = vsel %vm2592, %v2591, -inf
        %2663 = vmax.xlane.f32.xlu0 %v2662
        %v2664 = vpop.xlane.xlu0 %2663
        %v2665 = vsub.f32 %v2568, %v2595
        %v2666 = vsub.f32 %v2569, %v2598
        %v2667 = vsub.f32 %v2570, %v2601
        %v2668 = vsub.f32 %v2571, %v2604
        %v2669 = vsub.f32 %v2572, %v2607
        %v2670 = vsub.f32 %v2573, %v2610
        %v2671 = vsub.f32 %v2574, %v2613
        %v2672 = vsub.f32 %v2575, %v2616
        %v2673 = vsub.f32 %v2576, %v2619
        %v2674 = vsub.f32 %v2577, %v2622
        %v2675 = vsub.f32 %v2578, %v2625
        %v2676 = vsub.f32 %v2579, %v2628
        %v2677 = vsub.f32 %v2580, %v2631
        %v2678 = vsub.f32 %v2581, %v2634
        %v2679 = vsub.f32 %v2582, %v2637
        %v2680 = vsub.f32 %v2583, %v2640
        %v2681 = vsub.f32 %v2584, %v2643
        %v2682 = vsub.f32 %v2585, %v2646
        %v2683 = vsub.f32 %v2586, %v2649
        %v2684 = vsub.f32 %v2587, %v2652
        %v2685 = vsub.f32 %v2588, %v2655
        %v2686 = vsub.f32 %v2589, %v2658
        %v2687 = vsub.f32 %v2590, %v2661
        %v2688 = vsub.f32 %v2591, %v2664
        %v2689 = vmul.f32 %v2665, 1.442695
        %v2690 = vpow.pop %v2689
        %v2691 = vmul.f32 %v2666, 1.442695
        %v2692 = vpow.pop %v2691
        %v2693 = vmul.f32 %v2667, 1.442695
        %v2694 = vpow.pop %v2693
        %v2695 = vmul.f32 %v2668, 1.442695
        %v2696 = vpow.pop %v2695
        %v2697 = vmul.f32 %v2669, 1.442695
        %v2698 = vpow.pop %v2697
        %v2699 = vmul.f32 %v2670, 1.442695
        %v2700 = vpow.pop %v2699
        %v2701 = vmul.f32 %v2671, 1.442695
        %v2702 = vpow.pop %v2701
        %v2703 = vmul.f32 %v2672, 1.442695
        %v2704 = vpow.pop %v2703
        %v2705 = vmul.f32 %v2673, 1.442695
        %v2706 = vpow.pop %v2705
        %v2707 = vmul.f32 %v2674, 1.442695
        %v2708 = vpow.pop %v2707
        %v2709 = vmul.f32 %v2675, 1.442695
        %v2710 = vpow.pop %v2709
        %v2711 = vmul.f32 %v2676, 1.442695
        %v2712 = vpow.pop %v2711
        %v2713 = vmul.f32 %v2677, 1.442695
        %v2714 = vpow.pop %v2713
        %v2715 = vmul.f32 %v2678, 1.442695
        %v2716 = vpow.pop %v2715
        %v2717 = vmul.f32 %v2679, 1.442695
        %v2718 = vpow.pop %v2717
        %v2719 = vmul.f32 %v2680, 1.442695
        %v2720 = vpow.pop %v2719
        %v2721 = vmul.f32 %v2681, 1.442695
        %v2722 = vpow.pop %v2721
        %v2723 = vmul.f32 %v2682, 1.442695
        %v2724 = vpow.pop %v2723
        %v2725 = vmul.f32 %v2683, 1.442695
        %v2726 = vpow.pop %v2725
        %v2727 = vmul.f32 %v2684, 1.442695
        %v2728 = vpow.pop %v2727
        %v2729 = vmul.f32 %v2685, 1.442695
        %v2730 = vpow.pop %v2729
        %v2731 = vmul.f32 %v2686, 1.442695
        %v2732 = vpow.pop %v2731
        %v2733 = vmul.f32 %v2687, 1.442695
        %v2734 = vpow.pop %v2733
        %v2735 = vmul.f32 %v2688, 1.442695
        %v2736 = vpow.pop %v2735
        %v2737 = vsel %vm2592, %v2690, 0.0
        %2738 = vadd.xlane.f32.xlu0 %v2737
        %v2739 = vpop.xlane.xlu0 %2738
        %v2740 = vsel %vm2592, %v2692, 0.0
        %2741 = vadd.xlane.f32.xlu0 %v2740
        %v2742 = vpop.xlane.xlu0 %2741
        %v2743 = vsel %vm2592, %v2694, 0.0
        %2744 = vadd.xlane.f32.xlu0 %v2743
        %v2745 = vpop.xlane.xlu0 %2744
        %v2746 = vsel %vm2592, %v2696, 0.0
        %2747 = vadd.xlane.f32.xlu0 %v2746
        %v2748 = vpop.xlane.xlu0 %2747
        %v2749 = vsel %vm2592, %v2698, 0.0
        %2750 = vadd.xlane.f32.xlu0 %v2749
        %v2751 = vpop.xlane.xlu0 %2750
        %v2752 = vsel %vm2592, %v2700, 0.0
        %2753 = vadd.xlane.f32.xlu0 %v2752
        %v2754 = vpop.xlane.xlu0 %2753
        %v2755 = vsel %vm2592, %v2702, 0.0
        %2756 = vadd.xlane.f32.xlu0 %v2755
        %v2757 = vpop.xlane.xlu0 %2756
        %v2758 = vsel %vm2592, %v2704, 0.0
        %2759 = vadd.xlane.f32.xlu0 %v2758
        %v2760 = vpop.xlane.xlu0 %2759
        %v2761 = vsel %vm2592, %v2706, 0.0
        %2762 = vadd.xlane.f32.xlu0 %v2761
        %v2763 = vpop.xlane.xlu0 %2762
        %v2764 = vsel %vm2592, %v2708, 0.0
        %2765 = vadd.xlane.f32.xlu0 %v2764
        %v2766 = vpop.xlane.xlu0 %2765
        %v2767 = vsel %vm2592, %v2710, 0.0
        %2768 = vadd.xlane.f32.xlu0 %v2767
        %v2769 = vpop.xlane.xlu0 %2768
        %v2770 = vsel %vm2592, %v2712, 0.0
        %2771 = vadd.xlane.f32.xlu0 %v2770
        %v2772 = vpop.xlane.xlu0 %2771
        %v2773 = vsel %vm2592, %v2714, 0.0
        %2774 = vadd.xlane.f32.xlu0 %v2773
        %v2775 = vpop.xlane.xlu0 %2774
        %v2776 = vsel %vm2592, %v2716, 0.0
        %2777 = vadd.xlane.f32.xlu0 %v2776
        %v2778 = vpop.xlane.xlu0 %2777
        %v2779 = vsel %vm2592, %v2718, 0.0
        %2780 = vadd.xlane.f32.xlu0 %v2779
        %v2781 = vpop.xlane.xlu0 %2780
        %v2782 = vsel %vm2592, %v2720, 0.0
        %2783 = vadd.xlane.f32.xlu0 %v2782
        %v2784 = vpop.xlane.xlu0 %2783
        %v2785 = vsel %vm2592, %v2722, 0.0
        %2786 = vadd.xlane.f32.xlu0 %v2785
        %v2787 = vpop.xlane.xlu0 %2786
        %v2788 = vsel %vm2592, %v2724, 0.0
        %2789 = vadd.xlane.f32.xlu0 %v2788
        %v2790 = vpop.xlane.xlu0 %2789
        %v2791 = vsel %vm2592, %v2726, 0.0
        %2792 = vadd.xlane.f32.xlu0 %v2791
        %v2793 = vpop.xlane.xlu0 %2792
        %v2794 = vsel %vm2592, %v2728, 0.0
        %2795 = vadd.xlane.f32.xlu0 %v2794
        %v2796 = vpop.xlane.xlu0 %2795
        %v2797 = vsel %vm2592, %v2730, 0.0
        %2798 = vadd.xlane.f32.xlu0 %v2797
        %v2799 = vpop.xlane.xlu0 %2798
        %v2800 = vsel %vm2592, %v2732, 0.0
        %2801 = vadd.xlane.f32.xlu0 %v2800
        %v2802 = vpop.xlane.xlu0 %2801
        %v2803 = vsel %vm2592, %v2734, 0.0
        %2804 = vadd.xlane.f32.xlu0 %v2803
        %v2805 = vpop.xlane.xlu0 %2804
        %v2806 = vsel %vm2592, %v2736, 0.0
        %2807 = vadd.xlane.f32.xlu0 %v2806
        %v2808 = vpop.xlane.xlu0 %2807
        %v2809 = vrcp.pop %v2739
        %v2810 = vrcp.pop %v2742
        %v2811 = vrcp.pop %v2745
        %v2812 = vrcp.pop %v2748
        %v2813 = vrcp.pop %v2751
        %v2814 = vrcp.pop %v2754
        %v2815 = vrcp.pop %v2757
        %v2816 = vrcp.pop %v2760
        %v2817 = vrcp.pop %v2763
        %v2818 = vrcp.pop %v2766
        %v2819 = vrcp.pop %v2769
        %v2820 = vrcp.pop %v2772
        %v2821 = vrcp.pop %v2775
        %v2822 = vrcp.pop %v2778
        %v2823 = vrcp.pop %v2781
        %v2824 = vrcp.pop %v2784
        %v2825 = vrcp.pop %v2787
        %v2826 = vrcp.pop %v2790
        %v2827 = vrcp.pop %v2793
        %v2828 = vrcp.pop %v2796
        %v2829 = vrcp.pop %v2799
        %v2830 = vrcp.pop %v2802
        %v2831 = vrcp.pop %v2805
        %v2832 = vrcp.pop %v2808
        %v2833 = vmul.f32 %v2690, %v2809
        %v2834 = vmul.f32 %v2692, %v2810
        %v2835 = vmul.f32 %v2694, %v2811
        %v2836 = vmul.f32 %v2696, %v2812
        %v2837 = vmul.f32 %v2698, %v2813
        %v2838 = vmul.f32 %v2700, %v2814
        %v2839 = vmul.f32 %v2702, %v2815
        %v2840 = vmul.f32 %v2704, %v2816
        %v2841 = vmul.f32 %v2706, %v2817
        %v2842 = vmul.f32 %v2708, %v2818
        %v2843 = vmul.f32 %v2710, %v2819
        %v2844 = vmul.f32 %v2712, %v2820
        %v2845 = vmul.f32 %v2714, %v2821
        %v2846 = vmul.f32 %v2716, %v2822
        %v2847 = vmul.f32 %v2718, %v2823
        %v2848 = vmul.f32 %v2720, %v2824
        %v2849 = vmul.f32 %v2722, %v2825
        %v2850 = vmul.f32 %v2724, %v2826
        %v2851 = vmul.f32 %v2726, %v2827
        %v2852 = vmul.f32 %v2728, %v2828
        %v2853 = vmul.f32 %v2730, %v2829
        %v2854 = vmul.f32 %v2732, %v2830
        %v2855 = vmul.f32 %v2734, %v2831
        %v2856 = vmul.f32 %v2736, %v2832
        %2857 = vrot.lane.b32.xlu0 %v1688, 64
        %v2858 = vpop.permute.xlu0 %2857
        %2859 = vrot.lane.b32.xlu0 %v1691, 64
        %v2860 = vpop.permute.xlu0 %2859
        %2861 = vrot.lane.b32.xlu0 %v1696, 64
        %v2862 = vpop.permute.xlu0 %2861
        %v2867 = vsel %vm2592, %v2833, 0
        %v2870 = vsel %vm2592, %v2834, 0
        %v2873 = vsel %vm2592, %v2835, 0
        %2875 = vmatprep.subr.mxu0 0.0
        %2876 = vmatpush1.msra.mxu0 %v2858
        %2877 = vmatprep.subr.mxu0 0.0
        %2878 = vmatpush1.msra.mxu0 %v2860
        %2879 = vmatprep.subr.mxu0 0.0
        %2880 = vmatpush1.msra.mxu0 %v2862
        %2881 = vmatprep.subr.mxu0 0.0
        %2882 = vmatpush1.msra.mxu0 0.0
        %2883 = vmatprep.subr.mxu0 0.0
        %2884 = vmatpush1.msra.mxu0 0.0
        %2885 = vmatprep.subr.mxu0 0.0
        %2886 = vmatpush1.msra.mxu0 0.0
        %2887 = vmatprep.subr.mxu0 0.0
        %2888 = vmatpush1.msra.mxu0 0.0
        %2889 = vmatprep.subr.mxu0 0.0
        %2890 = vmatpush1.msra.mxu0 0.0
        %2891 = vmatprep.subr.mxu0 0.0
        %2892 = vmatpush1.msra.mxu0 0.0
        %2893 = vmatprep.subr.mxu0 0.0
        %2894 = vmatpush1.msra.mxu0 0.0
        %2895 = vmatprep.subr.mxu0 0.0
        %2896 = vmatpush1.msra.mxu0 0.0
        %2897 = vmatprep.subr.mxu0 0.0
        %2898 = vmatpush1.msra.mxu0 0.0
        %2899 = vmatprep.subr.mxu0 0.0
        %2900 = vmatpush1.msra.mxu0 0.0
        %2901 = vmatprep.subr.mxu0 0.0
        %2902 = vmatpush1.msra.mxu0 0.0
        %2903 = vmatprep.subr.mxu0 0.0
        %2904 = vmatpush1.msra.mxu0 0.0
        %2905 = vmatprep.subr.mxu0 0.0
        %2906 = vmatpush1.msra.mxu0 0.0
        %2907 = vmatprep.subr.mxu0 0.0
        %2908 = vmatpush1.msra.mxu0 0.0
        %2909 = vmatprep.subr.mxu0 0.0
        %2910 = vmatpush1.msra.mxu0 0.0
        %2911 = vmatprep.subr.mxu0 0.0
        %2912 = vmatpush1.msra.mxu0 0.0
        %2913 = vmatprep.subr.mxu0 0.0
        %2914 = vmatpush1.msra.mxu0 0.0
        %2915 = vmatprep.subr.mxu0 0.0
        %2916 = vmatpush1.msra.mxu0 0.0
        %2917 = vmatprep.subr.mxu0 0.0
        %2918 = vmatpush1.msra.mxu0 0.0
        %2919 = vmatprep.subr.mxu0 0.0
        %2920 = vmatpush1.msra.mxu0 0.0
        %2921 = vmatprep.subr.mxu0 0.0
        %2922 = vmatpush1.msra.mxu0 0.0
        %2923 = vmatprep.subr.mxu0 0.0
        %2924 = vmatpush1.msra.mxu0 0.0
        %2925 = vmatprep.subr.mxu0 0.0
        %2926 = vmatpush1.msra.mxu0 0.0
        %2927 = vmatprep.subr.mxu0 0.0
        %2928 = vmatpush1.msra.mxu0 0.0
        %2929 = vmatprep.subr.mxu0 0.0
        %2930 = vmatpush1.msra.mxu0 0.0
        %2931 = vmatprep.subr.mxu0 0.0
        %2932 = vmatpush1.msra.mxu0 0.0
        %2933 = vmatprep.subr.mxu0 0.0
        %2934 = vmatpush1.msra.mxu0 0.0
        %2935 = vmatprep.subr.mxu0 0.0
        %2936 = vmatpush1.msra.mxu0 0.0
        %2937 = vmatprep.subr.mxu0 0.0
        %2938 = vmatpush1.msra.mxu0 0.0
        %2939 = vmatprep.mubr.f32.mxu0 0.0
        %2940 = vmatmul.mubr.f32.gmra.mrb[0].mxu0 %v2867
        %v2941 = vpop.f32.mrb[0].mxu0
        %v2942 = vadd.f32 0.0, %v2941
        %v2943 = vpop.f32.mrb[0].mxu0
        %2944 = vmatprep.mubr.f32.mxu0 0.0
        %2945 = vmatmul.mubr.f32.gmra.mrb[0].mxu0 %v2870
        %v2946 = vpop.f32.mrb[0].mxu0
        %v2947 = vadd.f32 0.0, %v2946
        %v2948 = vpop.f32.mrb[0].mxu0
        %2949 = vmatprep.mubr.f32.mxu0 0.0
        %2950 = vmatmul.mubr.f32.gmra.mrb[0].mxu0 %v2873
        %v2951 = vpop.f32.mrb[0].mxu0
        %v2952 = vadd.f32 0.0, %v2951
        %v2953 = vpop.f32.mrb[0].mxu0
        %2954 = vdwg.mxu0
        %2955 = vrot.lane.b32.xlu0 %v1699, 64
        %v2956 = vpop.permute.xlu0 %2955
        %2957 = vrot.lane.b32.xlu0 %v1704, 64
        %v2958 = vpop.permute.xlu0 %2957
        %2959 = vrot.lane.b32.xlu0 %v1707, 64
        %v2960 = vpop.permute.xlu0 %2959
        %v2965 = vsel %vm2592, %v2836, 0
        %v2968 = vsel %vm2592, %v2837, 0
        %v2971 = vsel %vm2592, %v2838, 0
        %2973 = vmatprep.subr.mxu0 0.0
        %2974 = vmatpush1.msra.mxu0 %v2956
        %2975 = vmatprep.subr.mxu0 0.0
        %2976 = vmatpush1.msra.mxu0 %v2958
        %2977 = vmatprep.subr.mxu0 0.0
        %2978 = vmatpush1.msra.mxu0 %v2960
        %2979 = vmatprep.subr.mxu0 0.0
        %2980 = vmatpush1.msra.mxu0 0.0
        %2981 = vmatprep.subr.mxu0 0.0
        %2982 = vmatpush1.msra.mxu0 0.0
        %2983 = vmatprep.subr.mxu0 0.0
        %2984 = vmatpush1.msra.mxu0 0.0
        %2985 = vmatprep.subr.mxu0 0.0
        %2986 = vmatpush1.msra.mxu0 0.0
        %2987 = vmatprep.subr.mxu0 0.0
        %2988 = vmatpush1.msra.mxu0 0.0
        %2989 = vmatprep.subr.mxu0 0.0
        %2990 = vmatpush1.msra.mxu0 0.0
        %2991 = vmatprep.subr.mxu0 0.0
        %2992 = vmatpush1.msra.mxu0 0.0
        %2993 = vmatprep.subr.mxu0 0.0
        %2994 = vmatpush1.msra.mxu0 0.0
        %2995 = vmatprep.subr.mxu0 0.0
        %2996 = vmatpush1.msra.mxu0 0.0
        %2997 = vmatprep.subr.mxu0 0.0
        %2998 = vmatpush1.msra.mxu0 0.0
        %2999 = vmatprep.subr.mxu0 0.0
        %3000 = vmatpush1.msra.mxu0 0.0
        %3001 = vmatprep.subr.mxu0 0.0
        %3002 = vmatpush1.msra.mxu0 0.0
        %3003 = vmatprep.subr.mxu0 0.0
        %3004 = vmatpush1.msra.mxu0 0.0
        %3005 = vmatprep.subr.mxu0 0.0
        %3006 = vmatpush1.msra.mxu0 0.0
        %3007 = vmatprep.subr.mxu0 0.0
        %3008 = vmatpush1.msra.mxu0 0.0
        %3009 = vmatprep.subr.mxu0 0.0
        %3010 = vmatpush1.msra.mxu0 0.0
        %3011 = vmatprep.subr.mxu0 0.0
        %3012 = vmatpush1.msra.mxu0 0.0
        %3013 = vmatprep.subr.mxu0 0.0
        %3014 = vmatpush1.msra.mxu0 0.0
        %3015 = vmatprep.subr.mxu0 0.0
        %3016 = vmatpush1.msra.mxu0 0.0
        %3017 = vmatprep.subr.mxu0 0.0
        %3018 = vmatpush1.msra.mxu0 0.0
        %3019 = vmatprep.subr.mxu0 0.0
        %3020 = vmatpush1.msra.mxu0 0.0
        %3021 = vmatprep.subr.mxu0 0.0
        %3022 = vmatpush1.msra.mxu0 0.0
        %3023 = vmatprep.subr.mxu0 0.0
        %3024 = vmatpush1.msra.mxu0 0.0
        %3025 = vmatprep.subr.mxu0 0.0
        %3026 = vmatpush1.msra.mxu0 0.0
        %3027 = vmatprep.subr.mxu0 0.0
        %3028 = vmatpush1.msra.mxu0 0.0
        %3029 = vmatprep.subr.mxu0 0.0
        %3030 = vmatpush1.msra.mxu0 0.0
        %3031 = vmatprep.subr.mxu0 0.0
        %3032 = vmatpush1.msra.mxu0 0.0
        %3033 = vmatprep.subr.mxu0 0.0
        %3034 = vmatpush1.msra.mxu0 0.0
        %3035 = vmatprep.subr.mxu0 0.0
        %3036 = vmatpush1.msra.mxu0 0.0
        %3037 = vmatprep.mubr.f32.mxu0 0.0
        %3038 = vmatmul.mubr.f32.gmra.mrb[0].mxu0 %v2965
        %v3039 = vpop.f32.mrb[0].mxu0
        %v3040 = vadd.f32 0.0, %v3039
        %v3041 = vpop.f32.mrb[0].mxu0
        %3042 = vmatprep.mubr.f32.mxu0 0.0
        %3043 = vmatmul.mubr.f32.gmra.mrb[0].mxu0 %v2968
        %v3044 = vpop.f32.mrb[0].mxu0
        %v3045 = vadd.f32 0.0, %v3044
        %v3046 = vpop.f32.mrb[0].mxu0
        %3047 = vmatprep.mubr.f32.mxu0 0.0
        %3048 = vmatmul.mubr.f32.gmra.mrb[0].mxu0 %v2971
        %v3049 = vpop.f32.mrb[0].mxu0
        %v3050 = vadd.f32 0.0, %v3049
        %v3051 = vpop.f32.mrb[0].mxu0
        %3052 = vdwg.mxu0
        %3053 = vrot.lane.b32.xlu0 %v1717, 64
        %v3054 = vpop.permute.xlu0 %3053
        %3055 = vrot.lane.b32.xlu0 %v1719, 64
        %v3056 = vpop.permute.xlu0 %3055
        %3057 = vrot.lane.b32.xlu0 %v1721, 64
        %v3058 = vpop.permute.xlu0 %3057
        %v3063 = vsel %vm2592, %v2839, 0
        %v3066 = vsel %vm2592, %v2840, 0
        %v3069 = vsel %vm2592, %v2841, 0
        %3071 = vmatprep.subr.mxu0 0.0
        %3072 = vmatpush1.msra.mxu0 %v3054
        %3073 = vmatprep.subr.mxu0 0.0
        %3074 = vmatpush1.msra.mxu0 %v3056
        %3075 = vmatprep.subr.mxu0 0.0
        %3076 = vmatpush1.msra.mxu0 %v3058
        %3077 = vmatprep.subr.mxu0 0.0
        %3078 = vmatpush1.msra.mxu0 0.0
        %3079 = vmatprep.subr.mxu0 0.0
        %3080 = vmatpush1.msra.mxu0 0.0
        %3081 = vmatprep.subr.mxu0 0.0
        %3082 = vmatpush1.msra.mxu0 0.0
        %3083 = vmatprep.subr.mxu0 0.0
        %3084 = vmatpush1.msra.mxu0 0.0
        %3085 = vmatprep.subr.mxu0 0.0
        %3086 = vmatpush1.msra.mxu0 0.0
        %3087 = vmatprep.subr.mxu0 0.0
        %3088 = vmatpush1.msra.mxu0 0.0
        %3089 = vmatprep.subr.mxu0 0.0
        %3090 = vmatpush1.msra.mxu0 0.0
        %3091 = vmatprep.subr.mxu0 0.0
        %3092 = vmatpush1.msra.mxu0 0.0
        %3093 = vmatprep.subr.mxu0 0.0
        %3094 = vmatpush1.msra.mxu0 0.0
        %3095 = vmatprep.subr.mxu0 0.0
        %3096 = vmatpush1.msra.mxu0 0.0
        %3097 = vmatprep.subr.mxu0 0.0
        %3098 = vmatpush1.msra.mxu0 0.0
        %3099 = vmatprep.subr.mxu0 0.0
        %3100 = vmatpush1.msra.mxu0 0.0
        %3101 = vmatprep.subr.mxu0 0.0
        %3102 = vmatpush1.msra.mxu0 0.0
        %3103 = vmatprep.subr.mxu0 0.0
        %3104 = vmatpush1.msra.mxu0 0.0
        %3105 = vmatprep.subr.mxu0 0.0
        %3106 = vmatpush1.msra.mxu0 0.0
        %3107 = vmatprep.subr.mxu0 0.0
        %3108 = vmatpush1.msra.mxu0 0.0
        %3109 = vmatprep.subr.mxu0 0.0
        %3110 = vmatpush1.msra.mxu0 0.0
        %3111 = vmatprep.subr.mxu0 0.0
        %3112 = vmatpush1.msra.mxu0 0.0
        %3113 = vmatprep.subr.mxu0 0.0
        %3114 = vmatpush1.msra.mxu0 0.0
        %3115 = vmatprep.subr.mxu0 0.0
        %3116 = vmatpush1.msra.mxu0 0.0
        %3117 = vmatprep.subr.mxu0 0.0
        %3118 = vmatpush1.msra.mxu0 0.0
        %3119 = vmatprep.subr.mxu0 0.0
        %3120 = vmatpush1.msra.mxu0 0.0
        %3121 = vmatprep.subr.mxu0 0.0
        %3122 = vmatpush1.msra.mxu0 0.0
        %3123 = vmatprep.subr.mxu0 0.0
        %3124 = vmatpush1.msra.mxu0 0.0
        %3125 = vmatprep.subr.mxu0 0.0
        %3126 = vmatpush1.msra.mxu0 0.0
        %3127 = vmatprep.subr.mxu0 0.0
        %3128 = vmatpush1.msra.mxu0 0.0
        %3129 = vmatprep.subr.mxu0 0.0
        %3130 = vmatpush1.msra.mxu0 0.0
        %3131 = vmatprep.subr.mxu0 0.0
        %3132 = vmatpush1.msra.mxu0 0.0
        %3133 = vmatprep.subr.mxu0 0.0
        %3134 = vmatpush1.msra.mxu0 0.0
        %3135 = vmatprep.mubr.f32.mxu0 0.0
        %3136 = vmatmul.mubr.f32.gmra.mrb[0].mxu0 %v3063
        %v3137 = vpop.f32.mrb[0].mxu0
        %v3138 = vadd.f32 0.0, %v3137
        %v3139 = vpop.f32.mrb[0].mxu0
        %3140 = vmatprep.mubr.f32.mxu0 0.0
        %3141 = vmatmul.mubr.f32.gmra.mrb[0].mxu0 %v3066
        %v3142 = vpop.f32.mrb[0].mxu0
        %v3143 = vadd.f32 0.0, %v3142
        %v3144 = vpop.f32.mrb[0].mxu0
        %3145 = vmatprep.mubr.f32.mxu0 0.0
        %3146 = vmatmul.mubr.f32.gmra.mrb[0].mxu0 %v3069
        %v3147 = vpop.f32.mrb[0].mxu0
        %v3148 = vadd.f32 0.0, %v3147
        %v3149 = vpop.f32.mrb[0].mxu0
        %3150 = vdwg.mxu0
        %3151 = vrot.lane.b32.xlu0 %v1723, 64
        %v3152 = vpop.permute.xlu0 %3151
        %3153 = vrot.lane.b32.xlu0 %v1725, 64
        %v3154 = vpop.permute.xlu0 %3153
        %3155 = vrot.lane.b32.xlu0 %v1727, 64
        %v3156 = vpop.permute.xlu0 %3155
        %v3161 = vsel %vm2592, %v2842, 0
        %v3164 = vsel %vm2592, %v2843, 0
        %v3167 = vsel %vm2592, %v2844, 0
        %3169 = vmatprep.subr.mxu0 0.0
        %3170 = vmatpush1.msra.mxu0 %v3152
        %3171 = vmatprep.subr.mxu0 0.0
        %3172 = vmatpush1.msra.mxu0 %v3154
        %3173 = vmatprep.subr.mxu0 0.0
        %3174 = vmatpush1.msra.mxu0 %v3156
        %3175 = vmatprep.subr.mxu0 0.0
        %3176 = vmatpush1.msra.mxu0 0.0
        %3177 = vmatprep.subr.mxu0 0.0
        %3178 = vmatpush1.msra.mxu0 0.0
        %3179 = vmatprep.subr.mxu0 0.0
        %3180 = vmatpush1.msra.mxu0 0.0
        %3181 = vmatprep.subr.mxu0 0.0
        %3182 = vmatpush1.msra.mxu0 0.0
        %3183 = vmatprep.subr.mxu0 0.0
        %3184 = vmatpush1.msra.mxu0 0.0
        %3185 = vmatprep.subr.mxu0 0.0
        %3186 = vmatpush1.msra.mxu0 0.0
        %3187 = vmatprep.subr.mxu0 0.0
        %3188 = vmatpush1.msra.mxu0 0.0
        %3189 = vmatprep.subr.mxu0 0.0
        %3190 = vmatpush1.msra.mxu0 0.0
        %3191 = vmatprep.subr.mxu0 0.0
        %3192 = vmatpush1.msra.mxu0 0.0
        %3193 = vmatprep.subr.mxu0 0.0
        %3194 = vmatpush1.msra.mxu0 0.0
        %3195 = vmatprep.subr.mxu0 0.0
        %3196 = vmatpush1.msra.mxu0 0.0
        %3197 = vmatprep.subr.mxu0 0.0
        %3198 = vmatpush1.msra.mxu0 0.0
        %3199 = vmatprep.subr.mxu0 0.0
        %3200 = vmatpush1.msra.mxu0 0.0
        %3201 = vmatprep.subr.mxu0 0.0
        %3202 = vmatpush1.msra.mxu0 0.0
        %3203 = vmatprep.subr.mxu0 0.0
        %3204 = vmatpush1.msra.mxu0 0.0
        %3205 = vmatprep.subr.mxu0 0.0
        %3206 = vmatpush1.msra.mxu0 0.0
        %3207 = vmatprep.subr.mxu0 0.0
        %3208 = vmatpush1.msra.mxu0 0.0
        %3209 = vmatprep.subr.mxu0 0.0
        %3210 = vmatpush1.msra.mxu0 0.0
        %3211 = vmatprep.subr.mxu0 0.0
        %3212 = vmatpush1.msra.mxu0 0.0
        %3213 = vmatprep.subr.mxu0 0.0
        %3214 = vmatpush1.msra.mxu0 0.0
        %3215 = vmatprep.subr.mxu0 0.0
        %3216 = vmatpush1.msra.mxu0 0.0
        %3217 = vmatprep.subr.mxu0 0.0
        %3218 = vmatpush1.msra.mxu0 0.0
        %3219 = vmatprep.subr.mxu0 0.0
        %3220 = vmatpush1.msra.mxu0 0.0
        %3221 = vmatprep.subr.mxu0 0.0
        %3222 = vmatpush1.msra.mxu0 0.0
        %3223 = vmatprep.subr.mxu0 0.0
        %3224 = vmatpush1.msra.mxu0 0.0
        %3225 = vmatprep.subr.mxu0 0.0
        %3226 = vmatpush1.msra.mxu0 0.0
        %3227 = vmatprep.subr.mxu0 0.0
        %3228 = vmatpush1.msra.mxu0 0.0
        %3229 = vmatprep.subr.mxu0 0.0
        %3230 = vmatpush1.msra.mxu0 0.0
        %3231 = vmatprep.subr.mxu0 0.0
        %3232 = vmatpush1.msra.mxu0 0.0
        %3233 = vmatprep.mubr.f32.mxu0 0.0
        %3234 = vmatmul.mubr.f32.gmra.mrb[0].mxu0 %v3161
        %v3235 = vpop.f32.mrb[0].mxu0
        %v3236 = vadd.f32 0.0, %v3235
        %v3237 = vpop.f32.mrb[0].mxu0
        %3238 = vmatprep.mubr.f32.mxu0 0.0
        %3239 = vmatmul.mubr.f32.gmra.mrb[0].mxu0 %v3164
        %v3240 = vpop.f32.mrb[0].mxu0
        %v3241 = vadd.f32 0.0, %v3240
        %v3242 = vpop.f32.mrb[0].mxu0
        %3243 = vmatprep.mubr.f32.mxu0 0.0
        %3244 = vmatmul.mubr.f32.gmra.mrb[0].mxu0 %v3167
        %v3245 = vpop.f32.mrb[0].mxu0
        %v3246 = vadd.f32 0.0, %v3245
        %v3247 = vpop.f32.mrb[0].mxu0
        %3248 = vdwg.mxu0
        %3249 = vrot.lane.b32.xlu0 %v1729, 64
        %v3250 = vpop.permute.xlu0 %3249
        %3251 = vrot.lane.b32.xlu0 %v1731, 64
        %v3252 = vpop.permute.xlu0 %3251
        %3253 = vrot.lane.b32.xlu0 %v1733, 64
        %v3254 = vpop.permute.xlu0 %3253
        %v3259 = vsel %vm2592, %v2845, 0
        %v3262 = vsel %vm2592, %v2846, 0
        %v3265 = vsel %vm2592, %v2847, 0
        %3267 = vmatprep.subr.mxu0 0.0
        %3268 = vmatpush1.msra.mxu0 %v3250
        %3269 = vmatprep.subr.mxu0 0.0
        %3270 = vmatpush1.msra.mxu0 %v3252
        %3271 = vmatprep.subr.mxu0 0.0
        %3272 = vmatpush1.msra.mxu0 %v3254
        %3273 = vmatprep.subr.mxu0 0.0
        %3274 = vmatpush1.msra.mxu0 0.0
        %3275 = vmatprep.subr.mxu0 0.0
        %3276 = vmatpush1.msra.mxu0 0.0
        %3277 = vmatprep.subr.mxu0 0.0
        %3278 = vmatpush1.msra.mxu0 0.0
        %3279 = vmatprep.subr.mxu0 0.0
        %3280 = vmatpush1.msra.mxu0 0.0
        %3281 = vmatprep.subr.mxu0 0.0
        %3282 = vmatpush1.msra.mxu0 0.0
        %3283 = vmatprep.subr.mxu0 0.0
        %3284 = vmatpush1.msra.mxu0 0.0
        %3285 = vmatprep.subr.mxu0 0.0
        %3286 = vmatpush1.msra.mxu0 0.0
        %3287 = vmatprep.subr.mxu0 0.0
        %3288 = vmatpush1.msra.mxu0 0.0
        %3289 = vmatprep.subr.mxu0 0.0
        %3290 = vmatpush1.msra.mxu0 0.0
        %3291 = vmatprep.subr.mxu0 0.0
        %3292 = vmatpush1.msra.mxu0 0.0
        %3293 = vmatprep.subr.mxu0 0.0
        %3294 = vmatpush1.msra.mxu0 0.0
        %3295 = vmatprep.subr.mxu0 0.0
        %3296 = vmatpush1.msra.mxu0 0.0
        %3297 = vmatprep.subr.mxu0 0.0
        %3298 = vmatpush1.msra.mxu0 0.0
        %3299 = vmatprep.subr.mxu0 0.0
        %3300 = vmatpush1.msra.mxu0 0.0
        %3301 = vmatprep.subr.mxu0 0.0
        %3302 = vmatpush1.msra.mxu0 0.0
        %3303 = vmatprep.subr.mxu0 0.0
        %3304 = vmatpush1.msra.mxu0 0.0
        %3305 = vmatprep.subr.mxu0 0.0
        %3306 = vmatpush1.msra.mxu0 0.0
        %3307 = vmatprep.subr.mxu0 0.0
        %3308 = vmatpush1.msra.mxu0 0.0
        %3309 = vmatprep.subr.mxu0 0.0
        %3310 = vmatpush1.msra.mxu0 0.0
        %3311 = vmatprep.subr.mxu0 0.0
        %3312 = vmatpush1.msra.mxu0 0.0
        %3313 = vmatprep.subr.mxu0 0.0
        %3314 = vmatpush1.msra.mxu0 0.0
        %3315 = vmatprep.subr.mxu0 0.0
        %3316 = vmatpush1.msra.mxu0 0.0
        %3317 = vmatprep.subr.mxu0 0.0
        %3318 = vmatpush1.msra.mxu0 0.0
        %3319 = vmatprep.subr.mxu0 0.0
        %3320 = vmatpush1.msra.mxu0 0.0
        %3321 = vmatprep.subr.mxu0 0.0
        %3322 = vmatpush1.msra.mxu0 0.0
        %3323 = vmatprep.subr.mxu0 0.0
        %3324 = vmatpush1.msra.mxu0 0.0
        %3325 = vmatprep.subr.mxu0 0.0
        %3326 = vmatpush1.msra.mxu0 0.0
        %3327 = vmatprep.subr.mxu0 0.0
        %3328 = vmatpush1.msra.mxu0 0.0
        %3329 = vmatprep.subr.mxu0 0.0
        %3330 = vmatpush1.msra.mxu0 0.0
        %3331 = vmatprep.mubr.f32.mxu0 0.0
        %3332 = vmatmul.mubr.f32.gmra.mrb[0].mxu0 %v3259
        %v3333 = vpop.f32.mrb[0].mxu0
        %v3334 = vadd.f32 0.0, %v3333
        %v3335 = vpop.f32.mrb[0].mxu0
        %3336 = vmatprep.mubr.f32.mxu0 0.0
        %3337 = vmatmul.mubr.f32.gmra.mrb[0].mxu0 %v3262
        %v3338 = vpop.f32.mrb[0].mxu0
        %v3339 = vadd.f32 0.0, %v3338
        %v3340 = vpop.f32.mrb[0].mxu0
        %3341 = vmatprep.mubr.f32.mxu0 0.0
        %3342 = vmatmul.mubr.f32.gmra.mrb[0].mxu0 %v3265
        %v3343 = vpop.f32.mrb[0].mxu0
        %v3344 = vadd.f32 0.0, %v3343
        %v3345 = vpop.f32.mrb[0].mxu0
        %3346 = vdwg.mxu0
        %3347 = vrot.lane.b32.xlu0 %v1735, 64
        %v3348 = vpop.permute.xlu0 %3347
        %3349 = vrot.lane.b32.xlu0 %v1737, 64
        %v3350 = vpop.permute.xlu0 %3349
        %3351 = vrot.lane.b32.xlu0 %v1739, 64
        %v3352 = vpop.permute.xlu0 %3351
        %v3357 = vsel %vm2592, %v2848, 0
        %v3360 = vsel %vm2592, %v2849, 0
        %v3363 = vsel %vm2592, %v2850, 0
        %3365 = vmatprep.subr.mxu0 0.0
        %3366 = vmatpush1.msra.mxu0 %v3348
        %3367 = vmatprep.subr.mxu0 0.0
        %3368 = vmatpush1.msra.mxu0 %v3350
        %3369 = vmatprep.subr.mxu0 0.0
        %3370 = vmatpush1.msra.mxu0 %v3352
        %3371 = vmatprep.subr.mxu0 0.0
        %3372 = vmatpush1.msra.mxu0 0.0
        %3373 = vmatprep.subr.mxu0 0.0
        %3374 = vmatpush1.msra.mxu0 0.0
        %3375 = vmatprep.subr.mxu0 0.0
        %3376 = vmatpush1.msra.mxu0 0.0
        %3377 = vmatprep.subr.mxu0 0.0
        %3378 = vmatpush1.msra.mxu0 0.0
        %3379 = vmatprep.subr.mxu0 0.0
        %3380 = vmatpush1.msra.mxu0 0.0
        %3381 = vmatprep.subr.mxu0 0.0
        %3382 = vmatpush1.msra.mxu0 0.0
        %3383 = vmatprep.subr.mxu0 0.0
        %3384 = vmatpush1.msra.mxu0 0.0
        %3385 = vmatprep.subr.mxu0 0.0
        %3386 = vmatpush1.msra.mxu0 0.0
        %3387 = vmatprep.subr.mxu0 0.0
        %3388 = vmatpush1.msra.mxu0 0.0
        %3389 = vmatprep.subr.mxu0 0.0
        %3390 = vmatpush1.msra.mxu0 0.0
        %3391 = vmatprep.subr.mxu0 0.0
        %3392 = vmatpush1.msra.mxu0 0.0
        %3393 = vmatprep.subr.mxu0 0.0
        %3394 = vmatpush1.msra.mxu0 0.0
        %3395 = vmatprep.subr.mxu0 0.0
        %3396 = vmatpush1.msra.mxu0 0.0
        %3397 = vmatprep.subr.mxu0 0.0
        %3398 = vmatpush1.msra.mxu0 0.0
        %3399 = vmatprep.subr.mxu0 0.0
        %3400 = vmatpush1.msra.mxu0 0.0
        %3401 = vmatprep.subr.mxu0 0.0
        %3402 = vmatpush1.msra.mxu0 0.0
        %3403 = vmatprep.subr.mxu0 0.0
        %3404 = vmatpush1.msra.mxu0 0.0
        %3405 = vmatprep.subr.mxu0 0.0
        %3406 = vmatpush1.msra.mxu0 0.0
        %3407 = vmatprep.subr.mxu0 0.0
        %3408 = vmatpush1.msra.mxu0 0.0
        %3409 = vmatprep.subr.mxu0 0.0
        %3410 = vmatpush1.msra.mxu0 0.0
        %3411 = vmatprep.subr.mxu0 0.0
        %3412 = vmatpush1.msra.mxu0 0.0
        %3413 = vmatprep.subr.mxu0 0.0
        %3414 = vmatpush1.msra.mxu0 0.0
        %3415 = vmatprep.subr.mxu0 0.0
        %3416 = vmatpush1.msra.mxu0 0.0
        %3417 = vmatprep.subr.mxu0 0.0
        %3418 = vmatpush1.msra.mxu0 0.0
        %3419 = vmatprep.subr.mxu0 0.0
        %3420 = vmatpush1.msra.mxu0 0.0
        %3421 = vmatprep.subr.mxu0 0.0
        %3422 = vmatpush1.msra.mxu0 0.0
        %3423 = vmatprep.subr.mxu0 0.0
        %3424 = vmatpush1.msra.mxu0 0.0
        %3425 = vmatprep.subr.mxu0 0.0
        %3426 = vmatpush1.msra.mxu0 0.0
        %3427 = vmatprep.subr.mxu0 0.0
        %3428 = vmatpush1.msra.mxu0 0.0
        %3429 = vmatprep.mubr.f32.mxu0 0.0
        %3430 = vmatmul.mubr.f32.gmra.mrb[0].mxu0 %v3357
        %v3431 = vpop.f32.mrb[0].mxu0
        %v3432 = vadd.f32 0.0, %v3431
        %v3433 = vpop.f32.mrb[0].mxu0
        %3434 = vmatprep.mubr.f32.mxu0 0.0
        %3435 = vmatmul.mubr.f32.gmra.mrb[0].mxu0 %v3360
        %v3436 = vpop.f32.mrb[0].mxu0
        %v3437 = vadd.f32 0.0, %v3436
        %v3438 = vpop.f32.mrb[0].mxu0
        %3439 = vmatprep.mubr.f32.mxu0 0.0
        %3440 = vmatmul.mubr.f32.gmra.mrb[0].mxu0 %v3363
        %v3441 = vpop.f32.mrb[0].mxu0
        %v3442 = vadd.f32 0.0, %v3441
        %v3443 = vpop.f32.mrb[0].mxu0
        %3444 = vdwg.mxu0
        %3445 = vrot.lane.b32.xlu0 %v1741, 64
        %v3446 = vpop.permute.xlu0 %3445
        %3447 = vrot.lane.b32.xlu0 %v1743, 64
        %v3448 = vpop.permute.xlu0 %3447
        %3449 = vrot.lane.b32.xlu0 %v1745, 64
        %v3450 = vpop.permute.xlu0 %3449
        %v3455 = vsel %vm2592, %v2851, 0
        %v3458 = vsel %vm2592, %v2852, 0
        %v3461 = vsel %vm2592, %v2853, 0
        %3463 = vmatprep.subr.mxu0 0.0
        %3464 = vmatpush1.msra.mxu0 %v3446
        %3465 = vmatprep.subr.mxu0 0.0
        %3466 = vmatpush1.msra.mxu0 %v3448
        %3467 = vmatprep.subr.mxu0 0.0
        %3468 = vmatpush1.msra.mxu0 %v3450
        %3469 = vmatprep.subr.mxu0 0.0
        %3470 = vmatpush1.msra.mxu0 0.0
        %3471 = vmatprep.subr.mxu0 0.0
        %3472 = vmatpush1.msra.mxu0 0.0
        %3473 = vmatprep.subr.mxu0 0.0
        %3474 = vmatpush1.msra.mxu0 0.0
        %3475 = vmatprep.subr.mxu0 0.0
        %3476 = vmatpush1.msra.mxu0 0.0
        %3477 = vmatprep.subr.mxu0 0.0
        %3478 = vmatpush1.msra.mxu0 0.0
        %3479 = vmatprep.subr.mxu0 0.0
        %3480 = vmatpush1.msra.mxu0 0.0
        %3481 = vmatprep.subr.mxu0 0.0
        %3482 = vmatpush1.msra.mxu0 0.0
        %3483 = vmatprep.subr.mxu0 0.0
        %3484 = vmatpush1.msra.mxu0 0.0
        %3485 = vmatprep.subr.mxu0 0.0
        %3486 = vmatpush1.msra.mxu0 0.0
        %3487 = vmatprep.subr.mxu0 0.0
        %3488 = vmatpush1.msra.mxu0 0.0
        %3489 = vmatprep.subr.mxu0 0.0
        %3490 = vmatpush1.msra.mxu0 0.0
        %3491 = vmatprep.subr.mxu0 0.0
        %3492 = vmatpush1.msra.mxu0 0.0
        %3493 = vmatprep.subr.mxu0 0.0
        %3494 = vmatpush1.msra.mxu0 0.0
        %3495 = vmatprep.subr.mxu0 0.0
        %3496 = vmatpush1.msra.mxu0 0.0
        %3497 = vmatprep.subr.mxu0 0.0
        %3498 = vmatpush1.msra.mxu0 0.0
        %3499 = vmatprep.subr.mxu0 0.0
        %3500 = vmatpush1.msra.mxu0 0.0
        %3501 = vmatprep.subr.mxu0 0.0
        %3502 = vmatpush1.msra.mxu0 0.0
        %3503 = vmatprep.subr.mxu0 0.0
        %3504 = vmatpush1.msra.mxu0 0.0
        %3505 = vmatprep.subr.mxu0 0.0
        %3506 = vmatpush1.msra.mxu0 0.0
        %3507 = vmatprep.subr.mxu0 0.0
        %3508 = vmatpush1.msra.mxu0 0.0
        %3509 = vmatprep.subr.mxu0 0.0
        %3510 = vmatpush1.msra.mxu0 0.0
        %3511 = vmatprep.subr.mxu0 0.0
        %3512 = vmatpush1.msra.mxu0 0.0
        %3513 = vmatprep.subr.mxu0 0.0
        %3514 = vmatpush1.msra.mxu0 0.0
        %3515 = vmatprep.subr.mxu0 0.0
        %3516 = vmatpush1.msra.mxu0 0.0
        %3517 = vmatprep.subr.mxu0 0.0
        %3518 = vmatpush1.msra.mxu0 0.0
        %3519 = vmatprep.subr.mxu0 0.0
        %3520 = vmatpush1.msra.mxu0 0.0
        %3521 = vmatprep.subr.mxu0 0.0
        %3522 = vmatpush1.msra.mxu0 0.0
        %3523 = vmatprep.subr.mxu0 0.0
        %3524 = vmatpush1.msra.mxu0 0.0
        %3525 = vmatprep.subr.mxu0 0.0
        %3526 = vmatpush1.msra.mxu0 0.0
        %3527 = vmatprep.mubr.f32.mxu0 0.0
        %3528 = vmatmul.mubr.f32.gmra.mrb[0].mxu0 %v3455
        %v3529 = vpop.f32.mrb[0].mxu0
        %v3530 = vadd.f32 0.0, %v3529
        %v3531 = vpop.f32.mrb[0].mxu0
        %3532 = vmatprep.mubr.f32.mxu0 0.0
        %3533 = vmatmul.mubr.f32.gmra.mrb[0].mxu0 %v3458
        %v3534 = vpop.f32.mrb[0].mxu0
        %v3535 = vadd.f32 0.0, %v3534
        %v3536 = vpop.f32.mrb[0].mxu0
        %3537 = vmatprep.mubr.f32.mxu0 0.0
        %3538 = vmatmul.mubr.f32.gmra.mrb[0].mxu0 %v3461
        %v3539 = vpop.f32.mrb[0].mxu0
        %v3540 = vadd.f32 0.0, %v3539
        %v3541 = vpop.f32.mrb[0].mxu0
        %3542 = vdwg.mxu0
        %3543 = vrot.lane.b32.xlu0 %v1747, 64
        %v3544 = vpop.permute.xlu0 %3543
        %3545 = vrot.lane.b32.xlu0 %v1749, 64
        %v3546 = vpop.permute.xlu0 %3545
        %3547 = vrot.lane.b32.xlu0 %v1751, 64
        %v3548 = vpop.permute.xlu0 %3547
        %v3553 = vsel %vm2592, %v2854, 0
        %v3556 = vsel %vm2592, %v2855, 0
        %v3559 = vsel %vm2592, %v2856, 0
        %3561 = vmatprep.subr.mxu0 0.0
        %3562 = vmatpush1.msra.mxu0 %v3544
        %3563 = vmatprep.subr.mxu0 0.0
        %3564 = vmatpush1.msra.mxu0 %v3546
        %3565 = vmatprep.subr.mxu0 0.0
        %3566 = vmatpush1.msra.mxu0 %v3548
        %3567 = vmatprep.subr.mxu0 0.0
        %3568 = vmatpush1.msra.mxu0 0.0
        %3569 = vmatprep.subr.mxu0 0.0
        %3570 = vmatpush1.msra.mxu0 0.0
        %3571 = vmatprep.subr.mxu0 0.0
        %3572 = vmatpush1.msra.mxu0 0.0
        %3573 = vmatprep.subr.mxu0 0.0
        %3574 = vmatpush1.msra.mxu0 0.0
        %3575 = vmatprep.subr.mxu0 0.0
        %3576 = vmatpush1.msra.mxu0 0.0
        %3577 = vmatprep.subr.mxu0 0.0
        %3578 = vmatpush1.msra.mxu0 0.0
        %3579 = vmatprep.subr.mxu0 0.0
        %3580 = vmatpush1.msra.mxu0 0.0
        %3581 = vmatprep.subr.mxu0 0.0
        %3582 = vmatpush1.msra.mxu0 0.0
        %3583 = vmatprep.subr.mxu0 0.0
        %3584 = vmatpush1.msra.mxu0 0.0
        %3585 = vmatprep.subr.mxu0 0.0
        %3586 = vmatpush1.msra.mxu0 0.0
        %3587 = vmatprep.subr.mxu0 0.0
        %3588 = vmatpush1.msra.mxu0 0.0
        %3589 = vmatprep.subr.mxu0 0.0
        %3590 = vmatpush1.msra.mxu0 0.0
        %3591 = vmatprep.subr.mxu0 0.0
        %3592 = vmatpush1.msra.mxu0 0.0
        %3593 = vmatprep.subr.mxu0 0.0
        %3594 = vmatpush1.msra.mxu0 0.0
        %3595 = vmatprep.subr.mxu0 0.0
        %3596 = vmatpush1.msra.mxu0 0.0
        %3597 = vmatprep.subr.mxu0 0.0
        %3598 = vmatpush1.msra.mxu0 0.0
        %3599 = vmatprep.subr.mxu0 0.0
        %3600 = vmatpush1.msra.mxu0 0.0
        %3601 = vmatprep.subr.mxu0 0.0
        %3602 = vmatpush1.msra.mxu0 0.0
        %3603 = vmatprep.subr.mxu0 0.0
        %3604 = vmatpush1.msra.mxu0 0.0
        %3605 = vmatprep.subr.mxu0 0.0
        %3606 = vmatpush1.msra.mxu0 0.0
        %3607 = vmatprep.subr.mxu0 0.0
        %3608 = vmatpush1.msra.mxu0 0.0
        %3609 = vmatprep.subr.mxu0 0.0
        %3610 = vmatpush1.msra.mxu0 0.0
        %3611 = vmatprep.subr.mxu0 0.0
        %3612 = vmatpush1.msra.mxu0 0.0
        %3613 = vmatprep.subr.mxu0 0.0
        %3614 = vmatpush1.msra.mxu0 0.0
        %3615 = vmatprep.subr.mxu0 0.0
        %3616 = vmatpush1.msra.mxu0 0.0
        %3617 = vmatprep.subr.mxu0 0.0
        %3618 = vmatpush1.msra.mxu0 0.0
        %3619 = vmatprep.subr.mxu0 0.0
        %3620 = vmatpush1.msra.mxu0 0.0
        %3621 = vmatprep.subr.mxu0 0.0
        %3622 = vmatpush1.msra.mxu0 0.0
        %3623 = vmatprep.subr.mxu0 0.0
        %3624 = vmatpush1.msra.mxu0 0.0
        %3625 = vmatprep.mubr.f32.mxu0 0.0
        %3626 = vmatmul.mubr.f32.gmra.mrb[0].mxu0 %v3553
        %v3627 = vpop.f32.mrb[0].mxu0
        %v3628 = vadd.f32 0.0, %v3627
        %v3629 = vpop.f32.mrb[0].mxu0
        %3630 = vmatprep.mubr.f32.mxu0 0.0
        %3631 = vmatmul.mubr.f32.gmra.mrb[0].mxu0 %v3556
        %v3632 = vpop.f32.mrb[0].mxu0
        %v3633 = vadd.f32 0.0, %v3632
        %v3634 = vpop.f32.mrb[0].mxu0
        %3635 = vmatprep.mubr.f32.mxu0 0.0
        %3636 = vmatmul.mubr.f32.gmra.mrb[0].mxu0 %v3559
        %v3637 = vpop.f32.mrb[0].mxu0
        %v3638 = vadd.f32 0.0, %v3637
        %v3639 = vpop.f32.mrb[0].mxu0
        %3640 = vdwg.mxu0
        %3647 = vrot.lane.b32.xlu0 %v3138, 8
        %v3648 = vpop.permute.xlu0 %3647
        %3649 = vrot.lane.b32.xlu0 %v3143, 8
        %v3650 = vpop.permute.xlu0 %3649
        %3651 = vrot.lane.b32.xlu0 %v3148, 8
        %v3652 = vpop.permute.xlu0 %3651
        %3653 = vrot.lane.b32.xlu0 %v3236, 8
        %v3654 = vpop.permute.xlu0 %3653
        %3655 = vrot.lane.b32.xlu0 %v3241, 8
        %v3656 = vpop.permute.xlu0 %3655
        %3657 = vrot.lane.b32.xlu0 %v3246, 8
        %v3658 = vpop.permute.xlu0 %3657
        %3671 = vrot.lane.b32.xlu0 %v3334, 16
        %v3672 = vpop.permute.xlu0 %3671
        %3673 = vrot.lane.b32.xlu0 %v3339, 16
        %v3674 = vpop.permute.xlu0 %3673
        %3675 = vrot.lane.b32.xlu0 %v3344, 16
        %v3676 = vpop.permute.xlu0 %3675
        %3677 = vrot.lane.b32.xlu0 %v3432, 16
        %v3678 = vpop.permute.xlu0 %3677
        %3679 = vrot.lane.b32.xlu0 %v3437, 16
        %v3680 = vpop.permute.xlu0 %3679
        %3681 = vrot.lane.b32.xlu0 %v3442, 16
        %v3682 = vpop.permute.xlu0 %3681
        %3695 = vrot.lane.b32.xlu0 %v3530, 24
        %v3696 = vpop.permute.xlu0 %3695
        %3697 = vrot.lane.b32.xlu0 %v3535, 24
        %v3698 = vpop.permute.xlu0 %3697
        %3699 = vrot.lane.b32.xlu0 %v3540, 24
        %v3700 = vpop.permute.xlu0 %3699
        %3701 = vrot.lane.b32.xlu0 %v3628, 24
        %v3702 = vpop.permute.xlu0 %3701
        %3703 = vrot.lane.b32.xlu0 %v3633, 24
        %v3704 = vpop.permute.xlu0 %3703
        %3705 = vrot.lane.b32.xlu0 %v3638, 24
        %v3706 = vpop.permute.xlu0 %3705
        %v3713 = vsel %vm1758, %v2942, %v3648
        %v3714 = vsel %vm1758, %v2947, %v3650
        %v3715 = vsel %vm1758, %v2952, %v3652
        %v3716 = vsel %vm1758, %v3040, %v3654
        %v3717 = vsel %vm1758, %v3045, %v3656
        %v3718 = vsel %vm1758, %v3050, %v3658
        %vm3719 = vcmask 130048
        %v3720 = vsel %vm3719, %v3713, %v3672
        %v3721 = vsel %vm3719, %v3714, %v3674
        %v3722 = vsel %vm3719, %v3715, %v3676
        %v3723 = vsel %vm3719, %v3716, %v3678
        %v3724 = vsel %vm3719, %v3717, %v3680
        %v3725 = vsel %vm3719, %v3718, %v3682
        %v3726 = vsel %vm2592, %v3720, %v3696
        %v3727 = vsel %vm2592, %v3721, %v3698
        %v3728 = vsel %vm2592, %v3722, %v3700
        %v3729 = vsel %vm2592, %v3723, %v3702
        %v3730 = vsel %vm2592, %v3724, %v3704
        %v3731 = vsel %vm2592, %v3725, %v3706
        %v3732 = vpack.c.bf16 %v3727, %v3726
        %v3733 = vpack.c.bf16 %v3729, %v3728
        %v3734 = vpack.c.bf16 %v3731, %v3730
        %v3735 = vld [vmem:[%s950] sm:$0xf]
        %v3736 = vld [vmem:[%s950 + $0x4] sm:$0xf]
        %v3737 = vld [vmem:[%s950 + $0x8] sm:$0xf]
        %v3738 = vld [vmem:[%s950 + $0xc] sm:$0xf]
        %v3739 = vld [vmem:[%s953] sm:$0x1]
        %v3741 = vlaneseq
        %v3742 = vshrl.u32 %v3741, 7
        %v3743 = vsub.s32 0, %v3742
        %v3744 = vrot.slane %v3739, %v3743
        %v3750 = vunpack.c.l.b16 %v3735
        %v3751 = vunpack.c.l.b16 %v3736
        %v3752 = vunpack.c.l.b16 %v3737
        %v3753 = vunpack.c.l.b16 %v3738
        %v3754 = vpack.c.b16 %v3751, %v3750
        %v3755 = vpack.c.b16 %v3753, %v3752
        %v3759 = vsel %vm1514, %v3732, 0
        %v3762 = vsel %vm1514, %v3733, 0
        %v3765 = vsel %vm1514, %v3734, 0
        %3767 = vmatprep.subr.bf16.mxu0 0
        %3768 = vmatpush1.bf16.msra.mxu0 %v3754
        %3769 = vmatprep.subr.bf16.mxu0 0
        %3770 = vmatpush1.bf16.msra.mxu0 %v3755
        %3771 = vmatprep.subr.bf16.mxu0 0
        %3772 = vmatpush1.bf16.msra.mxu0 0
        %3773 = vmatprep.subr.bf16.mxu0 0
        %3774 = vmatpush1.bf16.msra.mxu0 0
        %3775 = vmatprep.subr.bf16.mxu0 0
        %3776 = vmatpush1.bf16.msra.mxu0 0
        %3777 = vmatprep.subr.bf16.mxu0 0
        %3778 = vmatpush1.bf16.msra.mxu0 0
        %3779 = vmatprep.subr.bf16.mxu0 0
        %3780 = vmatpush1.bf16.msra.mxu0 0
        %3781 = vmatprep.subr.bf16.mxu0 0
        %3782 = vmatpush1.bf16.msra.mxu0 0
        %3783 = vmatprep.subr.bf16.mxu0 0
        %3784 = vmatpush1.bf16.msra.mxu0 0
        %3785 = vmatprep.subr.bf16.mxu0 0
        %3786 = vmatpush1.bf16.msra.mxu0 0
        %3787 = vmatprep.subr.bf16.mxu0 0
        %3788 = vmatpush1.bf16.msra.mxu0 0
        %3789 = vmatprep.subr.bf16.mxu0 0
        %3790 = vmatpush1.bf16.msra.mxu0 0
        %3791 = vmatprep.subr.bf16.mxu0 0
        %3792 = vmatpush1.bf16.msra.mxu0 0
        %3793 = vmatprep.subr.bf16.mxu0 0
        %3794 = vmatpush1.bf16.msra.mxu0 0
        %3795 = vmatprep.subr.bf16.mxu0 0
        %3796 = vmatpush1.bf16.msra.mxu0 0
        %3797 = vmatprep.subr.bf16.mxu0 0
        %3798 = vmatpush1.bf16.msra.mxu0 0
        %3799 = vmatprep.mubr.bf16.mxu0 0
        %3800 = vmatmul.mubr.bf16.gmra.mrb[0].mxu0 %v3759
        %v3801 = vpop.f32.mrb[0].mxu0
        %v3802 = vadd.f32 %v3744, %v3801
        %v3803 = vpop.f32.mrb[0].mxu0
        %v3804 = vpop.f32.mrb[0].mxu0
        %v3805 = vadd.f32 %v3744, %v3804
        %v3806 = vpop.f32.mrb[0].mxu0
        %3807 = vmatprep.mubr.bf16.mxu0 0
        %3808 = vmatmul.mubr.bf16.gmra.mrb[0].mxu0 %v3762
        %v3809 = vpop.f32.mrb[0].mxu0
        %v3810 = vadd.f32 %v3744, %v3809
        %v3811 = vpop.f32.mrb[0].mxu0
        %v3812 = vpop.f32.mrb[0].mxu0
        %v3813 = vadd.f32 %v3744, %v3812
        %v3814 = vpop.f32.mrb[0].mxu0
        %3815 = vmatprep.mubr.bf16.mxu0 0
        %3816 = vmatmul.mubr.bf16.gmra.mrb[0].mxu0 %v3765
        %v3817 = vpop.f32.mrb[0].mxu0
        %v3818 = vadd.f32 %v3744, %v3817
        %v3819 = vpop.f32.mrb[0].mxu0
        %v3820 = vpop.f32.mrb[0].mxu0
        %v3821 = vadd.f32 %v3744, %v3820
        %v3822 = vpop.f32.mrb[0].mxu0
        %3823 = vdwg.mxu0
        %v3824 = vadd.f32 %v1506, %v3802
        %v3825 = vadd.f32 %v1507, %v3805
        %v3826 = vadd.f32 %v1508, %v3810
        %v3827 = vadd.f32 %v1509, %v3813
        %v3828 = vadd.f32 %v1510, %v3818
        %v3829 = vadd.f32 %v1511, %v3821
        %v3830 = vld [vmem:[%s956] sm:$0x1]
        %v3831 = vld [vmem:[%s959] sm:$0x1]
        %v3832 = vsel %vm1514, %v3824, 0.0
        %3833 = vadd.xlane.f32.xlu0 %v3832
        %v3834 = vpop.xlane.xlu0 %3833
        %v3835 = vsel %vm1514, %v3825, 0.0
        %3836 = vadd.xlane.f32.xlu0 %v3835
        %v3837 = vpop.xlane.xlu0 %3836
        %v3838 = vsel %vm1514, %v3826, 0.0
        %3839 = vadd.xlane.f32.xlu0 %v3838
        %v3840 = vpop.xlane.xlu0 %3839
        %v3841 = vsel %vm1514, %v3827, 0.0
        %3842 = vadd.xlane.f32.xlu0 %v3841
        %v3843 = vpop.xlane.xlu0 %3842
        %v3844 = vsel %vm1514, %v3828, 0.0
        %3845 = vadd.xlane.f32.xlu0 %v3844
        %v3846 = vpop.xlane.xlu0 %3845
        %v3847 = vsel %vm1514, %v3829, 0.0
        %3848 = vadd.xlane.f32.xlu0 %v3847
        %v3849 = vpop.xlane.xlu0 %3848
        %v3850 = vmul.f32 %v3834, %v1533
        %v3851 = vmul.f32 %v3837, %v1533
        %v3852 = vmul.f32 %v3840, %v1533
        %v3853 = vmul.f32 %v3843, %v1533
        %v3854 = vmul.f32 %v3846, %v1533
        %v3855 = vmul.f32 %v3849, %v1533
        %v3856 = vsub.f32 %v3824, %v3850
        %v3857 = vsub.f32 %v3825, %v3851
        %v3858 = vsub.f32 %v3826, %v3852
        %v3859 = vsub.f32 %v3827, %v3853
        %v3860 = vsub.f32 %v3828, %v3854
        %v3861 = vsub.f32 %v3829, %v3855
        %v3862 = vmul.f32 %v3856, %v3856
        %v3863 = vmul.f32 %v3857, %v3857
        %v3864 = vmul.f32 %v3858, %v3858
        %v3865 = vmul.f32 %v3859, %v3859
        %v3866 = vmul.f32 %v3860, %v3860
        %v3867 = vmul.f32 %v3861, %v3861
        %v3868 = vsel %vm1514, %v3862, 0.0
        %3869 = vadd.xlane.f32.xlu0 %v3868
        %v3870 = vpop.xlane.xlu0 %3869
        %v3871 = vsel %vm1514, %v3863, 0.0
        %3872 = vadd.xlane.f32.xlu0 %v3871
        %v3873 = vpop.xlane.xlu0 %3872
        %v3874 = vsel %vm1514, %v3864, 0.0
        %3875 = vadd.xlane.f32.xlu0 %v3874
        %v3876 = vpop.xlane.xlu0 %3875
        %v3877 = vsel %vm1514, %v3865, 0.0
        %3878 = vadd.xlane.f32.xlu0 %v3877
        %v3879 = vpop.xlane.xlu0 %3878
        %v3880 = vsel %vm1514, %v3866, 0.0
        %3881 = vadd.xlane.f32.xlu0 %v3880
        %v3882 = vpop.xlane.xlu0 %3881
        %v3883 = vsel %vm1514, %v3867, 0.0
        %3884 = vadd.xlane.f32.xlu0 %v3883
        %v3885 = vpop.xlane.xlu0 %3884
        %v3886 = vmul.f32 %v3870, %v1533
        %v3887 = vmul.f32 %v3873, %v1533
        %v3888 = vmul.f32 %v3876, %v1533
        %v3889 = vmul.f32 %v3879, %v1533
        %v3890 = vmul.f32 %v3882, %v1533
        %v3891 = vmul.f32 %v3885, %v1533
        %v3892 = vadd.f32 %v3886, 1e-05
        %v3893 = vadd.f32 %v3887, 1e-05
        %v3894 = vadd.f32 %v3888, 1e-05
        %v3895 = vadd.f32 %v3889, 1e-05
        %v3896 = vadd.f32 %v3890, 1e-05
        %v3897 = vadd.f32 %v3891, 1e-05
        %v3898 = vrsqrt.pop %v3892
        %v3899 = vrsqrt.pop %v3893
        %v3900 = vrsqrt.pop %v3894
        %v3901 = vrsqrt.pop %v3895
        %v3902 = vrsqrt.pop %v3896
        %v3903 = vrsqrt.pop %v3897
        %v3904 = vmul.f32 %v3856, %v3898
        %v3905 = vmul.f32 %v3857, %v3899
        %v3906 = vmul.f32 %v3858, %v3900
        %v3907 = vmul.f32 %v3859, %v3901
        %v3908 = vmul.f32 %v3860, %v3902
        %v3909 = vmul.f32 %v3861, %v3903
        %v3911 = vlaneseq
        %v3912 = vshrl.u32 %v3911, 7
        %v3913 = vsub.s32 0, %v3912
        %v3914 = vrot.slane %v3830, %v3913
        %v3916 = vmul.f32 %v3904, %v3914
        %v3917 = vmul.f32 %v3905, %v3914
        %v3918 = vmul.f32 %v3906, %v3914
        %v3919 = vmul.f32 %v3907, %v3914
        %v3920 = vmul.f32 %v3908, %v3914
        %v3921 = vmul.f32 %v3909, %v3914
        %v3923 = vlaneseq
        %v3924 = vshrl.u32 %v3923, 7
        %v3925 = vsub.s32 0, %v3924
        %v3926 = vrot.slane %v3831, %v3925
        %v3928 = vadd.f32 %v3916, %v3926
        %v3929 = vadd.f32 %v3917, %v3926
        %v3930 = vadd.f32 %v3918, %v3926
        %v3931 = vadd.f32 %v3919, %v3926
        %v3932 = vadd.f32 %v3920, %v3926
        %v3933 = vadd.f32 %v3921, %v3926
        %v3934 = vpack.c.bf16 %v3929, %v3928
        %v3935 = vpack.c.bf16 %v3931, %v3930
        %v3936 = vpack.c.bf16 %v3933, %v3932
        %v3937 = vld [vmem:[%s964] sm:$0xf]
        %v3938 = vld [vmem:[%s964 + $0x4] sm:$0xf]
        %v3939 = vld [vmem:[%s964 + $0x8] sm:$0xf]
        %v3940 = vld [vmem:[%s964 + $0xc] sm:$0xf]
        %v3941 = vld [vmem:[%s967] sm:$0x1]
        %v3943 = vlaneseq
        %v3944 = vshrl.u32 %v3943, 7
        %v3945 = vsub.s32 0, %v3944
        %v3946 = vrot.slane %v3941, %v3945
        %v3952 = vunpack.c.l.b16 %v3937
        %v3953 = vunpack.c.l.b16 %v3938
        %v3954 = vunpack.c.l.b16 %v3939
        %v3955 = vunpack.c.l.b16 %v3940
        %v3956 = vpack.c.b16 %v3953, %v3952
        %v3957 = vpack.c.b16 %v3955, %v3954
        %v3961 = vsel %vm1514, %v3934, 0
        %v3964 = vsel %vm1514, %v3935, 0
        %v3967 = vsel %vm1514, %v3936, 0
        %3969 = vmatprep.subr.bf16.mxu0 0
        %3970 = vmatpush1.bf16.msra.mxu0 %v3956
        %3971 = vmatprep.subr.bf16.mxu0 0
        %3972 = vmatpush1.bf16.msra.mxu0 %v3957
        %3973 = vmatprep.subr.bf16.mxu0 0
        %3974 = vmatpush1.bf16.msra.mxu0 0
        %3975 = vmatprep.subr.bf16.mxu0 0
        %3976 = vmatpush1.bf16.msra.mxu0 0
        %3977 = vmatprep.subr.bf16.mxu0 0
        %3978 = vmatpush1.bf16.msra.mxu0 0
        %3979 = vmatprep.subr.bf16.mxu0 0
        %3980 = vmatpush1.bf16.msra.mxu0 0
        %3981 = vmatprep.subr.bf16.mxu0 0
        %3982 = vmatpush1.bf16.msra.mxu0 0
        %3983 = vmatprep.subr.bf16.mxu0 0
        %3984 = vmatpush1.bf16.msra.mxu0 0
        %3985 = vmatprep.subr.bf16.mxu0 0
        %3986 = vmatpush1.bf16.msra.mxu0 0
        %3987 = vmatprep.subr.bf16.mxu0 0
        %3988 = vmatpush1.bf16.msra.mxu0 0
        %3989 = vmatprep.subr.bf16.mxu0 0
        %3990 = vmatpush1.bf16.msra.mxu0 0
        %3991 = vmatprep.subr.bf16.mxu0 0
        %3992 = vmatpush1.bf16.msra.mxu0 0
        %3993 = vmatprep.subr.bf16.mxu0 0
        %3994 = vmatpush1.bf16.msra.mxu0 0
        %3995 = vmatprep.subr.bf16.mxu0 0
        %3996 = vmatpush1.bf16.msra.mxu0 0
        %3997 = vmatprep.subr.bf16.mxu0 0
        %3998 = vmatpush1.bf16.msra.mxu0 0
        %3999 = vmatprep.subr.bf16.mxu0 0
        %4000 = vmatpush1.bf16.msra.mxu0 0
        %4001 = vmatprep.mubr.bf16.mxu0 0
        %4002 = vmatmul.mubr.bf16.gmra.mrb[0].mxu0 %v3961
        %v4003 = vpop.f32.mrb[0].mxu0
        %v4004 = vadd.f32 %v3946, %v4003
        %v4005 = vpop.f32.mrb[0].mxu0
        %v4006 = vpop.f32.mrb[0].mxu0
        %v4007 = vadd.f32 %v3946, %v4006
        %v4008 = vpop.f32.mrb[0].mxu0
        %4009 = vmatprep.mubr.bf16.mxu0 0
        %4010 = vmatmul.mubr.bf16.gmra.mrb[0].mxu0 %v3964
        %v4011 = vpop.f32.mrb[0].mxu0
        %v4012 = vadd.f32 %v3946, %v4011
        %v4013 = vpop.f32.mrb[0].mxu0
        %v4014 = vpop.f32.mrb[0].mxu0
        %v4015 = vadd.f32 %v3946, %v4014
        %v4016 = vpop.f32.mrb[0].mxu0
        %4017 = vmatprep.mubr.bf16.mxu0 0
        %4018 = vmatmul.mubr.bf16.gmra.mrb[0].mxu0 %v3967
        %v4019 = vpop.f32.mrb[0].mxu0
        %v4020 = vadd.f32 %v3946, %v4019
        %v4021 = vpop.f32.mrb[0].mxu0
        %v4022 = vpop.f32.mrb[0].mxu0
        %v4023 = vadd.f32 %v3946, %v4022
        %v4024 = vpop.f32.mrb[0].mxu0
        %4025 = vdwg.mxu0
        %v4026 = vmul.f32 %v4004, %v4004
        %v4027 = vmul.f32 %v4007, %v4007
        %v4028 = vmul.f32 %v4012, %v4012
        %v4029 = vmul.f32 %v4015, %v4015
        %v4030 = vmul.f32 %v4020, %v4020
        %v4031 = vmul.f32 %v4023, %v4023
        %v4032 = vmul.f32 %v4004, %v4026
        %v4033 = vmul.f32 %v4007, %v4027
        %v4034 = vmul.f32 %v4012, %v4028
        %v4035 = vmul.f32 %v4015, %v4029
        %v4036 = vmul.f32 %v4020, %v4030
        %v4037 = vmul.f32 %v4023, %v4031
        %v4038 = vmul.f32 %v4032, 0.044715
        %v4039 = vmul.f32 %v4033, 0.044715
        %v4040 = vmul.f32 %v4034, 0.044715
        %v4041 = vmul.f32 %v4035, 0.044715
        %v4042 = vmul.f32 %v4036, 0.044715
        %v4043 = vmul.f32 %v4037, 0.044715
        %v4044 = vadd.f32 %v4004, %v4038
        %v4045 = vadd.f32 %v4007, %v4039
        %v4046 = vadd.f32 %v4012, %v4040
        %v4047 = vadd.f32 %v4015, %v4041
        %v4048 = vadd.f32 %v4020, %v4042
        %v4049 = vadd.f32 %v4023, %v4043
        %v4050 = vmul.f32 %v4044, 0.7978846
        %v4051 = vmul.f32 %v4045, 0.7978846
        %v4052 = vmul.f32 %v4046, 0.7978846
        %v4053 = vmul.f32 %v4047, 0.7978846
        %v4054 = vmul.f32 %v4048, 0.7978846
        %v4055 = vmul.f32 %v4049, 0.7978846
        %v4056 = vtanh.pop %v4050
        %v4057 = vtanh.pop %v4051
        %v4058 = vtanh.pop %v4052
        %v4059 = vtanh.pop %v4053
        %v4060 = vtanh.pop %v4054
        %v4061 = vtanh.pop %v4055
        %v4062 = vadd.f32 %v4056, 1.0
        %v4063 = vadd.f32 %v4057, 1.0
        %v4064 = vadd.f32 %v4058, 1.0
        %v4065 = vadd.f32 %v4059, 1.0
        %v4066 = vadd.f32 %v4060, 1.0
        %v4067 = vadd.f32 %v4061, 1.0
        %v4068 = vmul.f32 %v4062, 0.5
        %v4069 = vmul.f32 %v4063, 0.5
        %v4070 = vmul.f32 %v4064, 0.5
        %v4071 = vmul.f32 %v4065, 0.5
        %v4072 = vmul.f32 %v4066, 0.5
        %v4073 = vmul.f32 %v4067, 0.5
        %v4074 = vmul.f32 %v4004, %v4068
        %v4075 = vmul.f32 %v4007, %v4069
        %v4076 = vmul.f32 %v4012, %v4070
        %v4077 = vmul.f32 %v4015, %v4071
        %v4078 = vmul.f32 %v4020, %v4072
        %v4079 = vmul.f32 %v4023, %v4073
        %v4080 = vpack.c.bf16 %v4075, %v4074
        %v4081 = vpack.c.bf16 %v4077, %v4076
        %v4082 = vpack.c.bf16 %v4079, %v4078
        %v4083 = vld [vmem:[%s972] sm:$0xf]
        %v4084 = vld [vmem:[%s972 + $0x4] sm:$0xf]
        %v4085 = vld [vmem:[%s972 + $0x8] sm:$0xf]
        %v4086 = vld [vmem:[%s972 + $0xc] sm:$0xf]
        %v4087 = vld [vmem:[%s972 + $0x10] sm:$0xf]
        %v4088 = vld [vmem:[%s972 + $0x14] sm:$0xf]
        %v4089 = vld [vmem:[%s972 + $0x18] sm:$0xf]
        %v4090 = vld [vmem:[%s972 + $0x1c] sm:$0xf]
        %v4091 = vld [vmem:[%s975] sm:$0x1]
        %v4093 = vlaneseq
        %v4094 = vshrl.u32 %v4093, 7
        %v4095 = vsub.s32 0, %v4094
        %v4096 = vrot.slane %v4091, %v4095
        %v4106 = vunpack.c.l.b16 %v4083
        %v4107 = vunpack.c.l.b16 %v4084
        %v4108 = vunpack.c.l.b16 %v4085
        %v4109 = vunpack.c.l.b16 %v4086
        %v4110 = vunpack.c.l.b16 %v4087
        %v4111 = vunpack.c.l.b16 %v4088
        %v4112 = vunpack.c.l.b16 %v4089
        %v4113 = vunpack.c.l.b16 %v4090
        %v4114 = vpack.c.b16 %v4107, %v4106
        %v4115 = vpack.c.b16 %v4109, %v4108
        %v4116 = vpack.c.b16 %v4111, %v4110
        %v4117 = vpack.c.b16 %v4113, %v4112
        %vm4122 = vcmask 523264
        %v4124 = vsel %vm4122, %v4080, 0
        %v4127 = vsel %vm4122, %v4081, 0
        %v4130 = vsel %vm4122, %v4082, 0
        %4132 = vmatprep.subr.bf16.mxu0 0
        %4133 = vmatpush1.bf16.msra.mxu0 %v4114
        %4134 = vmatprep.subr.bf16.mxu0 0
        %4135 = vmatpush1.bf16.msra.mxu0 %v4115
        %4136 = vmatprep.subr.bf16.mxu0 0
        %4137 = vmatpush1.bf16.msra.mxu0 %v4116
        %4138 = vmatprep.subr.bf16.mxu0 0
        %4139 = vmatpush1.bf16.msra.mxu0 %v4117
        %4140 = vmatprep.subr.bf16.mxu0 0
        %4141 = vmatpush1.bf16.msra.mxu0 0
        %4142 = vmatprep.subr.bf16.mxu0 0
        %4143 = vmatpush1.bf16.msra.mxu0 0
        %4144 = vmatprep.subr.bf16.mxu0 0
        %4145 = vmatpush1.bf16.msra.mxu0 0
        %4146 = vmatprep.subr.bf16.mxu0 0
        %4147 = vmatpush1.bf16.msra.mxu0 0
        %4148 = vmatprep.subr.bf16.mxu0 0
        %4149 = vmatpush1.bf16.msra.mxu0 0
        %4150 = vmatprep.subr.bf16.mxu0 0
        %4151 = vmatpush1.bf16.msra.mxu0 0
        %4152 = vmatprep.subr.bf16.mxu0 0
        %4153 = vmatpush1.bf16.msra.mxu0 0
        %4154 = vmatprep.subr.bf16.mxu0 0
        %4155 = vmatpush1.bf16.msra.mxu0 0
        %4156 = vmatprep.subr.bf16.mxu0 0
        %4157 = vmatpush1.bf16.msra.mxu0 0
        %4158 = vmatprep.subr.bf16.mxu0 0
        %4159 = vmatpush1.bf16.msra.mxu0 0
        %4160 = vmatprep.subr.bf16.mxu0 0
        %4161 = vmatpush1.bf16.msra.mxu0 0
        %4162 = vmatprep.subr.bf16.mxu0 0
        %4163 = vmatpush1.bf16.msra.mxu0 0
        %4164 = vmatprep.mubr.bf16.mxu0 0
        %4165 = vmatmul.mubr.bf16.gmra.mrb[0].mxu0 %v4124
        %v4166 = vpop.f32.mrb[0].mxu0
        %v4167 = vadd.f32 %v4096, %v4166
        %v4168 = vpop.f32.mrb[0].mxu0
        %v4169 = vpop.f32.mrb[0].mxu0
        %v4170 = vadd.f32 %v4096, %v4169
        %v4171 = vpop.f32.mrb[0].mxu0
        %4172 = vmatprep.mubr.bf16.mxu0 0
        %4173 = vmatmul.mubr.bf16.gmra.mrb[0].mxu0 %v4127
        %v4174 = vpop.f32.mrb[0].mxu0
        %v4175 = vadd.f32 %v4096, %v4174
        %v4176 = vpop.f32.mrb[0].mxu0
        %v4177 = vpop.f32.mrb[0].mxu0
        %v4178 = vadd.f32 %v4096, %v4177
        %v4179 = vpop.f32.mrb[0].mxu0
        %4180 = vmatprep.mubr.bf16.mxu0 0
        %4181 = vmatmul.mubr.bf16.gmra.mrb[0].mxu0 %v4130
        %v4182 = vpop.f32.mrb[0].mxu0
        %v4183 = vadd.f32 %v4096, %v4182
        %v4184 = vpop.f32.mrb[0].mxu0
        %v4185 = vpop.f32.mrb[0].mxu0
        %v4186 = vadd.f32 %v4096, %v4185
        %v4187 = vpop.f32.mrb[0].mxu0
        %4188 = vdwg.mxu0
        %v4189 = vadd.f32 %v3824, %v4167
        %v4190 = vadd.f32 %v3825, %v4170
        %v4191 = vadd.f32 %v3826, %v4175
        %v4192 = vadd.f32 %v3827, %v4178
        %v4193 = vadd.f32 %v3828, %v4183
        %v4194 = vadd.f32 %v3829, %v4186
        %4195 = vst.msk [vmem:[#allocation2] sm:$0xff] %vm1514, %v4189
        %4196 = vst.msk [vmem:[#allocation2 + $0x8] sm:$0xff] %vm1514, %v4190
        %4197 = vst.msk [vmem:[#allocation2 + $0x10] sm:$0xff] %vm1514, %v4191
        %4198 = vst.msk [vmem:[#allocation2 + $0x18] sm:$0xff] %vm1514, %v4192
        %4199 = vst.msk [vmem:[#allocation2 + $0x20] sm:$0xff] %vm1514, %v4193
        %4200 = vst.msk [vmem:[#allocation2 + $0x28] sm:$0xff] %vm1514, %v4194
        %p4201 = scmp.eq.s32.totalorder %s41, 1
        // Predicated region
        $region129: #{_lambda_.1} parent=123 // pred_check
          %p4202 = pneg %p4201
        $region130: #{_lambda_.1} parent=123 // pred_check_branch
          %4204 = sbr.rel (%p4202) target = $region132
        $region131: #{_lambda_.1} parent=123 // pred_region
          %v4207 = vrot.slane %v4194, 7
          %vm4208 = vcmask 1041409
          %v4209 = vsel %vm4208, %v4207, %v4191
          %vm4211 = vcmask 254976
          %4212 = vst.msk [vmem:[#allocation5] sm:$0x3] %vm4211, %v4209
          %v4213 = vld [vmem:[%s20] sm:$0x1]
          %v4214 = vld [vmem:[%s21] sm:$0x1]
          %v4215 = vsel %vm4211, %v4209, 0.0
          %4216 = vadd.xlane.f32.xlu0 %v4215
          %v4217 = vpop.xlane.xlu0 %4216
          %v4218 = vmul.f32 %v4217, %v1533
          %v4220 = vrot.slane %v4218, 1
          %v4223 = vsub.f32 %v4191, %v4218
          %v4224 = vsub.f32 %v4194, %v4220
          %v4225 = vmul.f32 %v4223, %v4223
          %v4226 = vmul.f32 %v4224, %v4224
          %v4229 = vrot.slane %v4226, 7
          %v4230 = vsel %vm4208, %v4229, %v4225
          %v4232 = vsel %vm4211, %v4230, 0.0
          %4233 = vadd.xlane.f32.xlu0 %v4232
          %v4234 = vpop.xlane.xlu0 %4233
          %v4235 = vmul.f32 %v4234, %v1533
          %v4236 = vadd.f32 %v4235, 1e-05
          %v4237 = vrsqrt.pop %v4236
          %v4239 = vrot.slane %v4237, 1
          %v4242 = vmul.f32 %v4223, %v4237
          %v4243 = vmul.f32 %v4224, %v4239
          %v4245 = vlaneseq
          %v4246 = vshrl.u32 %v4245, 7
          %v4247 = vsub.s32 0, %v4246
          %v4248 = vrot.slane %v4213, %v4247
          %v4250 = vmul.f32 %v4242, %v4248
          %v4251 = vmul.f32 %v4243, %v4248
          %v4253 = vlaneseq
          %v4254 = vshrl.u32 %v4253, 7
          %v4255 = vsub.s32 0, %v4254
          %v4256 = vrot.slane %v4214, %v4255
          %v4258 = vadd.f32 %v4250, %v4256
          %v4259 = vadd.f32 %v4251, %v4256
          %v4260 = vld [vmem:[%s22] sm:$0xff]
          %v4261 = vld [vmem:[%s22 + $0x8] sm:$0xff]
          %v4262 = vld [vmem:[%s22 + $0x10] sm:$0xff]
          %v4263 = vld [vmem:[%s22 + $0x18] sm:$0xff]
          %v4264 = vld [vmem:[%s23] sm:$0x1]
          %v4266 = vlaneseq
          %v4267 = vshrl.u32 %v4266, 7
          %v4268 = vsub.s32 0, %v4267
          %v4269 = vrot.slane %v4264, %v4268
          %v4273 = vrot.slane %v4259, 7
          %v4274 = vsel %vm4208, %v4273, %v4258
          %v4275 = vsel %vm1514, %v4274, 0
          %4277 = vmatprep.subr.mxu0 0.0
          %4278 = vmatpush1.msra.mxu0 %v4260
          %4279 = vmatprep.subr.mxu0 0.0
          %4280 = vmatpush1.msra.mxu0 %v4261
          %4281 = vmatprep.subr.mxu0 0.0
          %4282 = vmatpush1.msra.mxu0 %v4262
          %4283 = vmatprep.subr.mxu0 0.0
          %4284 = vmatpush1.msra.mxu0 %v4263
          %4285 = vmatprep.subr.mxu0 0.0
          %4286 = vmatpush1.msra.mxu0 0.0
          %4287 = vmatprep.subr.mxu0 0.0
          %4288 = vmatpush1.msra.mxu0 0.0
          %4289 = vmatprep.subr.mxu0 0.0
          %4290 = vmatpush1.msra.mxu0 0.0
          %4291 = vmatprep.subr.mxu0 0.0
          %4292 = vmatpush1.msra.mxu0 0.0
          %4293 = vmatprep.subr.mxu0 0.0
          %4294 = vmatpush1.msra.mxu0 0.0
          %4295 = vmatprep.subr.mxu0 0.0
          %4296 = vmatpush1.msra.mxu0 0.0
          %4297 = vmatprep.subr.mxu0 0.0
          %4298 = vmatpush1.msra.mxu0 0.0
          %4299 = vmatprep.subr.mxu0 0.0
          %4300 = vmatpush1.msra.mxu0 0.0
          %4301 = vmatprep.subr.mxu0 0.0
          %4302 = vmatpush1.msra.mxu0 0.0
          %4303 = vmatprep.subr.mxu0 0.0
          %4304 = vmatpush1.msra.mxu0 0.0
          %4305 = vmatprep.subr.mxu0 0.0
          %4306 = vmatpush1.msra.mxu0 0.0
          %4307 = vmatprep.subr.mxu0 0.0
          %4308 = vmatpush1.msra.mxu0 0.0
          %4309 = vmatprep.subr.mxu0 0.0
          %4310 = vmatpush1.msra.mxu0 0.0
          %4311 = vmatprep.subr.mxu0 0.0
          %4312 = vmatpush1.msra.mxu0 0.0
          %4313 = vmatprep.subr.mxu0 0.0
          %4314 = vmatpush1.msra.mxu0 0.0
          %4315 = vmatprep.subr.mxu0 0.0
          %4316 = vmatpush1.msra.mxu0 0.0
          %4317 = vmatprep.subr.mxu0 0.0
          %4318 = vmatpush1.msra.mxu0 0.0
          %4319 = vmatprep.subr.mxu0 0.0
          %4320 = vmatpush1.msra.mxu0 0.0
          %4321 = vmatprep.subr.mxu0 0.0
          %4322 = vmatpush1.msra.mxu0 0.0
          %4323 = vmatprep.subr.mxu0 0.0
          %4324 = vmatpush1.msra.mxu0 0.0
          %4325 = vmatprep.subr.mxu0 0.0
          %4326 = vmatpush1.msra.mxu0 0.0
          %4327 = vmatprep.subr.mxu0 0.0
          %4328 = vmatpush1.msra.mxu0 0.0
          %4329 = vmatprep.subr.mxu0 0.0
          %4330 = vmatpush1.msra.mxu0 0.0
          %4331 = vmatprep.subr.mxu0 0.0
          %4332 = vmatpush1.msra.mxu0 0.0
          %4333 = vmatprep.subr.mxu0 0.0
          %4334 = vmatpush1.msra.mxu0 0.0
          %4335 = vmatprep.subr.mxu0 0.0
          %4336 = vmatpush1.msra.mxu0 0.0
          %4337 = vmatprep.subr.mxu0 0.0
          %4338 = vmatpush1.msra.mxu0 0.0
          %4339 = vmatprep.subr.mxu0 0.0
          %4340 = vmatpush1.msra.mxu0 0.0
          %4341 = vmatprep.mubr.f32.mxu0 0.0
          %4342 = vmatmul.mubr.f32.gmra.mrb[0].mxu0 %v4275
          %v4343 = vpop.f32.mrb[0].mxu0
          %v4344 = vadd.f32 %v4269, %v4343
          %v4345 = vpop.f32.mrb[0].mxu0
          %4346 = vdwg.mxu0
          %v4347 = vmul.f32 %v4344, %v4344
          %v4348 = vmul.f32 %v4344, %v4347
          %v4349 = vmul.f32 %v4348, 0.044715
          %v4350 = vadd.f32 %v4344, %v4349
          %v4351 = vmul.f32 %v4350, 0.7978846
          %v4352 = vtanh.pop %v4351
          %v4353 = vadd.f32 %v4352, 1.0
          %v4354 = vmul.f32 %v4353, 0.5
          %v4355 = vmul.f32 %v4344, %v4354
          %v4356 = vld [vmem:[%s24] sm:$0xff]
          %v4357 = vld [vmem:[%s24 + $0x8] sm:$0xff]
          %v4358 = vld [vmem:[%s25] sm:$0x1]
          %v4360 = vlaneseq
          %v4361 = vshrl.u32 %v4360, 7
          %v4362 = vsub.s32 0, %v4361
          %v4363 = vrot.slane %v4358, %v4362
          %v4366 = vsel %vm3719, %v4355, 0
          %4368 = vmatprep.subr.mxu0 0.0
          %4369 = vmatpush1.msra.mxu0 %v4356
          %4370 = vmatprep.subr.mxu0 0.0
          %4371 = vmatpush1.msra.mxu0 %v4357
          %4372 = vmatprep.subr.mxu0 0.0
          %4373 = vmatpush1.msra.mxu0 0.0
          %4374 = vmatprep.subr.mxu0 0.0
          %4375 = vmatpush1.msra.mxu0 0.0
          %4376 = vmatprep.subr.mxu0 0.0
          %4377 = vmatpush1.msra.mxu0 0.0
          %4378 = vmatprep.subr.mxu0 0.0
          %4379 = vmatpush1.msra.mxu0 0.0
          %4380 = vmatprep.subr.mxu0 0.0
          %4381 = vmatpush1.msra.mxu0 0.0
          %4382 = vmatprep.subr.mxu0 0.0
          %4383 = vmatpush1.msra.mxu0 0.0
          %4384 = vmatprep.subr.mxu0 0.0
          %4385 = vmatpush1.msra.mxu0 0.0
          %4386 = vmatprep.subr.mxu0 0.0
          %4387 = vmatpush1.msra.mxu0 0.0
          %4388 = vmatprep.subr.mxu0 0.0
          %4389 = vmatpush1.msra.mxu0 0.0
          %4390 = vmatprep.subr.mxu0 0.0
          %4391 = vmatpush1.msra.mxu0 0.0
          %4392 = vmatprep.subr.mxu0 0.0
          %4393 = vmatpush1.msra.mxu0 0.0
          %4394 = vmatprep.subr.mxu0 0.0
          %4395 = vmatpush1.msra.mxu0 0.0
          %4396 = vmatprep.subr.mxu0 0.0
          %4397 = vmatpush1.msra.mxu0 0.0
          %4398 = vmatprep.subr.mxu0 0.0
          %4399 = vmatpush1.msra.mxu0 0.0
          %4400 = vmatprep.subr.mxu0 0.0
          %4401 = vmatpush1.msra.mxu0 0.0
          %4402 = vmatprep.subr.mxu0 0.0
          %4403 = vmatpush1.msra.mxu0 0.0
          %4404 = vmatprep.subr.mxu0 0.0
          %4405 = vmatpush1.msra.mxu0 0.0
          %4406 = vmatprep.subr.mxu0 0.0
          %4407 = vmatpush1.msra.mxu0 0.0
          %4408 = vmatprep.subr.mxu0 0.0
          %4409 = vmatpush1.msra.mxu0 0.0
          %4410 = vmatprep.subr.mxu0 0.0
          %4411 = vmatpush1.msra.mxu0 0.0
          %4412 = vmatprep.subr.mxu0 0.0
          %4413 = vmatpush1.msra.mxu0 0.0
          %4414 = vmatprep.subr.mxu0 0.0
          %4415 = vmatpush1.msra.mxu0 0.0
          %4416 = vmatprep.subr.mxu0 0.0
          %4417 = vmatpush1.msra.mxu0 0.0
          %4418 = vmatprep.subr.mxu0 0.0
          %4419 = vmatpush1.msra.mxu0 0.0
          %4420 = vmatprep.subr.mxu0 0.0
          %4421 = vmatpush1.msra.mxu0 0.0
          %4422 = vmatprep.subr.mxu0 0.0
          %4423 = vmatpush1.msra.mxu0 0.0
          %4424 = vmatprep.subr.mxu0 0.0
          %4425 = vmatpush1.msra.mxu0 0.0
          %4426 = vmatprep.subr.mxu0 0.0
          %4427 = vmatpush1.msra.mxu0 0.0
          %4428 = vmatprep.subr.mxu0 0.0
          %4429 = vmatpush1.msra.mxu0 0.0
          %4430 = vmatprep.subr.mxu0 0.0
          %4431 = vmatpush1.msra.mxu0 0.0
          %4432 = vmatprep.mubr.f32.mxu0 0.0
          %4433 = vmatmul.mubr.f32.gmra.mrb[0].mxu0 %v4366
          %v4434 = vpop.f32.mrb[0].mxu0
          %v4435 = vadd.f32 %v4363, %v4434
          %v4436 = vpop.f32.mrb[0].mxu0
          %4437 = vdwg.mxu0
          %vm4438 = vcmask 74752
          %4439 = vst.msk [vmem:[#allocation3] sm:$0x3] %vm4438, %v4435
        $region132: #{_lambda_.1} parent=123 // pred_fallthru
          _
        // Predicated region
        $region133: #{_lambda_.1} parent=123 // pred_check
          %p4440 = pneg %p660
        $region134: #{_lambda_.1} parent=123 // pred_check_branch
          %4442 = sbr.rel (%p4440) target = $region136
        $region135: #{_lambda_.1} parent=123 // pred_region
          %s4444 = ssub.s32 32, 32
          %4445 = vsyncadd [#allocation4], %s4444
          %s4447 = sshll.u32 [#allocation3], 4
          %s4448 = int_to_ptr.vmem [resolvable:$true] %s4447
          %4450 = dma.vmem_to_hbm [thread:$0]  %s4448, 32, %s26, [#allocation4]
        $region136: #{_lambda_.1} parent=123 // pred_fallthru
          _
        // Predicated region
        $region137: #{_lambda_.1} parent=123 // pred_check
          %p4451 = pneg %p681
        $region138: #{_lambda_.1} parent=123 // pred_check_branch
          %4453 = sbr.rel (%p4451) target = $region140
        $region139: #{_lambda_.1} parent=123 // pred_region
          %s4455 = ssub.s32 32, 32
          %4456 = vsyncadd [#allocation6], %s4455
          %s4458 = sshll.u32 [#allocation5], 4
          %s4459 = int_to_ptr.vmem [resolvable:$true] %s4458
          %4461 = dma.vmem_to_hbm [thread:$0]  %s4459, 32, %s27, [#allocation6]
        $region140: #{_lambda_.1} parent=123 // pred_fallthru
          _
        // Predicated region
        $region141: #{_lambda_.1} parent=123 // pred_check
          %p4462 = pneg %p660
        $region142: #{_lambda_.1} parent=123 // pred_check_branch
          %4464 = sbr.rel (%p4462) target = $region144
        $region143: #{_lambda_.1} parent=123 // pred_region
          %4465 = dma.done [#allocation4], 32
        $region144: #{_lambda_.1} parent=123 // pred_fallthru
          _
        // Predicated region
        $region145: #{_lambda_.1} parent=123 // pred_check
          %p4466 = pneg %p681
        $region146: #{_lambda_.1} parent=123 // pred_check_branch
          %4468 = sbr.rel (%p4466) target = $region148
        $region147: #{_lambda_.1} parent=123 // pred_region
          %4469 = dma.done [#allocation6], 32
        $region148: #{_lambda_.1} parent=123 // pred_fallthru
          _
      $region124: #{_lambda_.1} parent=5 // pred_fallthru
        _
      %p4470 = scmp.le.s32.totalorder 2, %s36
      // Predicated region
      $region149: #{_lambda_.1} parent=5 // pred_check
        %p4471 = pneg %p4470
      $region150: #{_lambda_.1} parent=5 // pred_check_branch
        %4473 = sbr.rel (%p4471) target = $region152
      $region151: #{_lambda_.1} parent=5 // pred_region
        %s4474 = ssub.s32 %s36, 2
      $region152: #{_lambda_.1} parent=5 // pred_fallthru
        _
    $region6: #{_lambda_.1} parent=1 // loop_footer
      %s40 = sadd.s32 1, %s36
    $region7: #{_lambda_.1} parent=1 // loop_footer_branch
      %35 = sbr.rel target = $region3
    $region8: #{_lambda_.1} parent=1 // loop_exit
      _
    %4475 = vsyncpa [#allocation4], 1
    %s4476 = scalar_lea.sflag [#allocation4], 1
    %4477 = vsyncpa %s4476, 1
    %4478 = vsyncpa [#allocation6], 1

</llo_original>
